<compile_context>
chip_gen: v7x
topology: tpu7x:2x2x1
jax: 0.10.0
libtpu: 0.0.40
codegen_flags: <defaults>
</compile_context>

<pallas_src>
import numpy as np
import jax
import jax.numpy as jnp
from jax.experimental import pallas as pl
from jax.experimental.pallas import tpu as pltpu

LANE = 128     # lane width: H and E are padded to multiples of this
SUB = 16       # sublane padding for the (bf16) batch dimension
K_STEPS = 8    # timesteps processed per grid step


def _ceil_to(x, m):
    return ((x + m - 1) // m) * m


def make_bilstm_layer_call(T, B, Din, H, K):
    """One bidirectional LSTM layer in a single pallas_call.

    Grid = (2 directions, T // K time-blocks).  The whole recurrence for a
    direction runs across its time-blocks with hidden/cell carried in VMEM
    scratch; K steps are unrolled inside each grid step.  Packed-sequence
    semantics are reproduced by select-masking updates with a streamed
    (T, B, 1) validity mask, so the final state equals the state at the last
    valid timestep and padded outputs are exactly 0.
    All shapes here are already lane/sublane padded (H % 128 == 0, B % 16 == 0).
    """
    nT = T // K

    def kernel(x_ref, m_ref, wih_ref, whh_ref, b_ref,
               out_ref, hN_ref, cN_ref, h_sc, c_sc):
        d = pl.program_id(0)      # 0 = forward, 1 = backward
        tb = pl.program_id(1)     # time-block index in processing order

        @pl.when(tb == 0)
        def _():
            h_sc[...] = jnp.zeros_like(h_sc)
            c_sc[...] = jnp.zeros_like(c_sc)

        wih = wih_ref[0]          # (Din, 4H) bf16
        whh = whh_ref[0]          # (H,   4H) bf16
        bias = b_ref[0]           # (1,   4H) f32

        h = h_sc[...]             # (B, H) f32
        c = c_sc[...]
        for kk in range(K):       # static unroll of K timesteps
            # index inside the block in processing order (reversed for backward)
            local = d * (K - 1) + (1 - 2 * d) * kk
            x_t = x_ref[local]                            # (B, Din) bf16
            gates = (jnp.dot(x_t, wih, preferred_element_type=jnp.float32)
                     + jnp.dot(h.astype(wih.dtype), whh,
                               preferred_element_type=jnp.float32)
                     + bias)                              # (B, 4H) f32
            i_g = jax.nn.sigmoid(gates[:, 0 * H:1 * H])   # 128-lane aligned slices
            f_g = jax.nn.sigmoid(gates[:, 1 * H:2 * H])
            g_g = jnp.tanh(gates[:, 2 * H:3 * H])
            o_g = jax.nn.sigmoid(gates[:, 3 * H:4 * H])
            c_new = f_g * c + i_g * g_g
            h_new = o_g * jnp.tanh(c_new)
            # hoisted broadcast + select (instead of lerp masking)
            keep = jnp.broadcast_to(m_ref[local] > 0.0, h_new.shape)
            h = jnp.where(keep, h_new, h)
            c = jnp.where(keep, c_new, c)
            out_ref[local] = jnp.where(keep, h_new, 0.0).astype(out_ref.dtype)
        h_sc[...] = h
        c_sc[...] = c

        @pl.when(tb == nT - 1)    # write final states only once
        def _():
            hN_ref[0] = h
            cN_ref[0] = c

    # HBM time-block index for the block processed at grid point (d, tb):
    #   forward:  tb      backward:  nT - 1 - tb
    def tblk(d, tb):
        return d * (nT - 1) + (1 - 2 * d) * tb

    return pl.pallas_call(
        kernel,
        out_shape=(
            jax.ShapeDtypeStruct((T, B, 2 * H), jnp.bfloat16),  # [fwd H | bwd H]
            jax.ShapeDtypeStruct((2, B, H), jnp.float32),       # final hidden per dir
            jax.ShapeDtypeStruct((2, B, H), jnp.float32),       # final cell per dir
        ),
        grid_spec=pltpu.PrefetchScalarGridSpec(
            num_scalar_prefetch=0,
            grid=(2, nT),
            in_specs=[
                pl.BlockSpec((K, B, Din), lambda d, tb: (tblk(d, tb), 0, 0)),  # x block
                pl.BlockSpec((K, B, 1), lambda d, tb: (tblk(d, tb), 0, 0)),    # valid mask
                pl.BlockSpec((1, Din, 4 * H), lambda d, tb: (d, 0, 0)),        # w_ih (per dir)
                pl.BlockSpec((1, H, 4 * H), lambda d, tb: (d, 0, 0)),          # w_hh (per dir)
                pl.BlockSpec((1, 1, 4 * H), lambda d, tb: (d, 0, 0)),          # bias (per dir)
            ],
            out_specs=(
                pl.BlockSpec((K, B, H), lambda d, tb: (tblk(d, tb), 0, d)),    # write own half
                pl.BlockSpec((1, B, H), lambda d, tb: (d, 0, 0)),
                pl.BlockSpec((1, B, H), lambda d, tb: (d, 0, 0)),
            ),
            scratch_shapes=[pltpu.VMEM((B, H), jnp.float32),
                            pltpu.VMEM((B, H), jnp.float32)],
        ),
        compiler_params=pltpu.CompilerParams(
            dimension_semantics=("parallel", "arbitrary"),   # directions shard across TCs on v7x
            vmem_limit_bytes=48 * 1024 * 1024),
    )


def fc_tanh(x2d, w, b):
    """transformStates hot path collapsed to ONE matmul:
    tanh((2*num_layers*B, 2H) @ (2H, H) + b)."""

    def kernel(x_ref, w_ref, b_ref, o_ref):
        o_ref[...] = jnp.tanh(
            jnp.dot(x_ref[...], w_ref[...], preferred_element_type=jnp.float32)
            + b_ref[...])

    return pl.pallas_call(
        kernel,
        out_shape=jax.ShapeDtypeStruct((x2d.shape[0], w.shape[1]), jnp.float32),
    )(x2d, w, b)


# ----------------------------------------------------------------------------- padding helpers
def _pad_gate_cols(w, H, Hp):
    """Pad the last (4H) axis gate-wise to 4*Hp so each gate starts on a 128-lane boundary."""
    lead = w.shape[:-1]
    w4 = w.reshape(lead + (4, H))
    w4 = jnp.pad(w4, [(0, 0)] * len(lead) + [(0, 0), (0, Hp - H)])
    return w4.reshape(lead + (4 * Hp,))


def _pad_lstm_weights(w_ih, w_hh, b, layer, H, Hp, Ep):
    """Zero-pad one direction's weights to lane-aligned sizes.
    Layer >= 1 inputs are laid out as [fwd Hp | bwd Hp], so scatter the two
    real row-halves of w_ih to Hp-aligned slots."""
    Din = w_ih.shape[0]
    if layer == 0:
        w_ih_p = jnp.pad(w_ih, ((0, Ep - Din), (0, 0)))                    # (Ep, 4H)
    else:
        w_ih_p = jnp.pad(w_ih.reshape(2, H, 4 * H),
                         ((0, 0), (0, Hp - H), (0, 0))).reshape(2 * Hp, 4 * H)
    w_ih_p = _pad_gate_cols(w_ih_p, H, Hp)                                 # (Din_p, 4Hp)
    w_hh_p = _pad_gate_cols(jnp.pad(w_hh, ((0, Hp - H), (0, 0))), H, Hp)   # (Hp, 4Hp)
    b_p = _pad_gate_cols(b, H, Hp)                                         # (1, 4Hp)
    return w_ih_p, w_hh_p, b_p


# ----------------------------------------------------------------------------- params / forward
def init_encoder_params(key, vocab_size, E, H, num_layers, padTokenIdx):
    keys = jax.random.split(key, 3 + num_layers * 8)
    s = 1.0 / float(np.sqrt(H))
    params = {}
    emb = 0.1 * jax.random.normal(keys[0], (vocab_size, E), jnp.float32)
    params["embedding"] = emb.at[padTokenIdx].set(0.0)   # padding_idx row stays zero
    lstm = []
    ki = 1
    for layer in range(num_layers):
        Din = E if layer == 0 else 2 * H
        dirs = []
        for _d in range(2):                              # forward, backward
            w_ih = jax.random.uniform(keys[ki], (Din, 4 * H), jnp.float32, -s, s); ki += 1
            w_hh = jax.random.uniform(keys[ki], (H, 4 * H), jnp.float32, -s, s); ki += 1
            b_ih = jax.random.uniform(keys[ki], (4 * H,), jnp.float32, -s, s); ki += 1
            b_hh = jax.random.uniform(keys[ki], (4 * H,), jnp.float32, -s, s); ki += 1
            dirs.append((w_ih, w_hh, (b_ih + b_hh).reshape(1, 4 * H)))
        lstm.append(dirs)
    params["lstm"] = lstm
    params["fc_w"] = jax.random.uniform(keys[ki], (2 * H, H), jnp.float32, -s, s)
    params["fc_b"] = jax.random.uniform(keys[ki + 1], (1, H), jnp.float32, -s, s)
    return params


def encoder_forward(params, X, source_lengths, num_layers, H, pad_idx=0):
    B, T = X.shape
    E = params["embedding"].shape[1]
    Hp = _ceil_to(H, LANE)
    Ep = _ceil_to(E, LANE)
    Bp = _ceil_to(max(B, SUB), SUB)
    Tp = _ceil_to(T, K_STEPS)

    # ---- embedding gather (XLA glue), zero-padded to lane/sublane aligned sizes
    emb_tbl = jnp.pad(params["embedding"], ((0, 0), (0, Ep - E)))
    X_p = jnp.pad(X, ((0, Bp - B), (0, Tp - T)), constant_values=pad_idx)
    emb = jnp.take(emb_tbl, X_p, axis=0)                             # (Bp, Tp, Ep)
    # TODO(synk): dropout is identity here (eval-mode); training-mode RNG dropout not implemented.
    layer_in = jnp.transpose(emb, (1, 0, 2)).astype(jnp.bfloat16)    # (Tp, Bp, Ep) time-major

    # ---- packed-sequence validity mask streamed alongside x (replaces per-step length compare)
    lens = jnp.zeros((Bp,), jnp.int32).at[:B].set(jnp.asarray(source_lengths, jnp.int32))
    tmask = (jnp.arange(Tp, dtype=jnp.int32)[:, None] < lens[None, :]).astype(jnp.float32)
    tmask = tmask[..., None]                                         # (Tp, Bp, 1)

    hiddens, cells = [], []
    for layer in range(num_layers):
        Din = Ep if layer == 0 else 2 * Hp
        w_f = _pad_lstm_weights(*params["lstm"][layer][0], layer, H, Hp, Ep)
        w_b = _pad_lstm_weights(*params["lstm"][layer][1], layer, H, Hp, Ep)
        wih_all = jnp.stack([w_f[0], w_b[0]]).astype(jnp.bfloat16)   # (2, Din, 4Hp)
        whh_all = jnp.stack([w_f[1], w_b[1]]).astype(jnp.bfloat16)   # (2, Hp, 4Hp)
        b_all = jnp.stack([w_f[2], w_b[2]])                          # (2, 1, 4Hp) f32

        call = make_bilstm_layer_call(Tp, Bp, Din, Hp, K_STEPS)
        layer_in, hN, cN = call(layer_in, tmask, wih_all, whh_all, b_all)
        hiddens.append(hN)                                           # (2, Bp, Hp)
        cells.append(cN)

    T_out = int(np.max(np.asarray(source_lengths)))                  # pad_packed_sequence length
    out = layer_in                                                   # (Tp, Bp, 2Hp) bf16
    output = jnp.concatenate(
        [out[:T_out, :B, :H], out[:T_out, :B, Hp:Hp + H]], axis=-1
    ).astype(jnp.float32)                                            # (T_out, B, 2H)

    # ---- transformStates: tanh(cat(h_fwd, h_bwd) @ W_fc + b_fc) as ONE fused matmul
    fc_w = jnp.pad(params["fc_w"].reshape(2, H, H),
                   ((0, 0), (0, Hp - H), (0, Hp - H))).reshape(2 * Hp, Hp).astype(jnp.bfloat16)
    fc_b = jnp.pad(params["fc_b"], ((0, 0), (0, Hp - H)))            # (1, Hp) f32

    cat = [jnp.concatenate([s[0], s[1]], axis=-1) for s in hiddens + cells]  # (Bp, 2Hp) each
    stacked = jnp.stack(cat, axis=0)                                 # (2L, Bp, 2Hp)
    x2d = stacked.reshape(2 * num_layers * Bp, 2 * Hp).astype(jnp.bfloat16)
    y2d = fc_tanh(x2d, fc_w, fc_b)                                   # (2L*Bp, Hp) f32
    y = y2d.reshape(2 * num_layers, Bp, Hp)
    hidden_out = y[:num_layers, :B, :H]
    cell_out = y[num_layers:, :B, :H]
    return output, (hidden_out, cell_out)


if __name__ == "__main__":
    vocab_size, E, H = 16, 32, 32
    num_layers, padTokenIdx = 2, 0
    B, T = 2, 8

    key = jax.random.PRNGKey(0)
    pkey, xkey = jax.random.split(key)
    params = init_encoder_params(pkey, vocab_size, E, H, num_layers, padTokenIdx)

    source_lengths = [8, 5]
    X_np = np.array(jax.random.randint(xkey, (B, T), 1, vocab_size))
    for b, L in enumerate(source_lengths):
        X_np[b, L:] = padTokenIdx
    X = jnp.asarray(X_np, jnp.int32)

    output, (hidden, cell) = encoder_forward(params, X, source_lengths, num_layers, H,
                                             pad_idx=padTokenIdx)
    jax.block_until_ready((output, hidden, cell))

    assert output.shape == (max(source_lengths), B, 2 * H)
    assert hidden.shape == (num_layers, B, H)
    assert cell.shape == (num_layers, B, H)
    assert bool(jnp.all(jnp.isfinite(output)))
    assert bool(jnp.all(jnp.isfinite(hidden))) and bool(jnp.all(jnp.isfinite(cell)))
    # padded timesteps of the shorter sequence must be exactly zero (packed-seq semantics)
    assert bool(jnp.all(output[source_lengths[1]:, 1, :] == 0.0))
    print("KERNEL_OK")
</pallas_src>

<mosaic_0001>
module attributes {stable_mosaic.version = 11 : i64} {
  func.func @kernel(%arg0: i32, %arg1: i32, %arg2: memref<8x16x128xbf16, #tpu.memory_space<vmem>>, %arg3: memref<8x16x1xf32, #tpu.memory_space<vmem>>, %arg4: memref<1x128x512xbf16, #tpu.memory_space<vmem>>, %arg5: memref<1x128x512xbf16, #tpu.memory_space<vmem>>, %arg6: memref<1x1x512xf32, #tpu.memory_space<vmem>>, %arg7: memref<8x16x128xbf16, #tpu.memory_space<vmem>>, %arg8: memref<1x16x128xf32, #tpu.memory_space<vmem>>, %arg9: memref<1x16x128xf32, #tpu.memory_space<vmem>>, %arg10: memref<16x128xf32, #tpu.memory_space<vmem>>, %arg11: memref<16x128xf32, #tpu.memory_space<vmem>>) attributes {dimension_semantics = [#tpu.dimension_semantics<parallel>, #tpu.dimension_semantics<arbitrary>], iteration_bounds = array<i64: 2, 1>, scalar_prefetch = 0 : i64, scratch_operands = 2 : i64, tpu.core_type = #tpu.core_type<tc>, window_params = [{transform_indices = @transform_0, window_bounds = array<i64: 8, 16, 128>}, {transform_indices = @transform_1, window_bounds = array<i64: 8, 16, 1>}, {transform_indices = @transform_2, window_bounds = array<i64: 1, 128, 512>}, {transform_indices = @transform_3, window_bounds = array<i64: 1, 128, 512>}, {transform_indices = @transform_4, window_bounds = array<i64: 1, 1, 512>}, {transform_indices = @transform_5, window_bounds = array<i64: 8, 16, 128>}, {transform_indices = @transform_6, window_bounds = array<i64: 1, 16, 128>}, {transform_indices = @transform_7, window_bounds = array<i64: 1, 16, 128>}]} {
    %c0_i32 = arith.constant 0 : i32
    %0 = arith.cmpi eq, %arg1, %c0_i32 : i32
    %1 = arith.extui %0 : i1 to i32
    %c0_i32_0 = arith.constant 0 : i32
    %2 = arith.cmpi ne, %1, %c0_i32_0 : i32
    scf.if %2 {
      %cst_147 = arith.constant 0.000000e+00 : f32
      %456 = vector.broadcast %cst_147 : f32 to vector<16x128xf32>
      %c0_148 = arith.constant 0 : index
      %c0_149 = arith.constant 0 : index
      %457 = vector.load %arg10[%c0_148, %c0_149] : memref<16x128xf32, #tpu.memory_space<vmem>>, vector<16x128xf32>
      tpu.vector_store %arg10[%c0_148, %c0_149], %456 {strides = array<i32>} : memref<16x128xf32, #tpu.memory_space<vmem>>, vector<16x128xf32>,
      %cst_150 = arith.constant 0.000000e+00 : f32
      %458 = vector.broadcast %cst_150 : f32 to vector<16x128xf32>
      %c0_151 = arith.constant 0 : index
      %c0_152 = arith.constant 0 : index
      %459 = vector.load %arg11[%c0_151, %c0_152] : memref<16x128xf32, #tpu.memory_space<vmem>>, vector<16x128xf32>
      tpu.vector_store %arg11[%c0_151, %c0_152], %458 {strides = array<i32>} : memref<16x128xf32, #tpu.memory_space<vmem>>, vector<16x128xf32>,
    } else {
    }
    %c0 = arith.constant 0 : index
    %c0_1 = arith.constant 0 : index
    %c0_2 = arith.constant 0 : index
    %3 = vector.load %arg4[%c0, %c0_1, %c0_2] : memref<1x128x512xbf16, #tpu.memory_space<vmem>>, vector<1x128x512xbf16>
    %4 = vector.shape_cast %3 : vector<1x128x512xbf16> to vector<128x512xbf16>
    %c0_3 = arith.constant 0 : index
    %c0_4 = arith.constant 0 : index
    %c0_5 = arith.constant 0 : index
    %5 = vector.load %arg5[%c0_3, %c0_4, %c0_5] : memref<1x128x512xbf16, #tpu.memory_space<vmem>>, vector<1x128x512xbf16>
    %6 = vector.shape_cast %5 : vector<1x128x512xbf16> to vector<128x512xbf16>
    %c0_6 = arith.constant 0 : index
    %c0_7 = arith.constant 0 : index
    %c0_8 = arith.constant 0 : index
    %7 = vector.load %arg6[%c0_6, %c0_7, %c0_8] : memref<1x1x512xf32, #tpu.memory_space<vmem>>, vector<1x1x512xf32>
    %8 = vector.shape_cast %7 : vector<1x1x512xf32> to vector<1x512xf32>
    %c0_9 = arith.constant 0 : index
    %c0_10 = arith.constant 0 : index
    %9 = vector.load %arg10[%c0_9, %c0_10] : memref<16x128xf32, #tpu.memory_space<vmem>>, vector<16x128xf32>
    %c0_11 = arith.constant 0 : index
    %c0_12 = arith.constant 0 : index
    %10 = vector.load %arg11[%c0_11, %c0_12] : memref<16x128xf32, #tpu.memory_space<vmem>>, vector<16x128xf32>
    %c7_i32 = arith.constant 7 : i32
    %11 = arith.muli %arg0, %c7_i32 : i32
    %c2_i32 = arith.constant 2 : i32
    %12 = arith.muli %c2_i32, %arg0 : i32
    %c1_i32 = arith.constant 1 : i32
    %13 = arith.subi %c1_i32, %12 : i32
    %c0_i32_13 = arith.constant 0 : i32
    %14 = arith.muli %13, %c0_i32_13 : i32
    %15 = arith.addi %11, %14 : i32
    %16 = arith.index_cast %15 : i32 to index
    %c0_14 = arith.constant 0 : index
    %c0_15 = arith.constant 0 : index
    %17 = vector.load %arg2[%16, %c0_14, %c0_15] : memref<8x16x128xbf16, #tpu.memory_space<vmem>>, vector<1x16x128xbf16>
    %18 = vector.shape_cast %17 : vector<1x16x128xbf16> to vector<16x128xbf16>
    %cst = arith.constant dense<0.000000e+00> : vector<16x512xf32>
    %19 = tpu.matmul %18, %4, %cst {dimension_numbers = #tpu.dot_dimension_numbers<[1], [0], [0], [1], [0, 0, 1, 1], [], []>} : vector<16x128xbf16>, vector<128x512xbf16>, vector<16x512xf32> -> vector<16x512xf32>
    %20 = arith.truncf %9 : vector<16x128xf32> to vector<16x128xbf16>
    %cst_16 = arith.constant dense<0.000000e+00> : vector<16x512xf32>
    %21 = tpu.matmul %20, %6, %cst_16 {dimension_numbers = #tpu.dot_dimension_numbers<[1], [0], [0], [1], [0, 0, 1, 1], [], []>} : vector<16x128xbf16>, vector<128x512xbf16>, vector<16x512xf32> -> vector<16x512xf32>
    %22 = arith.addf %19, %21 : vector<16x512xf32>
    %23 = vector.broadcast %8 : vector<1x512xf32> to vector<16x512xf32>
    %24 = arith.addf %22, %23 : vector<16x512xf32>
    %25 = vector.extract_strided_slice %24 {offsets = [0, 0], sizes = [16, 128], strides = [1, 1]} : vector<16x512xf32> to vector<16x128xf32>
    %26 = arith.negf %25 : vector<16x128xf32>
    %27 = math.exp %26 : vector<16x128xf32>
    %cst_17 = arith.constant 1.000000e+00 : f32
    %28 = vector.broadcast %cst_17 : f32 to vector<16x128xf32>
    %29 = arith.addf %28, %27 : vector<16x128xf32>
    %30 = arith.divf %28, %29 : vector<16x128xf32>
    %31 = vector.extract_strided_slice %24 {offsets = [0, 128], sizes = [16, 128], strides = [1, 1]} : vector<16x512xf32> to vector<16x128xf32>
    %32 = arith.negf %31 : vector<16x128xf32>
    %33 = math.exp %32 : vector<16x128xf32>
    %cst_18 = arith.constant 1.000000e+00 : f32
    %34 = vector.broadcast %cst_18 : f32 to vector<16x128xf32>
    %35 = arith.addf %34, %33 : vector<16x128xf32>
    %36 = arith.divf %34, %35 : vector<16x128xf32>
    %37 = vector.extract_strided_slice %24 {offsets = [0, 256], sizes = [16, 128], strides = [1, 1]} : vector<16x512xf32> to vector<16x128xf32>
    %38 = math.tanh %37 : vector<16x128xf32>
    %39 = vector.extract_strided_slice %24 {offsets = [0, 384], sizes = [16, 128], strides = [1, 1]} : vector<16x512xf32> to vector<16x128xf32>
    %40 = arith.negf %39 : vector<16x128xf32>
    %41 = math.exp %40 : vector<16x128xf32>
    %cst_19 = arith.constant 1.000000e+00 : f32
    %42 = vector.broadcast %cst_19 : f32 to vector<16x128xf32>
    %43 = arith.addf %42, %41 : vector<16x128xf32>
    %44 = arith.divf %42, %43 : vector<16x128xf32>
    %45 = arith.mulf %36, %10 : vector<16x128xf32>
    %46 = arith.mulf %30, %38 : vector<16x128xf32>
    %47 = arith.addf %45, %46 : vector<16x128xf32>
    %48 = math.tanh %47 : vector<16x128xf32>
    %49 = arith.mulf %44, %48 : vector<16x128xf32>
    %50 = arith.index_cast %15 : i32 to index
    %c0_20 = arith.constant 0 : index
    %c0_21 = arith.constant 0 : index
    %51 = vector.load %arg3[%50, %c0_20, %c0_21] : memref<8x16x1xf32, #tpu.memory_space<vmem>>, vector<1x16x1xf32>
    %52 = vector.shape_cast %51 : vector<1x16x1xf32> to vector<16x1xf32>
    %cst_22 = arith.constant 0.000000e+00 : f32
    %53 = vector.broadcast %cst_22 : f32 to vector<16x1xf32>
    %54 = arith.cmpf ogt, %52, %53 : vector<16x1xf32>
    %55 = vector.shape_cast %54 : vector<16x1xi1> to vector<16x1xi1>
    %56 = vector.broadcast %55 : vector<16x1xi1> to vector<16x128xi1>
    %57 = arith.select %56, %49, %9 : vector<16x128xi1>, vector<16x128xf32>
    %58 = arith.select %56, %47, %10 : vector<16x128xi1>, vector<16x128xf32>
    %cst_23 = arith.constant 0.000000e+00 : f32
    %59 = vector.broadcast %cst_23 : f32 to vector<16x128xf32>
    %60 = arith.select %56, %49, %59 : vector<16x128xi1>, vector<16x128xf32>
    %61 = arith.truncf %60 : vector<16x128xf32> to vector<16x128xbf16>
    %62 = arith.index_cast %15 : i32 to index
    %c0_24 = arith.constant 0 : index
    %c0_25 = arith.constant 0 : index
    %63 = vector.load %arg7[%62, %c0_24, %c0_25] : memref<8x16x128xbf16, #tpu.memory_space<vmem>>, vector<1x16x128xbf16>
    %64 = vector.shape_cast %63 : vector<1x16x128xbf16> to vector<16x128xbf16>
    %65 = vector.shape_cast %61 : vector<16x128xbf16> to vector<1x16x128xbf16>
    tpu.vector_store %arg7[%62, %c0_24, %c0_25], %65 {strides = array<i32>} : memref<8x16x128xbf16, #tpu.memory_space<vmem>>, vector<1x16x128xbf16>,
    %c7_i32_26 = arith.constant 7 : i32
    %66 = arith.muli %arg0, %c7_i32_26 : i32
    %c2_i32_27 = arith.constant 2 : i32
    %67 = arith.muli %c2_i32_27, %arg0 : i32
    %c1_i32_28 = arith.constant 1 : i32
    %68 = arith.subi %c1_i32_28, %67 : i32
    %c1_i32_29 = arith.constant 1 : i32
    %69 = arith.muli %68, %c1_i32_29 : i32
    %70 = arith.addi %66, %69 : i32
    %71 = arith.index_cast %70 : i32 to index
    %c0_30 = arith.constant 0 : index
    %c0_31 = arith.constant 0 : index
    %72 = vector.load %arg2[%71, %c0_30, %c0_31] : memref<8x16x128xbf16, #tpu.memory_space<vmem>>, vector<1x16x128xbf16>
    %73 = vector.shape_cast %72 : vector<1x16x128xbf16> to vector<16x128xbf16>
    %cst_32 = arith.constant dense<0.000000e+00> : vector<16x512xf32>
    %74 = tpu.matmul %73, %4, %cst_32 {dimension_numbers = #tpu.dot_dimension_numbers<[1], [0], [0], [1], [0, 0, 1, 1], [], []>} : vector<16x128xbf16>, vector<128x512xbf16>, vector<16x512xf32> -> vector<16x512xf32>
    %75 = arith.truncf %57 : vector<16x128xf32> to vector<16x128xbf16>
    %cst_33 = arith.constant dense<0.000000e+00> : vector<16x512xf32>
    %76 = tpu.matmul %75, %6, %cst_33 {dimension_numbers = #tpu.dot_dimension_numbers<[1], [0], [0], [1], [0, 0, 1, 1], [], []>} : vector<16x128xbf16>, vector<128x512xbf16>, vector<16x512xf32> -> vector<16x512xf32>
    %77 = arith.addf %74, %76 : vector<16x512xf32>
    %78 = vector.broadcast %8 : vector<1x512xf32> to vector<16x512xf32>
    %79 = arith.addf %77, %78 : vector<16x512xf32>
    %80 = vector.extract_strided_slice %79 {offsets = [0, 0], sizes = [16, 128], strides = [1, 1]} : vector<16x512xf32> to vector<16x128xf32>
    %81 = arith.negf %80 : vector<16x128xf32>
    %82 = math.exp %81 : vector<16x128xf32>
    %cst_34 = arith.constant 1.000000e+00 : f32
    %83 = vector.broadcast %cst_34 : f32 to vector<16x128xf32>
    %84 = arith.addf %83, %82 : vector<16x128xf32>
    %85 = arith.divf %83, %84 : vector<16x128xf32>
    %86 = vector.extract_strided_slice %79 {offsets = [0, 128], sizes = [16, 128], strides = [1, 1]} : vector<16x512xf32> to vector<16x128xf32>
    %87 = arith.negf %86 : vector<16x128xf32>
    %88 = math.exp %87 : vector<16x128xf32>
    %cst_35 = arith.constant 1.000000e+00 : f32
    %89 = vector.broadcast %cst_35 : f32 to vector<16x128xf32>
    %90 = arith.addf %89, %88 : vector<16x128xf32>
    %91 = arith.divf %89, %90 : vector<16x128xf32>
    %92 = vector.extract_strided_slice %79 {offsets = [0, 256], sizes = [16, 128], strides = [1, 1]} : vector<16x512xf32> to vector<16x128xf32>
    %93 = math.tanh %92 : vector<16x128xf32>
    %94 = vector.extract_strided_slice %79 {offsets = [0, 384], sizes = [16, 128], strides = [1, 1]} : vector<16x512xf32> to vector<16x128xf32>
    %95 = arith.negf %94 : vector<16x128xf32>
    %96 = math.exp %95 : vector<16x128xf32>
    %cst_36 = arith.constant 1.000000e+00 : f32
    %97 = vector.broadcast %cst_36 : f32 to vector<16x128xf32>
    %98 = arith.addf %97, %96 : vector<16x128xf32>
    %99 = arith.divf %97, %98 : vector<16x128xf32>
    %100 = arith.mulf %91, %58 : vector<16x128xf32>
    %101 = arith.mulf %85, %93 : vector<16x128xf32>
    %102 = arith.addf %100, %101 : vector<16x128xf32>
    %103 = math.tanh %102 : vector<16x128xf32>
    %104 = arith.mulf %99, %103 : vector<16x128xf32>
    %105 = arith.index_cast %70 : i32 to index
    %c0_37 = arith.constant 0 : index
    %c0_38 = arith.constant 0 : index
    %106 = vector.load %arg3[%105, %c0_37, %c0_38] : memref<8x16x1xf32, #tpu.memory_space<vmem>>, vector<1x16x1xf32>
    %107 = vector.shape_cast %106 : vector<1x16x1xf32> to vector<16x1xf32>
    %cst_39 = arith.constant 0.000000e+00 : f32
    %108 = vector.broadcast %cst_39 : f32 to vector<16x1xf32>
    %109 = arith.cmpf ogt, %107, %108 : vector<16x1xf32>
    %110 = vector.shape_cast %109 : vector<16x1xi1> to vector<16x1xi1>
    %111 = vector.broadcast %110 : vector<16x1xi1> to vector<16x128xi1>
    %112 = arith.select %111, %104, %57 : vector<16x128xi1>, vector<16x128xf32>
    %113 = arith.select %111, %102, %58 : vector<16x128xi1>, vector<16x128xf32>
    %cst_40 = arith.constant 0.000000e+00 : f32
    %114 = vector.broadcast %cst_40 : f32 to vector<16x128xf32>
    %115 = arith.select %111, %104, %114 : vector<16x128xi1>, vector<16x128xf32>
    %116 = arith.truncf %115 : vector<16x128xf32> to vector<16x128xbf16>
    %117 = arith.index_cast %70 : i32 to index
    %c0_41 = arith.constant 0 : index
    %c0_42 = arith.constant 0 : index
    %118 = vector.load %arg7[%117, %c0_41, %c0_42] : memref<8x16x128xbf16, #tpu.memory_space<vmem>>, vector<1x16x128xbf16>
    %119 = vector.shape_cast %118 : vector<1x16x128xbf16> to vector<16x128xbf16>
    %120 = vector.shape_cast %116 : vector<16x128xbf16> to vector<1x16x128xbf16>
    tpu.vector_store %arg7[%117, %c0_41, %c0_42], %120 {strides = array<i32>} : memref<8x16x128xbf16, #tpu.memory_space<vmem>>, vector<1x16x128xbf16>,
    %c7_i32_43 = arith.constant 7 : i32
    %121 = arith.muli %arg0, %c7_i32_43 : i32
    %c2_i32_44 = arith.constant 2 : i32
    %122 = arith.muli %c2_i32_44, %arg0 : i32
    %c1_i32_45 = arith.constant 1 : i32
    %123 = arith.subi %c1_i32_45, %122 : i32
    %c2_i32_46 = arith.constant 2 : i32
    %124 = arith.muli %123, %c2_i32_46 : i32
    %125 = arith.addi %121, %124 : i32
    %126 = arith.index_cast %125 : i32 to index
    %c0_47 = arith.constant 0 : index
    %c0_48 = arith.constant 0 : index
    %127 = vector.load %arg2[%126, %c0_47, %c0_48] : memref<8x16x128xbf16, #tpu.memory_space<vmem>>, vector<1x16x128xbf16>
    %128 = vector.shape_cast %127 : vector<1x16x128xbf16> to vector<16x128xbf16>
    %cst_49 = arith.constant dense<0.000000e+00> : vector<16x512xf32>
    %129 = tpu.matmul %128, %4, %cst_49 {dimension_numbers = #tpu.dot_dimension_numbers<[1], [0], [0], [1], [0, 0, 1, 1], [], []>} : vector<16x128xbf16>, vector<128x512xbf16>, vector<16x512xf32> -> vector<16x512xf32>
    %130 = arith.truncf %112 : vector<16x128xf32> to vector<16x128xbf16>
    %cst_50 = arith.constant dense<0.000000e+00> : vector<16x512xf32>
    %131 = tpu.matmul %130, %6, %cst_50 {dimension_numbers = #tpu.dot_dimension_numbers<[1], [0], [0], [1], [0, 0, 1, 1], [], []>} : vector<16x128xbf16>, vector<128x512xbf16>, vector<16x512xf32> -> vector<16x512xf32>
    %132 = arith.addf %129, %131 : vector<16x512xf32>
    %133 = vector.broadcast %8 : vector<1x512xf32> to vector<16x512xf32>
    %134 = arith.addf %132, %133 : vector<16x512xf32>
    %135 = vector.extract_strided_slice %134 {offsets = [0, 0], sizes = [16, 128], strides = [1, 1]} : vector<16x512xf32> to vector<16x128xf32>
    %136 = arith.negf %135 : vector<16x128xf32>
    %137 = math.exp %136 : vector<16x128xf32>
    %cst_51 = arith.constant 1.000000e+00 : f32
    %138 = vector.broadcast %cst_51 : f32 to vector<16x128xf32>
    %139 = arith.addf %138, %137 : vector<16x128xf32>
    %140 = arith.divf %138, %139 : vector<16x128xf32>
    %141 = vector.extract_strided_slice %134 {offsets = [0, 128], sizes = [16, 128], strides = [1, 1]} : vector<16x512xf32> to vector<16x128xf32>
    %142 = arith.negf %141 : vector<16x128xf32>
    %143 = math.exp %142 : vector<16x128xf32>
    %cst_52 = arith.constant 1.000000e+00 : f32
    %144 = vector.broadcast %cst_52 : f32 to vector<16x128xf32>
    %145 = arith.addf %144, %143 : vector<16x128xf32>
    %146 = arith.divf %144, %145 : vector<16x128xf32>
    %147 = vector.extract_strided_slice %134 {offsets = [0, 256], sizes = [16, 128], strides = [1, 1]} : vector<16x512xf32> to vector<16x128xf32>
    %148 = math.tanh %147 : vector<16x128xf32>
    %149 = vector.extract_strided_slice %134 {offsets = [0, 384], sizes = [16, 128], strides = [1, 1]} : vector<16x512xf32> to vector<16x128xf32>
    %150 = arith.negf %149 : vector<16x128xf32>
    %151 = math.exp %150 : vector<16x128xf32>
    %cst_53 = arith.constant 1.000000e+00 : f32
    %152 = vector.broadcast %cst_53 : f32 to vector<16x128xf32>
    %153 = arith.addf %152, %151 : vector<16x128xf32>
    %154 = arith.divf %152, %153 : vector<16x128xf32>
    %155 = arith.mulf %146, %113 : vector<16x128xf32>
    %156 = arith.mulf %140, %148 : vector<16x128xf32>
    %157 = arith.addf %155, %156 : vector<16x128xf32>
    %158 = math.tanh %157 : vector<16x128xf32>
    %159 = arith.mulf %154, %158 : vector<16x128xf32>
    %160 = arith.index_cast %125 : i32 to index
    %c0_54 = arith.constant 0 : index
    %c0_55 = arith.constant 0 : index
    %161 = vector.load %arg3[%160, %c0_54, %c0_55] : memref<8x16x1xf32, #tpu.memory_space<vmem>>, vector<1x16x1xf32>
    %162 = vector.shape_cast %161 : vector<1x16x1xf32> to vector<16x1xf32>
    %cst_56 = arith.constant 0.000000e+00 : f32
    %163 = vector.broadcast %cst_56 : f32 to vector<16x1xf32>
    %164 = arith.cmpf ogt, %162, %163 : vector<16x1xf32>
    %165 = vector.shape_cast %164 : vector<16x1xi1> to vector<16x1xi1>
    %166 = vector.broadcast %165 : vector<16x1xi1> to vector<16x128xi1>
    %167 = arith.select %166, %159, %112 : vector<16x128xi1>, vector<16x128xf32>
    %168 = arith.select %166, %157, %113 : vector<16x128xi1>, vector<16x128xf32>
    %cst_57 = arith.constant 0.000000e+00 : f32
    %169 = vector.broadcast %cst_57 : f32 to vector<16x128xf32>
    %170 = arith.select %166, %159, %169 : vector<16x128xi1>, vector<16x128xf32>
    %171 = arith.truncf %170 : vector<16x128xf32> to vector<16x128xbf16>
    %172 = arith.index_cast %125 : i32 to index
    %c0_58 = arith.constant 0 : index
    %c0_59 = arith.constant 0 : index
    %173 = vector.load %arg7[%172, %c0_58, %c0_59] : memref<8x16x128xbf16, #tpu.memory_space<vmem>>, vector<1x16x128xbf16>
    %174 = vector.shape_cast %173 : vector<1x16x128xbf16> to vector<16x128xbf16>
    %175 = vector.shape_cast %171 : vector<16x128xbf16> to vector<1x16x128xbf16>
    tpu.vector_store %arg7[%172, %c0_58, %c0_59], %175 {strides = array<i32>} : memref<8x16x128xbf16, #tpu.memory_space<vmem>>, vector<1x16x128xbf16>,
    %c7_i32_60 = arith.constant 7 : i32
    %176 = arith.muli %arg0, %c7_i32_60 : i32
    %c2_i32_61 = arith.constant 2 : i32
    %177 = arith.muli %c2_i32_61, %arg0 : i32
    %c1_i32_62 = arith.constant 1 : i32
    %178 = arith.subi %c1_i32_62, %177 : i32
    %c3_i32 = arith.constant 3 : i32
    %179 = arith.muli %178, %c3_i32 : i32
    %180 = arith.addi %176, %179 : i32
    %181 = arith.index_cast %180 : i32 to index
    %c0_63 = arith.constant 0 : index
    %c0_64 = arith.constant 0 : index
    %182 = vector.load %arg2[%181, %c0_63, %c0_64] : memref<8x16x128xbf16, #tpu.memory_space<vmem>>, vector<1x16x128xbf16>
    %183 = vector.shape_cast %182 : vector<1x16x128xbf16> to vector<16x128xbf16>
    %cst_65 = arith.constant dense<0.000000e+00> : vector<16x512xf32>
    %184 = tpu.matmul %183, %4, %cst_65 {dimension_numbers = #tpu.dot_dimension_numbers<[1], [0], [0], [1], [0, 0, 1, 1], [], []>} : vector<16x128xbf16>, vector<128x512xbf16>, vector<16x512xf32> -> vector<16x512xf32>
    %185 = arith.truncf %167 : vector<16x128xf32> to vector<16x128xbf16>
    %cst_66 = arith.constant dense<0.000000e+00> : vector<16x512xf32>
    %186 = tpu.matmul %185, %6, %cst_66 {dimension_numbers = #tpu.dot_dimension_numbers<[1], [0], [0], [1], [0, 0, 1, 1], [], []>} : vector<16x128xbf16>, vector<128x512xbf16>, vector<16x512xf32> -> vector<16x512xf32>
    %187 = arith.addf %184, %186 : vector<16x512xf32>
    %188 = vector.broadcast %8 : vector<1x512xf32> to vector<16x512xf32>
    %189 = arith.addf %187, %188 : vector<16x512xf32>
    %190 = vector.extract_strided_slice %189 {offsets = [0, 0], sizes = [16, 128], strides = [1, 1]} : vector<16x512xf32> to vector<16x128xf32>
    %191 = arith.negf %190 : vector<16x128xf32>
    %192 = math.exp %191 : vector<16x128xf32>
    %cst_67 = arith.constant 1.000000e+00 : f32
    %193 = vector.broadcast %cst_67 : f32 to vector<16x128xf32>
    %194 = arith.addf %193, %192 : vector<16x128xf32>
    %195 = arith.divf %193, %194 : vector<16x128xf32>
    %196 = vector.extract_strided_slice %189 {offsets = [0, 128], sizes = [16, 128], strides = [1, 1]} : vector<16x512xf32> to vector<16x128xf32>
    %197 = arith.negf %196 : vector<16x128xf32>
    %198 = math.exp %197 : vector<16x128xf32>
    %cst_68 = arith.constant 1.000000e+00 : f32
    %199 = vector.broadcast %cst_68 : f32 to vector<16x128xf32>
    %200 = arith.addf %199, %198 : vector<16x128xf32>
    %201 = arith.divf %199, %200 : vector<16x128xf32>
    %202 = vector.extract_strided_slice %189 {offsets = [0, 256], sizes = [16, 128], strides = [1, 1]} : vector<16x512xf32> to vector<16x128xf32>
    %203 = math.tanh %202 : vector<16x128xf32>
    %204 = vector.extract_strided_slice %189 {offsets = [0, 384], sizes = [16, 128], strides = [1, 1]} : vector<16x512xf32> to vector<16x128xf32>
    %205 = arith.negf %204 : vector<16x128xf32>
    %206 = math.exp %205 : vector<16x128xf32>
    %cst_69 = arith.constant 1.000000e+00 : f32
    %207 = vector.broadcast %cst_69 : f32 to vector<16x128xf32>
    %208 = arith.addf %207, %206 : vector<16x128xf32>
    %209 = arith.divf %207, %208 : vector<16x128xf32>
    %210 = arith.mulf %201, %168 : vector<16x128xf32>
    %211 = arith.mulf %195, %203 : vector<16x128xf32>
    %212 = arith.addf %210, %211 : vector<16x128xf32>
    %213 = math.tanh %212 : vector<16x128xf32>
    %214 = arith.mulf %209, %213 : vector<16x128xf32>
    %215 = arith.index_cast %180 : i32 to index
    %c0_70 = arith.constant 0 : index
    %c0_71 = arith.constant 0 : index
    %216 = vector.load %arg3[%215, %c0_70, %c0_71] : memref<8x16x1xf32, #tpu.memory_space<vmem>>, vector<1x16x1xf32>
    %217 = vector.shape_cast %216 : vector<1x16x1xf32> to vector<16x1xf32>
    %cst_72 = arith.constant 0.000000e+00 : f32
    %218 = vector.broadcast %cst_72 : f32 to vector<16x1xf32>
    %219 = arith.cmpf ogt, %217, %218 : vector<16x1xf32>
    %220 = vector.shape_cast %219 : vector<16x1xi1> to vector<16x1xi1>
    %221 = vector.broadcast %220 : vector<16x1xi1> to vector<16x128xi1>
    %222 = arith.select %221, %214, %167 : vector<16x128xi1>, vector<16x128xf32>
    %223 = arith.select %221, %212, %168 : vector<16x128xi1>, vector<16x128xf32>
    %cst_73 = arith.constant 0.000000e+00 : f32
    %224 = vector.broadcast %cst_73 : f32 to vector<16x128xf32>
    %225 = arith.select %221, %214, %224 : vector<16x128xi1>, vector<16x128xf32>
    %226 = arith.truncf %225 : vector<16x128xf32> to vector<16x128xbf16>
    %227 = arith.index_cast %180 : i32 to index
    %c0_74 = arith.constant 0 : index
    %c0_75 = arith.constant 0 : index
    %228 = vector.load %arg7[%227, %c0_74, %c0_75] : memref<8x16x128xbf16, #tpu.memory_space<vmem>>, vector<1x16x128xbf16>
    %229 = vector.shape_cast %228 : vector<1x16x128xbf16> to vector<16x128xbf16>
    %230 = vector.shape_cast %226 : vector<16x128xbf16> to vector<1x16x128xbf16>
    tpu.vector_store %arg7[%227, %c0_74, %c0_75], %230 {strides = array<i32>} : memref<8x16x128xbf16, #tpu.memory_space<vmem>>, vector<1x16x128xbf16>,
    %c7_i32_76 = arith.constant 7 : i32
    %231 = arith.muli %arg0, %c7_i32_76 : i32
    %c2_i32_77 = arith.constant 2 : i32
    %232 = arith.muli %c2_i32_77, %arg0 : i32
    %c1_i32_78 = arith.constant 1 : i32
    %233 = arith.subi %c1_i32_78, %232 : i32
    %c4_i32 = arith.constant 4 : i32
    %234 = arith.muli %233, %c4_i32 : i32
    %235 = arith.addi %231, %234 : i32
    %236 = arith.index_cast %235 : i32 to index
    %c0_79 = arith.constant 0 : index
    %c0_80 = arith.constant 0 : index
    %237 = vector.load %arg2[%236, %c0_79, %c0_80] : memref<8x16x128xbf16, #tpu.memory_space<vmem>>, vector<1x16x128xbf16>
    %238 = vector.shape_cast %237 : vector<1x16x128xbf16> to vector<16x128xbf16>
    %cst_81 = arith.constant dense<0.000000e+00> : vector<16x512xf32>
    %239 = tpu.matmul %238, %4, %cst_81 {dimension_numbers = #tpu.dot_dimension_numbers<[1], [0], [0], [1], [0, 0, 1, 1], [], []>} : vector<16x128xbf16>, vector<128x512xbf16>, vector<16x512xf32> -> vector<16x512xf32>
    %240 = arith.truncf %222 : vector<16x128xf32> to vector<16x128xbf16>
    %cst_82 = arith.constant dense<0.000000e+00> : vector<16x512xf32>
    %241 = tpu.matmul %240, %6, %cst_82 {dimension_numbers = #tpu.dot_dimension_numbers<[1], [0], [0], [1], [0, 0, 1, 1], [], []>} : vector<16x128xbf16>, vector<128x512xbf16>, vector<16x512xf32> -> vector<16x512xf32>
    %242 = arith.addf %239, %241 : vector<16x512xf32>
    %243 = vector.broadcast %8 : vector<1x512xf32> to vector<16x512xf32>
    %244 = arith.addf %242, %243 : vector<16x512xf32>
    %245 = vector.extract_strided_slice %244 {offsets = [0, 0], sizes = [16, 128], strides = [1, 1]} : vector<16x512xf32> to vector<16x128xf32>
    %246 = arith.negf %245 : vector<16x128xf32>
    %247 = math.exp %246 : vector<16x128xf32>
    %cst_83 = arith.constant 1.000000e+00 : f32
    %248 = vector.broadcast %cst_83 : f32 to vector<16x128xf32>
    %249 = arith.addf %248, %247 : vector<16x128xf32>
    %250 = arith.divf %248, %249 : vector<16x128xf32>
    %251 = vector.extract_strided_slice %244 {offsets = [0, 128], sizes = [16, 128], strides = [1, 1]} : vector<16x512xf32> to vector<16x128xf32>
    %252 = arith.negf %251 : vector<16x128xf32>
    %253 = math.exp %252 : vector<16x128xf32>
    %cst_84 = arith.constant 1.000000e+00 : f32
    %254 = vector.broadcast %cst_84 : f32 to vector<16x128xf32>
    %255 = arith.addf %254, %253 : vector<16x128xf32>
    %256 = arith.divf %254, %255 : vector<16x128xf32>
    %257 = vector.extract_strided_slice %244 {offsets = [0, 256], sizes = [16, 128], strides = [1, 1]} : vector<16x512xf32> to vector<16x128xf32>
    %258 = math.tanh %257 : vector<16x128xf32>
    %259 = vector.extract_strided_slice %244 {offsets = [0, 384], sizes = [16, 128], strides = [1, 1]} : vector<16x512xf32> to vector<16x128xf32>
    %260 = arith.negf %259 : vector<16x128xf32>
    %261 = math.exp %260 : vector<16x128xf32>
    %cst_85 = arith.constant 1.000000e+00 : f32
    %262 = vector.broadcast %cst_85 : f32 to vector<16x128xf32>
    %263 = arith.addf %262, %261 : vector<16x128xf32>
    %264 = arith.divf %262, %263 : vector<16x128xf32>
    %265 = arith.mulf %256, %223 : vector<16x128xf32>
    %266 = arith.mulf %250, %258 : vector<16x128xf32>
    %267 = arith.addf %265, %266 : vector<16x128xf32>
    %268 = math.tanh %267 : vector<16x128xf32>
    %269 = arith.mulf %264, %268 : vector<16x128xf32>
    %270 = arith.index_cast %235 : i32 to index
    %c0_86 = arith.constant 0 : index
    %c0_87 = arith.constant 0 : index
    %271 = vector.load %arg3[%270, %c0_86, %c0_87] : memref<8x16x1xf32, #tpu.memory_space<vmem>>, vector<1x16x1xf32>
    %272 = vector.shape_cast %271 : vector<1x16x1xf32> to vector<16x1xf32>
    %cst_88 = arith.constant 0.000000e+00 : f32
    %273 = vector.broadcast %cst_88 : f32 to vector<16x1xf32>
    %274 = arith.cmpf ogt, %272, %273 : vector<16x1xf32>
    %275 = vector.shape_cast %274 : vector<16x1xi1> to vector<16x1xi1>
    %276 = vector.broadcast %275 : vector<16x1xi1> to vector<16x128xi1>
    %277 = arith.select %276, %269, %222 : vector<16x128xi1>, vector<16x128xf32>
    %278 = arith.select %276, %267, %223 : vector<16x128xi1>, vector<16x128xf32>
    %cst_89 = arith.constant 0.000000e+00 : f32
    %279 = vector.broadcast %cst_89 : f32 to vector<16x128xf32>
    %280 = arith.select %276, %269, %279 : vector<16x128xi1>, vector<16x128xf32>
    %281 = arith.truncf %280 : vector<16x128xf32> to vector<16x128xbf16>
    %282 = arith.index_cast %235 : i32 to index
    %c0_90 = arith.constant 0 : index
    %c0_91 = arith.constant 0 : index
    %283 = vector.load %arg7[%282, %c0_90, %c0_91] : memref<8x16x128xbf16, #tpu.memory_space<vmem>>, vector<1x16x128xbf16>
    %284 = vector.shape_cast %283 : vector<1x16x128xbf16> to vector<16x128xbf16>
    %285 = vector.shape_cast %281 : vector<16x128xbf16> to vector<1x16x128xbf16>
    tpu.vector_store %arg7[%282, %c0_90, %c0_91], %285 {strides = array<i32>} : memref<8x16x128xbf16, #tpu.memory_space<vmem>>, vector<1x16x128xbf16>,
    %c7_i32_92 = arith.constant 7 : i32
    %286 = arith.muli %arg0, %c7_i32_92 : i32
    %c2_i32_93 = arith.constant 2 : i32
    %287 = arith.muli %c2_i32_93, %arg0 : i32
    %c1_i32_94 = arith.constant 1 : i32
    %288 = arith.subi %c1_i32_94, %287 : i32
    %c5_i32 = arith.constant 5 : i32
    %289 = arith.muli %288, %c5_i32 : i32
    %290 = arith.addi %286, %289 : i32
    %291 = arith.index_cast %290 : i32 to index
    %c0_95 = arith.constant 0 : index
    %c0_96 = arith.constant 0 : index
    %292 = vector.load %arg2[%291, %c0_95, %c0_96] : memref<8x16x128xbf16, #tpu.memory_space<vmem>>, vector<1x16x128xbf16>
    %293 = vector.shape_cast %292 : vector<1x16x128xbf16> to vector<16x128xbf16>
    %cst_97 = arith.constant dense<0.000000e+00> : vector<16x512xf32>
    %294 = tpu.matmul %293, %4, %cst_97 {dimension_numbers = #tpu.dot_dimension_numbers<[1], [0], [0], [1], [0, 0, 1, 1], [], []>} : vector<16x128xbf16>, vector<128x512xbf16>, vector<16x512xf32> -> vector<16x512xf32>
    %295 = arith.truncf %277 : vector<16x128xf32> to vector<16x128xbf16>
    %cst_98 = arith.constant dense<0.000000e+00> : vector<16x512xf32>
    %296 = tpu.matmul %295, %6, %cst_98 {dimension_numbers = #tpu.dot_dimension_numbers<[1], [0], [0], [1], [0, 0, 1, 1], [], []>} : vector<16x128xbf16>, vector<128x512xbf16>, vector<16x512xf32> -> vector<16x512xf32>
    %297 = arith.addf %294, %296 : vector<16x512xf32>
    %298 = vector.broadcast %8 : vector<1x512xf32> to vector<16x512xf32>
    %299 = arith.addf %297, %298 : vector<16x512xf32>
    %300 = vector.extract_strided_slice %299 {offsets = [0, 0], sizes = [16, 128], strides = [1, 1]} : vector<16x512xf32> to vector<16x128xf32>
    %301 = arith.negf %300 : vector<16x128xf32>
    %302 = math.exp %301 : vector<16x128xf32>
    %cst_99 = arith.constant 1.000000e+00 : f32
    %303 = vector.broadcast %cst_99 : f32 to vector<16x128xf32>
    %304 = arith.addf %303, %302 : vector<16x128xf32>
    %305 = arith.divf %303, %304 : vector<16x128xf32>
    %306 = vector.extract_strided_slice %299 {offsets = [0, 128], sizes = [16, 128], strides = [1, 1]} : vector<16x512xf32> to vector<16x128xf32>
    %307 = arith.negf %306 : vector<16x128xf32>
    %308 = math.exp %307 : vector<16x128xf32>
    %cst_100 = arith.constant 1.000000e+00 : f32
    %309 = vector.broadcast %cst_100 : f32 to vector<16x128xf32>
    %310 = arith.addf %309, %308 : vector<16x128xf32>
    %311 = arith.divf %309, %310 : vector<16x128xf32>
    %312 = vector.extract_strided_slice %299 {offsets = [0, 256], sizes = [16, 128], strides = [1, 1]} : vector<16x512xf32> to vector<16x128xf32>
    %313 = math.tanh %312 : vector<16x128xf32>
    %314 = vector.extract_strided_slice %299 {offsets = [0, 384], sizes = [16, 128], strides = [1, 1]} : vector<16x512xf32> to vector<16x128xf32>
    %315 = arith.negf %314 : vector<16x128xf32>
    %316 = math.exp %315 : vector<16x128xf32>
    %cst_101 = arith.constant 1.000000e+00 : f32
    %317 = vector.broadcast %cst_101 : f32 to vector<16x128xf32>
    %318 = arith.addf %317, %316 : vector<16x128xf32>
    %319 = arith.divf %317, %318 : vector<16x128xf32>
    %320 = arith.mulf %311, %278 : vector<16x128xf32>
    %321 = arith.mulf %305, %313 : vector<16x128xf32>
    %322 = arith.addf %320, %321 : vector<16x128xf32>
    %323 = math.tanh %322 : vector<16x128xf32>
    %324 = arith.mulf %319, %323 : vector<16x128xf32>
    %325 = arith.index_cast %290 : i32 to index
    %c0_102 = arith.constant 0 : index
    %c0_103 = arith.constant 0 : index
    %326 = vector.load %arg3[%325, %c0_102, %c0_103] : memref<8x16x1xf32, #tpu.memory_space<vmem>>, vector<1x16x1xf32>
    %327 = vector.shape_cast %326 : vector<1x16x1xf32> to vector<16x1xf32>
    %cst_104 = arith.constant 0.000000e+00 : f32
    %328 = vector.broadcast %cst_104 : f32 to vector<16x1xf32>
    %329 = arith.cmpf ogt, %327, %328 : vector<16x1xf32>
    %330 = vector.shape_cast %329 : vector<16x1xi1> to vector<16x1xi1>
    %331 = vector.broadcast %330 : vector<16x1xi1> to vector<16x128xi1>
    %332 = arith.select %331, %324, %277 : vector<16x128xi1>, vector<16x128xf32>
    %333 = arith.select %331, %322, %278 : vector<16x128xi1>, vector<16x128xf32>
    %cst_105 = arith.constant 0.000000e+00 : f32
    %334 = vector.broadcast %cst_105 : f32 to vector<16x128xf32>
    %335 = arith.select %331, %324, %334 : vector<16x128xi1>, vector<16x128xf32>
    %336 = arith.truncf %335 : vector<16x128xf32> to vector<16x128xbf16>
    %337 = arith.index_cast %290 : i32 to index
    %c0_106 = arith.constant 0 : index
    %c0_107 = arith.constant 0 : index
    %338 = vector.load %arg7[%337, %c0_106, %c0_107] : memref<8x16x128xbf16, #tpu.memory_space<vmem>>, vector<1x16x128xbf16>
    %339 = vector.shape_cast %338 : vector<1x16x128xbf16> to vector<16x128xbf16>
    %340 = vector.shape_cast %336 : vector<16x128xbf16> to vector<1x16x128xbf16>
    tpu.vector_store %arg7[%337, %c0_106, %c0_107], %340 {strides = array<i32>} : memref<8x16x128xbf16, #tpu.memory_space<vmem>>, vector<1x16x128xbf16>,
    %c7_i32_108 = arith.constant 7 : i32
    %341 = arith.muli %arg0, %c7_i32_108 : i32
    %c2_i32_109 = arith.constant 2 : i32
    %342 = arith.muli %c2_i32_109, %arg0 : i32
    %c1_i32_110 = arith.constant 1 : i32
    %343 = arith.subi %c1_i32_110, %342 : i32
    %c6_i32 = arith.constant 6 : i32
    %344 = arith.muli %343, %c6_i32 : i32
    %345 = arith.addi %341, %344 : i32
    %346 = arith.index_cast %345 : i32 to index
    %c0_111 = arith.constant 0 : index
    %c0_112 = arith.constant 0 : index
    %347 = vector.load %arg2[%346, %c0_111, %c0_112] : memref<8x16x128xbf16, #tpu.memory_space<vmem>>, vector<1x16x128xbf16>
    %348 = vector.shape_cast %347 : vector<1x16x128xbf16> to vector<16x128xbf16>
    %cst_113 = arith.constant dense<0.000000e+00> : vector<16x512xf32>
    %349 = tpu.matmul %348, %4, %cst_113 {dimension_numbers = #tpu.dot_dimension_numbers<[1], [0], [0], [1], [0, 0, 1, 1], [], []>} : vector<16x128xbf16>, vector<128x512xbf16>, vector<16x512xf32> -> vector<16x512xf32>
    %350 = arith.truncf %332 : vector<16x128xf32> to vector<16x128xbf16>
    %cst_114 = arith.constant dense<0.000000e+00> : vector<16x512xf32>
    %351 = tpu.matmul %350, %6, %cst_114 {dimension_numbers = #tpu.dot_dimension_numbers<[1], [0], [0], [1], [0, 0, 1, 1], [], []>} : vector<16x128xbf16>, vector<128x512xbf16>, vector<16x512xf32> -> vector<16x512xf32>
    %352 = arith.addf %349, %351 : vector<16x512xf32>
    %353 = vector.broadcast %8 : vector<1x512xf32> to vector<16x512xf32>
    %354 = arith.addf %352, %353 : vector<16x512xf32>
    %355 = vector.extract_strided_slice %354 {offsets = [0, 0], sizes = [16, 128], strides = [1, 1]} : vector<16x512xf32> to vector<16x128xf32>
    %356 = arith.negf %355 : vector<16x128xf32>
    %357 = math.exp %356 : vector<16x128xf32>
    %cst_115 = arith.constant 1.000000e+00 : f32
    %358 = vector.broadcast %cst_115 : f32 to vector<16x128xf32>
    %359 = arith.addf %358, %357 : vector<16x128xf32>
    %360 = arith.divf %358, %359 : vector<16x128xf32>
    %361 = vector.extract_strided_slice %354 {offsets = [0, 128], sizes = [16, 128], strides = [1, 1]} : vector<16x512xf32> to vector<16x128xf32>
    %362 = arith.negf %361 : vector<16x128xf32>
    %363 = math.exp %362 : vector<16x128xf32>
    %cst_116 = arith.constant 1.000000e+00 : f32
    %364 = vector.broadcast %cst_116 : f32 to vector<16x128xf32>
    %365 = arith.addf %364, %363 : vector<16x128xf32>
    %366 = arith.divf %364, %365 : vector<16x128xf32>
    %367 = vector.extract_strided_slice %354 {offsets = [0, 256], sizes = [16, 128], strides = [1, 1]} : vector<16x512xf32> to vector<16x128xf32>
    %368 = math.tanh %367 : vector<16x128xf32>
    %369 = vector.extract_strided_slice %354 {offsets = [0, 384], sizes = [16, 128], strides = [1, 1]} : vector<16x512xf32> to vector<16x128xf32>
    %370 = arith.negf %369 : vector<16x128xf32>
    %371 = math.exp %370 : vector<16x128xf32>
    %cst_117 = arith.constant 1.000000e+00 : f32
    %372 = vector.broadcast %cst_117 : f32 to vector<16x128xf32>
    %373 = arith.addf %372, %371 : vector<16x128xf32>
    %374 = arith.divf %372, %373 : vector<16x128xf32>
    %375 = arith.mulf %366, %333 : vector<16x128xf32>
    %376 = arith.mulf %360, %368 : vector<16x128xf32>
    %377 = arith.addf %375, %376 : vector<16x128xf32>
    %378 = math.tanh %377 : vector<16x128xf32>
    %379 = arith.mulf %374, %378 : vector<16x128xf32>
    %380 = arith.index_cast %345 : i32 to index
    %c0_118 = arith.constant 0 : index
    %c0_119 = arith.constant 0 : index
    %381 = vector.load %arg3[%380, %c0_118, %c0_119] : memref<8x16x1xf32, #tpu.memory_space<vmem>>, vector<1x16x1xf32>
    %382 = vector.shape_cast %381 : vector<1x16x1xf32> to vector<16x1xf32>
    %cst_120 = arith.constant 0.000000e+00 : f32
    %383 = vector.broadcast %cst_120 : f32 to vector<16x1xf32>
    %384 = arith.cmpf ogt, %382, %383 : vector<16x1xf32>
    %385 = vector.shape_cast %384 : vector<16x1xi1> to vector<16x1xi1>
    %386 = vector.broadcast %385 : vector<16x1xi1> to vector<16x128xi1>
    %387 = arith.select %386, %379, %332 : vector<16x128xi1>, vector<16x128xf32>
    %388 = arith.select %386, %377, %333 : vector<16x128xi1>, vector<16x128xf32>
    %cst_121 = arith.constant 0.000000e+00 : f32
    %389 = vector.broadcast %cst_121 : f32 to vector<16x128xf32>
    %390 = arith.select %386, %379, %389 : vector<16x128xi1>, vector<16x128xf32>
    %391 = arith.truncf %390 : vector<16x128xf32> to vector<16x128xbf16>
    %392 = arith.index_cast %345 : i32 to index
    %c0_122 = arith.constant 0 : index
    %c0_123 = arith.constant 0 : index
    %393 = vector.load %arg7[%392, %c0_122, %c0_123] : memref<8x16x128xbf16, #tpu.memory_space<vmem>>, vector<1x16x128xbf16>
    %394 = vector.shape_cast %393 : vector<1x16x128xbf16> to vector<16x128xbf16>
    %395 = vector.shape_cast %391 : vector<16x128xbf16> to vector<1x16x128xbf16>
    tpu.vector_store %arg7[%392, %c0_122, %c0_123], %395 {strides = array<i32>} : memref<8x16x128xbf16, #tpu.memory_space<vmem>>, vector<1x16x128xbf16>,
    %c7_i32_124 = arith.constant 7 : i32
    %396 = arith.muli %arg0, %c7_i32_124 : i32
    %c2_i32_125 = arith.constant 2 : i32
    %397 = arith.muli %c2_i32_125, %arg0 : i32
    %c1_i32_126 = arith.constant 1 : i32
    %398 = arith.subi %c1_i32_126, %397 : i32
    %c7_i32_127 = arith.constant 7 : i32
    %399 = arith.muli %398, %c7_i32_127 : i32
    %400 = arith.addi %396, %399 : i32
    %401 = arith.index_cast %400 : i32 to index
    %c0_128 = arith.constant 0 : index
    %c0_129 = arith.constant 0 : index
    %402 = vector.load %arg2[%401, %c0_128, %c0_129] : memref<8x16x128xbf16, #tpu.memory_space<vmem>>, vector<1x16x128xbf16>
    %403 = vector.shape_cast %402 : vector<1x16x128xbf16> to vector<16x128xbf16>
    %cst_130 = arith.constant dense<0.000000e+00> : vector<16x512xf32>
    %404 = tpu.matmul %403, %4, %cst_130 {dimension_numbers = #tpu.dot_dimension_numbers<[1], [0], [0], [1], [0, 0, 1, 1], [], []>} : vector<16x128xbf16>, vector<128x512xbf16>, vector<16x512xf32> -> vector<16x512xf32>
    %405 = arith.truncf %387 : vector<16x128xf32> to vector<16x128xbf16>
    %cst_131 = arith.constant dense<0.000000e+00> : vector<16x512xf32>
    %406 = tpu.matmul %405, %6, %cst_131 {dimension_numbers = #tpu.dot_dimension_numbers<[1], [0], [0], [1], [0, 0, 1, 1], [], []>} : vector<16x128xbf16>, vector<128x512xbf16>, vector<16x512xf32> -> vector<16x512xf32>
    %407 = arith.addf %404, %406 : vector<16x512xf32>
    %408 = vector.broadcast %8 : vector<1x512xf32> to vector<16x512xf32>
    %409 = arith.addf %407, %408 : vector<16x512xf32>
    %410 = vector.extract_strided_slice %409 {offsets = [0, 0], sizes = [16, 128], strides = [1, 1]} : vector<16x512xf32> to vector<16x128xf32>
    %411 = arith.negf %410 : vector<16x128xf32>
    %412 = math.exp %411 : vector<16x128xf32>
    %cst_132 = arith.constant 1.000000e+00 : f32
    %413 = vector.broadcast %cst_132 : f32 to vector<16x128xf32>
    %414 = arith.addf %413, %412 : vector<16x128xf32>
    %415 = arith.divf %413, %414 : vector<16x128xf32>
    %416 = vector.extract_strided_slice %409 {offsets = [0, 128], sizes = [16, 128], strides = [1, 1]} : vector<16x512xf32> to vector<16x128xf32>
    %417 = arith.negf %416 : vector<16x128xf32>
    %418 = math.exp %417 : vector<16x128xf32>
    %cst_133 = arith.constant 1.000000e+00 : f32
    %419 = vector.broadcast %cst_133 : f32 to vector<16x128xf32>
    %420 = arith.addf %419, %418 : vector<16x128xf32>
    %421 = arith.divf %419, %420 : vector<16x128xf32>
    %422 = vector.extract_strided_slice %409 {offsets = [0, 256], sizes = [16, 128], strides = [1, 1]} : vector<16x512xf32> to vector<16x128xf32>
    %423 = math.tanh %422 : vector<16x128xf32>
    %424 = vector.extract_strided_slice %409 {offsets = [0, 384], sizes = [16, 128], strides = [1, 1]} : vector<16x512xf32> to vector<16x128xf32>
    %425 = arith.negf %424 : vector<16x128xf32>
    %426 = math.exp %425 : vector<16x128xf32>
    %cst_134 = arith.constant 1.000000e+00 : f32
    %427 = vector.broadcast %cst_134 : f32 to vector<16x128xf32>
    %428 = arith.addf %427, %426 : vector<16x128xf32>
    %429 = arith.divf %427, %428 : vector<16x128xf32>
    %430 = arith.mulf %421, %388 : vector<16x128xf32>
    %431 = arith.mulf %415, %423 : vector<16x128xf32>
    %432 = arith.addf %430, %431 : vector<16x128xf32>
    %433 = math.tanh %432 : vector<16x128xf32>
    %434 = arith.mulf %429, %433 : vector<16x128xf32>
    %435 = arith.index_cast %400 : i32 to index
    %c0_135 = arith.constant 0 : index
    %c0_136 = arith.constant 0 : index
    %436 = vector.load %arg3[%435, %c0_135, %c0_136] : memref<8x16x1xf32, #tpu.memory_space<vmem>>, vector<1x16x1xf32>
    %437 = vector.shape_cast %436 : vector<1x16x1xf32> to vector<16x1xf32>
    %cst_137 = arith.constant 0.000000e+00 : f32
    %438 = vector.broadcast %cst_137 : f32 to vector<16x1xf32>
    %439 = arith.cmpf ogt, %437, %438 : vector<16x1xf32>
    %440 = vector.shape_cast %439 : vector<16x1xi1> to vector<16x1xi1>
    %441 = vector.broadcast %440 : vector<16x1xi1> to vector<16x128xi1>
    %442 = arith.select %441, %434, %387 : vector<16x128xi1>, vector<16x128xf32>
    %443 = arith.select %441, %432, %388 : vector<16x128xi1>, vector<16x128xf32>
    %cst_138 = arith.constant 0.000000e+00 : f32
    %444 = vector.broadcast %cst_138 : f32 to vector<16x128xf32>
    %445 = arith.select %441, %434, %444 : vector<16x128xi1>, vector<16x128xf32>
    %446 = arith.truncf %445 : vector<16x128xf32> to vector<16x128xbf16>
    %447 = arith.index_cast %400 : i32 to index
    %c0_139 = arith.constant 0 : index
    %c0_140 = arith.constant 0 : index
    %448 = vector.load %arg7[%447, %c0_139, %c0_140] : memref<8x16x128xbf16, #tpu.memory_space<vmem>>, vector<1x16x128xbf16>
    %449 = vector.shape_cast %448 : vector<1x16x128xbf16> to vector<16x128xbf16>
    %450 = vector.shape_cast %446 : vector<16x128xbf16> to vector<1x16x128xbf16>
    tpu.vector_store %arg7[%447, %c0_139, %c0_140], %450 {strides = array<i32>} : memref<8x16x128xbf16, #tpu.memory_space<vmem>>, vector<1x16x128xbf16>,
    %c0_141 = arith.constant 0 : index
    %c0_142 = arith.constant 0 : index
    %451 = vector.load %arg10[%c0_141, %c0_142] : memref<16x128xf32, #tpu.memory_space<vmem>>, vector<16x128xf32>
    tpu.vector_store %arg10[%c0_141, %c0_142], %442 {strides = array<i32>} : memref<16x128xf32, #tpu.memory_space<vmem>>, vector<16x128xf32>,
    %c0_143 = arith.constant 0 : index
    %c0_144 = arith.constant 0 : index
    %452 = vector.load %arg11[%c0_143, %c0_144] : memref<16x128xf32, #tpu.memory_space<vmem>>, vector<16x128xf32>
    tpu.vector_store %arg11[%c0_143, %c0_144], %443 {strides = array<i32>} : memref<16x128xf32, #tpu.memory_space<vmem>>, vector<16x128xf32>,
    %c0_i32_145 = arith.constant 0 : i32
    %453 = arith.cmpi eq, %arg1, %c0_i32_145 : i32
    %454 = arith.extui %453 : i1 to i32
    %c0_i32_146 = arith.constant 0 : i32
    %455 = arith.cmpi ne, %454, %c0_i32_146 : i32
    scf.if %455 {
      %c0_147 = arith.constant 0 : index
      %c0_148 = arith.constant 0 : index
      %c0_149 = arith.constant 0 : index
      %456 = vector.load %arg8[%c0_147, %c0_148, %c0_149] : memref<1x16x128xf32, #tpu.memory_space<vmem>>, vector<1x16x128xf32>
      %457 = vector.shape_cast %456 : vector<1x16x128xf32> to vector<16x128xf32>
      %458 = vector.shape_cast %442 : vector<16x128xf32> to vector<1x16x128xf32>
      tpu.vector_store %arg8[%c0_147, %c0_148, %c0_149], %458 {strides = array<i32>} : memref<1x16x128xf32, #tpu.memory_space<vmem>>, vector<1x16x128xf32>,
      %c0_150 = arith.constant 0 : index
      %c0_151 = arith.constant 0 : index
      %c0_152 = arith.constant 0 : index
      %459 = vector.load %arg9[%c0_150, %c0_151, %c0_152] : memref<1x16x128xf32, #tpu.memory_space<vmem>>, vector<1x16x128xf32>
      %460 = vector.shape_cast %459 : vector<1x16x128xf32> to vector<16x128xf32>
      %461 = vector.shape_cast %443 : vector<16x128xf32> to vector<1x16x128xf32>
      tpu.vector_store %arg9[%c0_150, %c0_151, %c0_152], %461 {strides = array<i32>} : memref<1x16x128xf32, #tpu.memory_space<vmem>>, vector<1x16x128xf32>,
    } else {
    }
    return
  }
  func.func @transform_0(%arg0: i32, %arg1: i32) -> (i32, i32, i32) {
    %c0_i32 = arith.constant 0 : i32
    %0 = arith.muli %arg0, %c0_i32 : i32
    %c2_i32 = arith.constant 2 : i32
    %1 = arith.muli %c2_i32, %arg0 : i32
    %c1_i32 = arith.constant 1 : i32
    %2 = arith.subi %c1_i32, %1 : i32
    %3 = arith.muli %2, %arg1 : i32
    %4 = arith.addi %0, %3 : i32
    %c0_i32_0 = arith.constant 0 : i32
    %c0_i32_1 = arith.constant 0 : i32
    %c0_i32_2 = arith.constant 0 : i32
    return %4, %c0_i32_0, %c0_i32_1 : i32, i32, i32
  }
  func.func @transform_1(%arg0: i32, %arg1: i32) -> (i32, i32, i32) {
    %c0_i32 = arith.constant 0 : i32
    %0 = arith.muli %arg0, %c0_i32 : i32
    %c2_i32 = arith.constant 2 : i32
    %1 = arith.muli %c2_i32, %arg0 : i32
    %c1_i32 = arith.constant 1 : i32
    %2 = arith.subi %c1_i32, %1 : i32
    %3 = arith.muli %2, %arg1 : i32
    %4 = arith.addi %0, %3 : i32
    %c0_i32_0 = arith.constant 0 : i32
    %c0_i32_1 = arith.constant 0 : i32
    %c0_i32_2 = arith.constant 0 : i32
    return %4, %c0_i32_0, %c0_i32_1 : i32, i32, i32
  }
  func.func @transform_2(%arg0: i32, %arg1: i32) -> (i32, i32, i32) {
    %c0_i32 = arith.constant 0 : i32
    %c0_i32_0 = arith.constant 0 : i32
    %c0_i32_1 = arith.constant 0 : i32
    return %arg0, %c0_i32, %c0_i32_0 : i32, i32, i32
  }
  func.func @transform_3(%arg0: i32, %arg1: i32) -> (i32, i32, i32) {
    %c0_i32 = arith.constant 0 : i32
    %c0_i32_0 = arith.constant 0 : i32
    %c0_i32_1 = arith.constant 0 : i32
    return %arg0, %c0_i32, %c0_i32_0 : i32, i32, i32
  }
  func.func @transform_4(%arg0: i32, %arg1: i32) -> (i32, i32, i32) {
    %c0_i32 = arith.constant 0 : i32
    %c0_i32_0 = arith.constant 0 : i32
    %c0_i32_1 = arith.constant 0 : i32
    return %arg0, %c0_i32, %c0_i32_0 : i32, i32, i32
  }
  func.func @transform_5(%arg0: i32, %arg1: i32) -> (i32, i32, i32) {
    %c0_i32 = arith.constant 0 : i32
    %0 = arith.muli %arg0, %c0_i32 : i32
    %c2_i32 = arith.constant 2 : i32
    %1 = arith.muli %c2_i32, %arg0 : i32
    %c1_i32 = arith.constant 1 : i32
    %2 = arith.subi %c1_i32, %1 : i32
    %3 = arith.muli %2, %arg1 : i32
    %4 = arith.addi %0, %3 : i32
    %c0_i32_0 = arith.constant 0 : i32
    %c0_i32_1 = arith.constant 0 : i32
    return %4, %c0_i32_0, %arg0 : i32, i32, i32
  }
  func.func @transform_6(%arg0: i32, %arg1: i32) -> (i32, i32, i32) {
    %c0_i32 = arith.constant 0 : i32
    %c0_i32_0 = arith.constant 0 : i32
    %c0_i32_1 = arith.constant 0 : i32
    return %arg0, %c0_i32, %c0_i32_0 : i32, i32, i32
  }
  func.func @transform_7(%arg0: i32, %arg1: i32) -> (i32, i32, i32) {
    %c0_i32 = arith.constant 0 : i32
    %c0_i32_0 = arith.constant 0 : i32
    %c0_i32_1 = arith.constant 0 : i32
    return %arg0, %c0_i32, %c0_i32_0 : i32, i32, i32
  }
}

</mosaic_0001>

<llo_original>
// kernel: tpu_custom_call.1
$region0: #{tpu_custom_call.1}
  #allocation0 [shape = 'u32[]', space=smem, size = 0x4, offset = 0x4, fixed_abs, tag = 'smem constant byte address 0x4 - core index']
  #allocation1 [shape = 'u32[144,128]{1,0:T(1,128)}', space=vmem, size = 0x12000, scoped, tag = 'internal scratch']
  #allocation2 [shape = 'f32[16,128]{1,0:T(8,128)}', space=vmem, size = 0x2000, scoped, tag = 'scratch operand']
  #allocation3 [shape = 'f32[16,128]{1,0:T(8,128)}', space=vmem, size = 0x2000, scoped, tag = 'scratch operand']
  %s0 = inlined_call_operand.vmem [shape: bf16[8,16,128], index: 0, kind: input, shape index: {}]
  %s1 = inlined_call_operand.vmem [shape: f32[8,16,1], index: 1, kind: input, shape index: {}]
  %s2 = inlined_call_operand.hbm [shape: bf16[2,128,512], index: 2, kind: input, shape index: {}]
  %s3 = inlined_call_operand.hbm [shape: bf16[2,128,512], index: 3, kind: input, shape index: {}]
  %s4 = inlined_call_operand.vmem [shape: f32[2,1,512], index: 4, kind: input, shape index: {}]
  %s5 = inlined_call_operand.hbm [shape: bf16[8,16,256], index: 5, kind: output, shape index: {0}]
  %s6 = inlined_call_operand.hbm [shape: f32[2,16,128], index: 6, kind: output, shape index: {1}]
  %s7 = inlined_call_operand.hbm [shape: f32[2,16,128], index: 7, kind: output, shape index: {2}]
  %8 = xla_tuple %s5, %s6, %s7
  %s9 = sld [smem:[#allocation0]]
  $region85: #{tpu_custom_call.1} parent=0
    _
  %s11 = ssub.s32 1, %s9
  %s12 = scalar_select 0, %s11, %s9
  $region1: #{tpu_custom_call.1} parent=0
    #allocation4 [shape = 'u8[262144]{0}', space=vmem, size = 0x40000, scoped, tag = 'input window, operand 2']
    #allocation5 [shape = 's32[2]{0}', space=sflag, size = 0x8, scoped, tag = 'scoped memory for tpu_custom_call.1']
    #allocation6 [shape = 's32[2]{0}', space=sflag, size = 0x8, scoped, tag = 'scoped memory for tpu_custom_call.1']
    #allocation7 [shape = 'u8[262144]{0}', space=vmem, size = 0x40000, scoped, tag = 'input window, operand 3']
    #allocation8 [shape = 's32[2]{0}', space=sflag, size = 0x8, scoped, tag = 'scoped memory for tpu_custom_call.1']
    #allocation9 [shape = 'u8[65536]{0}', space=vmem, size = 0x10000, scoped, tag = 'output window, operand 0']
    #allocation10 [shape = 'u8[16384]{0}', space=vmem, size = 0x4000, scoped, tag = 'output window, operand 1']
    #allocation11 [shape = 's32[2]{0}', space=sflag, size = 0x8, scoped, tag = 'scoped memory for tpu_custom_call.1']
    #allocation12 [shape = 'u8[16384]{0}', space=vmem, size = 0x4000, scoped, tag = 'output window, operand 2']
    %13 = vsyncpa [#allocation5], 0
    %s14 = scalar_lea.sflag [#allocation5], 1
    %15 = vsyncpa %s14, 0
    %16 = vsyncpa [#allocation8], 0
    %s17 = scalar_lea.sflag [#allocation8], 1
    %18 = vsyncpa %s17, 0
    %19 = vsyncpa [#allocation6], 0
    %s20 = scalar_lea.sflag [#allocation6], 1
    %21 = vsyncpa %s20, 0
    %22 = vsyncpa [#allocation11], 0
    %s23 = scalar_lea.sflag [#allocation11], 1
    %24 = vsyncpa %s23, 0
    loop: start=0, step=1, limit=4
    $region2: #{tpu_custom_call.1} parent=1 // loop_pre_header
      _
    $region3: #{tpu_custom_call.1} parent=1 // loop_header
      %s26 = sphi 0, %s30
      %p27 = scmp.ge.s32.totalorder %s26, 4
      %s33 = sphi 0, %s45
      %s34 = sphi 0, %s41
      %s35 = sphi 0, %s33
      %s36 = sphi 0, %s34
      %s37 = sphi 0, %s35
      %s38 = sphi 0, %s36
      %s54 = sphi 0, %s56
      %s57 = sphi 0, %s54
      %s58 = sphi 0, %s57
      %s74 = sphi 0, %s58
      %s86 = sphi 0, %s88
      %s89 = sphi 0, %s86
      %s90 = sphi 0, %s89
      %s106 = sphi 0, %s90
      %s112 = sphi 0, %s114
      %s115 = sphi 0, %s112
      %s116 = sphi 0, %s115
      %s132 = sphi 0, %s116
      %s138 = sphi 0, %s140
      %s141 = sphi 0, %s138
      %s142 = sphi 0, %s141
      %s158 = sphi 0, %s142
      %s164 = sphi 0, %s166
      %s167 = sphi 0, %s164
      %s168 = sphi 0, %s167
      %s184 = sphi 0, %s168
      %s198 = sphi 0, %s200
      %s201 = sphi 0, %s198
      %s202 = sphi 0, %s201
      %s218 = sphi 0, %s202
      %s224 = sphi 0, %s226
      %s227 = sphi 0, %s224
      %s228 = sphi 0, %s227
      %s244 = sphi 0, %s228
      %s250 = sphi 0, %s252
      %s253 = sphi 0, %s250
      %s254 = sphi 0, %s253
      %s270 = sphi 0, %s254
    $region4: #{tpu_custom_call.1} parent=1 // loop_header_branch
      %29 = sbr.rel (%p27) target = $region8
    $region5: #{tpu_custom_call.1} parent=1 // loop_body
      %s31 = ssub.s32 %s26, 1
      %s32 = ssub.s32 %s26, 2
      %s39 = sadd.s32 1, %s34
      %p40 = scmp.ge.s32.totalorder %s39, 1
      %s41 = scalar_select %p40, 0, %s39
      %s42 = sadd.s32 1, %s33
      %s43 = scalar_select %p40, %s42, %s33
      %p44 = scmp.ge.s32.totalorder %s43, 2
      %s45 = scalar_select %p44, 0, %s43
      %s46 = smul.u32 %s33, 2
      %s47 = ssub.s32 1, %s46
      %s48 = smul.u32 %s47, %s34
      %s49 = smul.u32 %s45, 2
      %s50 = ssub.s32 1, %s49
      %s51 = smul.u32 %s50, %s41
      %s52 = ssub.s32 %s48, %s51
      %p53 = scmp.eq.s32.totalorder %s52, 0
      %s55 = sadd.s32 %s54, 1
      %s56 = scalar_select %p53, %s54, %s55
      %p59 = pneg %p53
      %p60 = scmp.eq.s32.totalorder %s26, 1
      %p61 = por %p59, %p60
      %p62 = scmp.ne.s32.totalorder %s54, %s57
      %p63 = scmp.eq.s32.totalorder %s26, 0
      %p64 = por %p62, %p63
      %p65 = scmp.ne.s32.totalorder %s54, %s57
      %p66 = scmp.eq.s32.totalorder %s31, 1
      %p67 = por %p65, %p66
      %p68 = scmp.ne.s32.totalorder %s57, %s58
      %p69 = scmp.eq.s32.totalorder %s31, 0
      %p70 = por %p68, %p69
      %p71 = scmp.ne.s32.totalorder %s57, %s58
      %p72 = scmp.eq.s32.totalorder %s32, 1
      %p73 = por %p71, %p72
      %p75 = scmp.ne.s32.totalorder %s58, %s74
      %p76 = scmp.eq.s32.totalorder %s32, 0
      %p77 = por %p75, %p76
      %s78 = smul.u32 %s33, 2
      %s79 = ssub.s32 1, %s78
      %s80 = smul.u32 %s79, %s34
      %s81 = smul.u32 %s45, 2
      %s82 = ssub.s32 1, %s81
      %s83 = smul.u32 %s82, %s41
      %s84 = ssub.s32 %s80, %s83
      %p85 = scmp.eq.s32.totalorder %s84, 0
      %s87 = sadd.s32 %s86, 1
      %s88 = scalar_select %p85, %s86, %s87
      %p91 = pneg %p85
      %p92 = scmp.eq.s32.totalorder %s26, 1
      %p93 = por %p91, %p92
      %p94 = scmp.ne.s32.totalorder %s86, %s89
      %p95 = scmp.eq.s32.totalorder %s26, 0
      %p96 = por %p94, %p95
      %p97 = scmp.ne.s32.totalorder %s86, %s89
      %p98 = scmp.eq.s32.totalorder %s31, 1
      %p99 = por %p97, %p98
      %p100 = scmp.ne.s32.totalorder %s89, %s90
      %p101 = scmp.eq.s32.totalorder %s31, 0
      %p102 = por %p100, %p101
      %p103 = scmp.ne.s32.totalorder %s89, %s90
      %p104 = scmp.eq.s32.totalorder %s32, 1
      %p105 = por %p103, %p104
      %p107 = scmp.ne.s32.totalorder %s90, %s106
      %p108 = scmp.eq.s32.totalorder %s32, 0
      %p109 = por %p107, %p108
      %s110 = ssub.s32 %s33, %s45
      %p111 = scmp.eq.s32.totalorder %s110, 0
      %s113 = sadd.s32 %s112, 1
      %s114 = scalar_select %p111, %s112, %s113
      %p117 = pneg %p111
      %p118 = scmp.eq.s32.totalorder %s26, 1
      %p119 = por %p117, %p118
      %p120 = scmp.ne.s32.totalorder %s112, %s115
      %p121 = scmp.eq.s32.totalorder %s26, 0
      %p122 = por %p120, %p121
      %p123 = scmp.ne.s32.totalorder %s112, %s115
      %p124 = scmp.eq.s32.totalorder %s31, 1
      %p125 = por %p123, %p124
      %p126 = scmp.ne.s32.totalorder %s115, %s116
      %p127 = scmp.eq.s32.totalorder %s31, 0
      %p128 = por %p126, %p127
      %p129 = scmp.ne.s32.totalorder %s115, %s116
      %p130 = scmp.eq.s32.totalorder %s32, 1
      %p131 = por %p129, %p130
      %p133 = scmp.ne.s32.totalorder %s116, %s132
      %p134 = scmp.eq.s32.totalorder %s32, 0
      %p135 = por %p133, %p134
      %s136 = ssub.s32 %s33, %s45
      %p137 = scmp.eq.s32.totalorder %s136, 0
      %s139 = sadd.s32 %s138, 1
      %s140 = scalar_select %p137, %s138, %s139
      %p143 = pneg %p137
      %p144 = scmp.eq.s32.totalorder %s26, 1
      %p145 = por %p143, %p144
      %p146 = scmp.ne.s32.totalorder %s138, %s141
      %p147 = scmp.eq.s32.totalorder %s26, 0
      %p148 = por %p146, %p147
      %p149 = scmp.ne.s32.totalorder %s138, %s141
      %p150 = scmp.eq.s32.totalorder %s31, 1
      %p151 = por %p149, %p150
      %p152 = scmp.ne.s32.totalorder %s141, %s142
      %p153 = scmp.eq.s32.totalorder %s31, 0
      %p154 = por %p152, %p153
      %p155 = scmp.ne.s32.totalorder %s141, %s142
      %p156 = scmp.eq.s32.totalorder %s32, 1
      %p157 = por %p155, %p156
      %p159 = scmp.ne.s32.totalorder %s142, %s158
      %p160 = scmp.eq.s32.totalorder %s32, 0
      %p161 = por %p159, %p160
      %s162 = ssub.s32 %s33, %s45
      %p163 = scmp.eq.s32.totalorder %s162, 0
      %s165 = sadd.s32 %s164, 1
      %s166 = scalar_select %p163, %s164, %s165
      %p169 = pneg %p163
      %p170 = scmp.eq.s32.totalorder %s26, 1
      %p171 = por %p169, %p170
      %p172 = scmp.ne.s32.totalorder %s164, %s167
      %p173 = scmp.eq.s32.totalorder %s26, 0
      %p174 = por %p172, %p173
      %p175 = scmp.ne.s32.totalorder %s164, %s167
      %p176 = scmp.eq.s32.totalorder %s31, 1
      %p177 = por %p175, %p176
      %p178 = scmp.ne.s32.totalorder %s167, %s168
      %p179 = scmp.eq.s32.totalorder %s31, 0
      %p180 = por %p178, %p179
      %p181 = scmp.ne.s32.totalorder %s167, %s168
      %p182 = scmp.eq.s32.totalorder %s32, 1
      %p183 = por %p181, %p182
      %p185 = scmp.ne.s32.totalorder %s168, %s184
      %p186 = scmp.eq.s32.totalorder %s32, 0
      %p187 = por %p185, %p186
      %s188 = smul.u32 %s33, 2
      %s189 = ssub.s32 1, %s188
      %s190 = smul.u32 %s189, %s34
      %s191 = smul.u32 %s45, 2
      %s192 = ssub.s32 1, %s191
      %s193 = smul.u32 %s192, %s41
      %s194 = ssub.s32 %s190, %s193
      %s195 = ssub.s32 %s33, %s45
      %s196 = sor.u32 %s194, %s195
      %p197 = scmp.eq.s32.totalorder %s196, 0
      %s199 = sadd.s32 %s198, 1
      %s200 = scalar_select %p197, %s198, %s199
      %p203 = pneg %p197
      %p204 = scmp.eq.s32.totalorder %s26, 1
      %p205 = por %p203, %p204
      %p206 = scmp.ne.s32.totalorder %s198, %s201
      %p207 = scmp.eq.s32.totalorder %s26, 0
      %p208 = por %p206, %p207
      %p209 = scmp.ne.s32.totalorder %s198, %s201
      %p210 = scmp.eq.s32.totalorder %s31, 1
      %p211 = por %p209, %p210
      %p212 = scmp.ne.s32.totalorder %s201, %s202
      %p213 = scmp.eq.s32.totalorder %s31, 0
      %p214 = por %p212, %p213
      %p215 = scmp.ne.s32.totalorder %s201, %s202
      %p216 = scmp.eq.s32.totalorder %s32, 1
      %p217 = por %p215, %p216
      %p219 = scmp.ne.s32.totalorder %s202, %s218
      %p220 = scmp.eq.s32.totalorder %s32, 0
      %p221 = por %p219, %p220
      %s222 = ssub.s32 %s33, %s45
      %p223 = scmp.eq.s32.totalorder %s222, 0
      %s225 = sadd.s32 %s224, 1
      %s226 = scalar_select %p223, %s224, %s225
      %p229 = pneg %p223
      %p230 = scmp.eq.s32.totalorder %s26, 1
      %p231 = por %p229, %p230
      %p232 = scmp.ne.s32.totalorder %s224, %s227
      %p233 = scmp.eq.s32.totalorder %s26, 0
      %p234 = por %p232, %p233
      %p235 = scmp.ne.s32.totalorder %s224, %s227
      %p236 = scmp.eq.s32.totalorder %s31, 1
      %p237 = por %p235, %p236
      %p238 = scmp.ne.s32.totalorder %s227, %s228
      %p239 = scmp.eq.s32.totalorder %s31, 0
      %p240 = por %p238, %p239
      %p241 = scmp.ne.s32.totalorder %s227, %s228
      %p242 = scmp.eq.s32.totalorder %s32, 1
      %p243 = por %p241, %p242
      %p245 = scmp.ne.s32.totalorder %s228, %s244
      %p246 = scmp.eq.s32.totalorder %s32, 0
      %p247 = por %p245, %p246
      %s248 = ssub.s32 %s33, %s45
      %p249 = scmp.eq.s32.totalorder %s248, 0
      %s251 = sadd.s32 %s250, 1
      %s252 = scalar_select %p249, %s250, %s251
      %p255 = pneg %p249
      %p256 = scmp.eq.s32.totalorder %s26, 1
      %p257 = por %p255, %p256
      %p258 = scmp.ne.s32.totalorder %s250, %s253
      %p259 = scmp.eq.s32.totalorder %s26, 0
      %p260 = por %p258, %p259
      %p261 = scmp.ne.s32.totalorder %s250, %s253
      %p262 = scmp.eq.s32.totalorder %s31, 1
      %p263 = por %p261, %p262
      %p264 = scmp.ne.s32.totalorder %s253, %s254
      %p265 = scmp.eq.s32.totalorder %s31, 0
      %p266 = por %p264, %p265
      %p267 = scmp.ne.s32.totalorder %s253, %s254
      %p268 = scmp.eq.s32.totalorder %s32, 1
      %p269 = por %p267, %p268
      %p271 = scmp.ne.s32.totalorder %s254, %s270
      %p272 = scmp.eq.s32.totalorder %s32, 0
      %p273 = por %p271, %p272
      %p274 = scmp.le.s32.totalorder 1, %s26
      %p275 = scmp.lt.s32.totalorder %s26, 3
      %p276 = pnand %p274, %p275
      %p277 = pneg %p276
      // Predicated region
      $region9: #{tpu_custom_call.1} parent=5 // pred_check
        _
      $region10: #{tpu_custom_call.1} parent=5 // pred_check_branch
        %279 = sbr.rel (%p276) target = $region12
      $region11: #{tpu_custom_call.1} parent=5 // pred_region
        %s280 = ssub.s32 %s26, 1
      $region12: #{tpu_custom_call.1} parent=5 // pred_fallthru
        _
      %p281 = scmp.lt.s32.totalorder %s26, 2
      // Predicated region
      $region13: #{tpu_custom_call.1} parent=5 // pred_check
        %p282 = pneg %p281
      $region14: #{tpu_custom_call.1} parent=5 // pred_check_branch
        %284 = sbr.rel (%p282) target = $region16
      $region15: #{tpu_custom_call.1} parent=5 // pred_region
        // Predicated region
        $region17: #{tpu_custom_call.1} parent=15 // pred_check
          %p285 = pneg %p64
        $region18: #{tpu_custom_call.1} parent=15 // pred_check_branch
          %287 = sbr.rel (%p285) target = $region20
        $region19: #{tpu_custom_call.1} parent=15 // pred_region
          %s288 = smul.u32 %s33, 2
          %s289 = ssub.s32 1, %s288
          %s290 = smul.u32 %s289, %s34
          %s291 = smul.u32 8, %s290
          %p292 = scmp.lt.s32.totalorder %s291, 7
          %s293 = scalar_select %p292, %s291, 7
          %s294 = smul.addr %s293, 2
          %s295 = smul.addr %s294, 4
          %s296 = scalar_lea.vmem %s0, %s295
          %s297 = smul.u32 %s33, 2
          %s298 = ssub.s32 1, %s297
          %s299 = smul.u32 %s298, %s34
          %s300 = smul.u32 8, %s299
        $region20: #{tpu_custom_call.1} parent=15 // pred_fallthru
          _
        // Predicated region
        $region21: #{tpu_custom_call.1} parent=15 // pred_check
          %p301 = pneg %p96
        $region22: #{tpu_custom_call.1} parent=15 // pred_check_branch
          %303 = sbr.rel (%p301) target = $region24
        $region23: #{tpu_custom_call.1} parent=15 // pred_region
          %s304 = smul.u32 %s33, 2
          %s305 = ssub.s32 1, %s304
          %s306 = smul.u32 %s305, %s34
          %s307 = smul.u32 8, %s306
          %p308 = scmp.lt.s32.totalorder %s307, 7
          %s309 = scalar_select %p308, %s307, 7
          %s310 = smul.addr %s309, 2
          %s311 = smul.addr %s310, 8
          %s312 = scalar_lea.vmem %s1, %s311
          %s313 = smul.u32 %s33, 2
          %s314 = ssub.s32 1, %s313
          %s315 = smul.u32 %s314, %s34
          %s316 = smul.u32 8, %s315
        $region24: #{tpu_custom_call.1} parent=15 // pred_fallthru
          _
        // Predicated region
        $region25: #{tpu_custom_call.1} parent=15 // pred_check
          %p317 = pneg %p122
        $region26: #{tpu_custom_call.1} parent=15 // pred_check_branch
          %319 = sbr.rel (%p317) target = $region28
        $region27: #{tpu_custom_call.1} parent=15 // pred_region
          %s320 = sand.u32 %s112, 1
          %s321 = scalar_lea.sflag [#allocation5], %s320
          %s322 = sand.u32 %s112, 1
          %s323 = smul.addr %s322, 256
          %s324 = scalar_lea.vmem [#allocation4], %s323
          %s326 = ssub.s32 4096, 4096
          %327 = vsyncadd %s321, %s326
          %s328 = smul.addr %s33, 64
          %s329 = smul.addr %s328, 64
          %s330 = scalar_lea.hbm %s2, %s329
          %s331 = sshll.u32 %s324, 4
          %s332 = int_to_ptr.vmem [resolvable:$true] %s331
          %337 = dma.hbm_to_vmem [thread:$0]  %s330, 4096, %s332, %s321, 256, 256, 16
        $region28: #{tpu_custom_call.1} parent=15 // pred_fallthru
          _
        // Predicated region
        $region29: #{tpu_custom_call.1} parent=15 // pred_check
          %p338 = pneg %p148
        $region30: #{tpu_custom_call.1} parent=15 // pred_check_branch
          %340 = sbr.rel (%p338) target = $region32
        $region31: #{tpu_custom_call.1} parent=15 // pred_region
          %s341 = sand.u32 %s138, 1
          %s342 = scalar_lea.sflag [#allocation8], %s341
          %s343 = sand.u32 %s138, 1
          %s344 = smul.addr %s343, 256
          %s345 = scalar_lea.vmem [#allocation7], %s344
          %s347 = ssub.s32 4096, 4096
          %348 = vsyncadd %s342, %s347
          %s349 = smul.addr %s33, 64
          %s350 = smul.addr %s349, 64
          %s351 = scalar_lea.hbm %s3, %s350
          %s352 = sshll.u32 %s345, 4
          %s353 = int_to_ptr.vmem [resolvable:$true] %s352
          %358 = dma.hbm_to_vmem [thread:$0]  %s351, 4096, %s353, %s342, 256, 256, 16
        $region32: #{tpu_custom_call.1} parent=15 // pred_fallthru
          _
        // Predicated region
        $region33: #{tpu_custom_call.1} parent=15 // pred_check
          %p359 = pneg %p174
        $region34: #{tpu_custom_call.1} parent=15 // pred_check_branch
          %361 = sbr.rel (%p359) target = $region36
        $region35: #{tpu_custom_call.1} parent=15 // pred_region
          %p362 = scmp.lt.s32.totalorder %s33, 1
          %s363 = scalar_select %p362, %s33, 1
          %s364 = smul.addr %s363, 4
          %s365 = scalar_lea.vmem %s4, %s364
        $region36: #{tpu_custom_call.1} parent=15 // pred_fallthru
          _
      $region16: #{tpu_custom_call.1} parent=5 // pred_fallthru
        _
      %p366 = scmp.le.s32.totalorder 1, %s26
      %p367 = scmp.lt.s32.totalorder %s26, 3
      %p368 = pnand %p366, %p367
      %p369 = pneg %p368
      // Predicated region
      $region37: #{tpu_custom_call.1} parent=5 // pred_check
        _
      $region38: #{tpu_custom_call.1} parent=5 // pred_check_branch
        %371 = sbr.rel (%p368) target = $region40
      $region39: #{tpu_custom_call.1} parent=5 // pred_region
        %s372 = ssub.s32 %s26, 1
        %s373 = sand.u32 %s115, 1
        %s374 = scalar_lea.sflag [#allocation5], %s373
        %s375 = sand.u32 %s115, 1
        %s376 = smul.addr %s375, 256
        %s377 = scalar_lea.vmem [#allocation4], %s376
        // Predicated region
        $region41: #{tpu_custom_call.1} parent=39 // pred_check
          %p378 = pneg %p128
        $region42: #{tpu_custom_call.1} parent=39 // pred_check_branch
          %380 = sbr.rel (%p378) target = $region44
        $region43: #{tpu_custom_call.1} parent=39 // pred_region
          %381 = dma.done %s374, 4096
        $region44: #{tpu_custom_call.1} parent=39 // pred_fallthru
          _
        %s382 = sand.u32 %s141, 1
        %s383 = scalar_lea.sflag [#allocation8], %s382
        %s384 = sand.u32 %s141, 1
        %s385 = smul.addr %s384, 256
        %s386 = scalar_lea.vmem [#allocation7], %s385
        // Predicated region
        $region45: #{tpu_custom_call.1} parent=39 // pred_check
          %p387 = pneg %p154
        $region46: #{tpu_custom_call.1} parent=39 // pred_check_branch
          %389 = sbr.rel (%p387) target = $region48
        $region47: #{tpu_custom_call.1} parent=39 // pred_region
          %390 = dma.done %s383, 4096
        $region48: #{tpu_custom_call.1} parent=39 // pred_fallthru
          _
        %s391 = smul.u32 %s35, 2
        %s392 = ssub.s32 1, %s391
        %s393 = smul.u32 %s392, %s36
        %s394 = smul.u32 8, %s393
        %p395 = scmp.lt.s32.totalorder %s394, 7
        %s396 = scalar_select %p395, %s394, 7
        %s397 = smul.addr %s396, 2
        %s398 = smul.addr %s397, 4
        %s399 = scalar_lea.vmem %s0, %s398
        %p400 = pneg %p70
        %p401 = pneg %p67
        %s402 = smul.u32 %s35, 2
        %s403 = ssub.s32 1, %s402
        %s404 = smul.u32 %s403, %s36
        %s405 = smul.u32 8, %s404
        %p406 = scmp.lt.s32.totalorder %s405, 7
        %s407 = scalar_select %p406, %s405, 7
        %s408 = smul.addr %s407, 2
        %s409 = smul.addr %s408, 8
        %s410 = scalar_lea.vmem %s1, %s409
        %p411 = pneg %p102
        %p412 = pneg %p99
        %s413 = sand.u32 %s115, 1
        %s414 = scalar_lea.sflag [#allocation5], %s413
        %s415 = sand.u32 %s115, 1
        %s416 = smul.addr %s415, 256
        %s417 = scalar_lea.vmem [#allocation4], %s416
        %p418 = pneg %p128
        %p419 = pneg %p125
        %s420 = sand.u32 %s141, 1
        %s421 = scalar_lea.sflag [#allocation8], %s420
        %s422 = sand.u32 %s141, 1
        %s423 = smul.addr %s422, 256
        %s424 = scalar_lea.vmem [#allocation7], %s423
        %p425 = pneg %p154
        %p426 = pneg %p151
        %p427 = scmp.lt.s32.totalorder %s35, 1
        %s428 = scalar_select %p427, %s35, 1
        %s429 = smul.addr %s428, 4
        %s430 = scalar_lea.vmem %s4, %s429
        %p431 = pneg %p180
        %p432 = pneg %p177
        %p433 = pneg %p214
        %p434 = pneg %p211
        %s435 = sand.u32 %s201, 1
        %s436 = scalar_lea.sflag [#allocation6], %s435
        %s437 = sand.u32 %s201, 1
        %s438 = smul.addr %s437, 64
        %s439 = scalar_lea.vmem [#allocation9], %s438
        %p440 = pneg %p240
        %p441 = pneg %p237
        %s442 = sand.u32 %s31, 1
        %s443 = scalar_lea.sflag [#allocation11], %s442
        %s444 = sand.u32 %s227, 1
        %s445 = smul.addr %s444, 16
        %s446 = scalar_lea.vmem [#allocation10], %s445
        %p447 = pneg %p266
        %p448 = pneg %p263
        %s449 = sand.u32 %s31, 1
        %s450 = scalar_lea.sflag [#allocation11], %s449
        %s451 = sand.u32 %s253, 1
        %s452 = smul.addr %s451, 16
        %s453 = scalar_lea.vmem [#allocation12], %s452
        %s454 = smul.u32 %s35, 2
        %s455 = ssub.s32 1, %s454
        %s456 = smul.u32 %s455, %s36
        %s457 = smul.u32 8, %s456
        %p458 = scmp.lt.s32.totalorder %s457, 7
        %s459 = scalar_select %p458, %s457, 7
        %s460 = smul.addr %s459, 2
        %s461 = smul.addr %s460, 4
        %s462 = scalar_lea.vmem %s0, %s461
        %s463 = smul.u32 %s35, 2
        %s464 = ssub.s32 1, %s463
        %s465 = smul.u32 %s464, %s36
        %s466 = smul.u32 8, %s465
        %s467 = smul.u32 %s35, 2
        %s468 = ssub.s32 1, %s467
        %s469 = smul.u32 %s468, %s36
        %s470 = smul.u32 8, %s469
        %p471 = scmp.lt.s32.totalorder %s470, 7
        %s472 = scalar_select %p471, %s470, 7
        %s473 = smul.addr %s472, 2
        %s474 = smul.addr %s473, 8
        %s475 = scalar_lea.vmem %s1, %s474
        %s476 = smul.u32 %s35, 2
        %s477 = ssub.s32 1, %s476
        %s478 = smul.u32 %s477, %s36
        %s479 = smul.u32 8, %s478
        %p480 = scmp.lt.s32.totalorder %s35, 1
        %s481 = scalar_select %p480, %s35, 1
        %s482 = smul.addr %s481, 4
        %s483 = scalar_lea.vmem %s4, %s482
        %s484 = smul.u32 %s35, 2
        %s485 = ssub.s32 1, %s484
        %s486 = smul.u32 %s485, %s36
        %s487 = smul.u32 8, %s486
        %p489 = scmp.eq.s32.totalorder %s36, 0
        // Predicated region
        $region49: #{tpu_custom_call.1} parent=39 // pred_check
          %p490 = pneg %p489
        $region50: #{tpu_custom_call.1} parent=39 // pred_check_branch
          %492 = sbr.rel (%p490) target = $region52
        $region51: #{tpu_custom_call.1} parent=39 // pred_region
          %493 = vst [vmem:[#allocation2] sm:$0xff] 0.0
          %494 = vst [vmem:[#allocation2 + $0x8] sm:$0xff] 0.0
          %495 = vst [vmem:[#allocation3] sm:$0xff] 0.0
          %496 = vst [vmem:[#allocation3 + $0x8] sm:$0xff] 0.0
        $region52: #{tpu_custom_call.1} parent=39 // pred_fallthru
          _
        %v497 = vld [vmem:[%s377] sm:$0xff]
        %v498 = vld [vmem:[%s377 + $0x8] sm:$0xff]
        %v499 = vld [vmem:[%s377 + $0x10] sm:$0xff]
        %v500 = vld [vmem:[%s377 + $0x18] sm:$0xff]
        %v501 = vld [vmem:[%s377 + $0x20] sm:$0xff]
        %v502 = vld [vmem:[%s377 + $0x28] sm:$0xff]
        %v503 = vld [vmem:[%s377 + $0x30] sm:$0xff]
        %v504 = vld [vmem:[%s377 + $0x38] sm:$0xff]
        %v505 = vld [vmem:[%s377 + $0x40] sm:$0xff]
        %v506 = vld [vmem:[%s377 + $0x48] sm:$0xff]
        %v507 = vld [vmem:[%s377 + $0x50] sm:$0xff]
        %v508 = vld [vmem:[%s377 + $0x58] sm:$0xff]
        %v509 = vld [vmem:[%s377 + $0x60] sm:$0xff]
        %v510 = vld [vmem:[%s377 + $0x68] sm:$0xff]
        %v511 = vld [vmem:[%s377 + $0x70] sm:$0xff]
        %v512 = vld [vmem:[%s377 + $0x78] sm:$0xff]
        %v513 = vld [vmem:[%s377 + $0x80] sm:$0xff]
        %v514 = vld [vmem:[%s377 + $0x88] sm:$0xff]
        %v515 = vld [vmem:[%s377 + $0x90] sm:$0xff]
        %v516 = vld [vmem:[%s377 + $0x98] sm:$0xff]
        %v517 = vld [vmem:[%s377 + $0xa0] sm:$0xff]
        %v518 = vld [vmem:[%s377 + $0xa8] sm:$0xff]
        %v519 = vld [vmem:[%s377 + $0xb0] sm:$0xff]
        %v520 = vld [vmem:[%s377 + $0xb8] sm:$0xff]
        %v521 = vld [vmem:[%s377 + $0xc0] sm:$0xff]
        %v522 = vld [vmem:[%s377 + $0xc8] sm:$0xff]
        %v523 = vld [vmem:[%s377 + $0xd0] sm:$0xff]
        %v524 = vld [vmem:[%s377 + $0xd8] sm:$0xff]
        %v525 = vld [vmem:[%s377 + $0xe0] sm:$0xff]
        %v526 = vld [vmem:[%s377 + $0xe8] sm:$0xff]
        %v527 = vld [vmem:[%s377 + $0xf0] sm:$0xff]
        %v528 = vld [vmem:[%s377 + $0xf8] sm:$0xff]
        %v529 = vld [vmem:[%s386] sm:$0xff]
        %v530 = vld [vmem:[%s386 + $0x8] sm:$0xff]
        %v531 = vld [vmem:[%s386 + $0x10] sm:$0xff]
        %v532 = vld [vmem:[%s386 + $0x18] sm:$0xff]
        %v533 = vld [vmem:[%s386 + $0x20] sm:$0xff]
        %v534 = vld [vmem:[%s386 + $0x28] sm:$0xff]
        %v535 = vld [vmem:[%s386 + $0x30] sm:$0xff]
        %v536 = vld [vmem:[%s386 + $0x38] sm:$0xff]
        %v537 = vld [vmem:[%s386 + $0x40] sm:$0xff]
        %v538 = vld [vmem:[%s386 + $0x48] sm:$0xff]
        %v539 = vld [vmem:[%s386 + $0x50] sm:$0xff]
        %v540 = vld [vmem:[%s386 + $0x58] sm:$0xff]
        %v541 = vld [vmem:[%s386 + $0x60] sm:$0xff]
        %v542 = vld [vmem:[%s386 + $0x68] sm:$0xff]
        %v543 = vld [vmem:[%s386 + $0x70] sm:$0xff]
        %v544 = vld [vmem:[%s386 + $0x78] sm:$0xff]
        %v545 = vld [vmem:[%s386 + $0x80] sm:$0xff]
        %v546 = vld [vmem:[%s386 + $0x88] sm:$0xff]
        %v547 = vld [vmem:[%s386 + $0x90] sm:$0xff]
        %v548 = vld [vmem:[%s386 + $0x98] sm:$0xff]
        %v549 = vld [vmem:[%s386 + $0xa0] sm:$0xff]
        %v550 = vld [vmem:[%s386 + $0xa8] sm:$0xff]
        %v551 = vld [vmem:[%s386 + $0xb0] sm:$0xff]
        %v552 = vld [vmem:[%s386 + $0xb8] sm:$0xff]
        %v553 = vld [vmem:[%s386 + $0xc0] sm:$0xff]
        %v554 = vld [vmem:[%s386 + $0xc8] sm:$0xff]
        %v555 = vld [vmem:[%s386 + $0xd0] sm:$0xff]
        %v556 = vld [vmem:[%s386 + $0xd8] sm:$0xff]
        %v557 = vld [vmem:[%s386 + $0xe0] sm:$0xff]
        %v558 = vld [vmem:[%s386 + $0xe8] sm:$0xff]
        %v559 = vld [vmem:[%s386 + $0xf0] sm:$0xff]
        %v560 = vld [vmem:[%s386 + $0xf8] sm:$0xff]
        %v561 = vld [vmem:[%s483] sm:$0xf]
        %v562 = vld [vmem:[#allocation2] sm:$0xff]
        %v563 = vld [vmem:[#allocation2 + $0x8] sm:$0xff]
        %v564 = vld [vmem:[#allocation3] sm:$0xff]
        %v565 = vld [vmem:[#allocation3 + $0x8] sm:$0xff]
        %s566 = smul.u32 %s35, 7
        %s567 = smul.u32 %s566, 2
        %s568 = smul.addr %s567, 4
        %s569 = scalar_lea.vmem %s462, %s568
        %v570 = vld [vmem:[%s569] sm:$0xf]
        %v571 = vld [vmem:[%s569 + $0x4] sm:$0xf]
        %v572 = vpack.c.bf16 %v563, %v562
        %v605 = vunpack.c.l.b16 %v529
        %v606 = vunpack.c.h.b16 %v529
        %v607 = vunpack.c.l.b16 %v530
        %v608 = vunpack.c.h.b16 %v530
        %v609 = vunpack.c.l.b16 %v531
        %v610 = vunpack.c.h.b16 %v531
        %v611 = vunpack.c.l.b16 %v532
        %v612 = vunpack.c.h.b16 %v532
        %v613 = vunpack.c.l.b16 %v533
        %v614 = vunpack.c.h.b16 %v533
        %v615 = vunpack.c.l.b16 %v534
        %v616 = vunpack.c.h.b16 %v534
        %v617 = vunpack.c.l.b16 %v535
        %v618 = vunpack.c.h.b16 %v535
        %v619 = vunpack.c.l.b16 %v536
        %v620 = vunpack.c.h.b16 %v536
        %v621 = vunpack.c.l.b16 %v537
        %v622 = vunpack.c.h.b16 %v537
        %v623 = vunpack.c.l.b16 %v538
        %v624 = vunpack.c.h.b16 %v538
        %v625 = vunpack.c.l.b16 %v539
        %v626 = vunpack.c.h.b16 %v539
        %v627 = vunpack.c.l.b16 %v540
        %v628 = vunpack.c.h.b16 %v540
        %v629 = vunpack.c.l.b16 %v541
        %v630 = vunpack.c.h.b16 %v541
        %v631 = vunpack.c.l.b16 %v542
        %v632 = vunpack.c.h.b16 %v542
        %v633 = vunpack.c.l.b16 %v543
        %v634 = vunpack.c.h.b16 %v543
        %v635 = vunpack.c.l.b16 %v544
        %v636 = vunpack.c.h.b16 %v544
        %v637 = vunpack.c.l.b16 %v545
        %v638 = vunpack.c.h.b16 %v545
        %v639 = vunpack.c.l.b16 %v546
        %v640 = vunpack.c.h.b16 %v546
        %v641 = vunpack.c.l.b16 %v547
        %v642 = vunpack.c.h.b16 %v547
        %v643 = vunpack.c.l.b16 %v548
        %v644 = vunpack.c.h.b16 %v548
        %v645 = vunpack.c.l.b16 %v549
        %v646 = vunpack.c.h.b16 %v549
        %v647 = vunpack.c.l.b16 %v550
        %v648 = vunpack.c.h.b16 %v550
        %v649 = vunpack.c.l.b16 %v551
        %v650 = vunpack.c.h.b16 %v551
        %v651 = vunpack.c.l.b16 %v552
        %v652 = vunpack.c.h.b16 %v552
        %v653 = vunpack.c.l.b16 %v553
        %v654 = vunpack.c.h.b16 %v553
        %v655 = vunpack.c.l.b16 %v554
        %v656 = vunpack.c.h.b16 %v554
        %v657 = vunpack.c.l.b16 %v555
        %v658 = vunpack.c.h.b16 %v555
        %v659 = vunpack.c.l.b16 %v556
        %v660 = vunpack.c.h.b16 %v556
        %v661 = vunpack.c.l.b16 %v557
        %v662 = vunpack.c.h.b16 %v557
        %v663 = vunpack.c.l.b16 %v558
        %v664 = vunpack.c.h.b16 %v558
        %v665 = vunpack.c.l.b16 %v559
        %v666 = vunpack.c.h.b16 %v559
        %v667 = vunpack.c.l.b16 %v560
        %v668 = vunpack.c.h.b16 %v560
        %v669 = vpack.c.b16 %v609, %v605
        %v670 = vpack.c.b16 %v610, %v606
        %v671 = vpack.c.b16 %v611, %v607
        %v672 = vpack.c.b16 %v612, %v608
        %v673 = vpack.c.b16 %v617, %v613
        %v674 = vpack.c.b16 %v618, %v614
        %v675 = vpack.c.b16 %v619, %v615
        %v676 = vpack.c.b16 %v620, %v616
        %v677 = vpack.c.b16 %v625, %v621
        %v678 = vpack.c.b16 %v626, %v622
        %v679 = vpack.c.b16 %v627, %v623
        %v680 = vpack.c.b16 %v628, %v624
        %v681 = vpack.c.b16 %v633, %v629
        %v682 = vpack.c.b16 %v634, %v630
        %v683 = vpack.c.b16 %v635, %v631
        %v684 = vpack.c.b16 %v636, %v632
        %v685 = vpack.c.b16 %v641, %v637
        %v686 = vpack.c.b16 %v642, %v638
        %v687 = vpack.c.b16 %v643, %v639
        %v688 = vpack.c.b16 %v644, %v640
        %v689 = vpack.c.b16 %v649, %v645
        %v690 = vpack.c.b16 %v650, %v646
        %v691 = vpack.c.b16 %v651, %v647
        %v692 = vpack.c.b16 %v652, %v648
        %v693 = vpack.c.b16 %v657, %v653
        %v694 = vpack.c.b16 %v658, %v654
        %v695 = vpack.c.b16 %v659, %v655
        %v696 = vpack.c.b16 %v660, %v656
        %v697 = vpack.c.b16 %v665, %v661
        %v698 = vpack.c.b16 %v666, %v662
        %v699 = vpack.c.b16 %v667, %v663
        %v700 = vpack.c.b16 %v668, %v664
        %733 = vmatprep.subr.bf16.mxu0 %v670
        %734 = vmatpush1.bf16.msra.mxu0 %v669
        %735 = vmatprep.subr.bf16.mxu0 %v674
        %736 = vmatpush1.bf16.msra.mxu0 %v673
        %737 = vmatprep.subr.bf16.mxu0 %v678
        %738 = vmatpush1.bf16.msra.mxu0 %v677
        %739 = vmatprep.subr.bf16.mxu0 %v682
        %740 = vmatpush1.bf16.msra.mxu0 %v681
        %741 = vmatprep.subr.bf16.mxu0 %v686
        %742 = vmatpush1.bf16.msra.mxu0 %v685
        %743 = vmatprep.subr.bf16.mxu0 %v690
        %744 = vmatpush1.bf16.msra.mxu0 %v689
        %745 = vmatprep.subr.bf16.mxu0 %v694
        %746 = vmatpush1.bf16.msra.mxu0 %v693
        %747 = vmatprep.subr.bf16.mxu0 %v698
        %748 = vmatpush1.bf16.msra.mxu0 %v697
        %749 = vmatprep.subr.bf16.mxu0 0
        %750 = vmatpush1.bf16.msra.mxu0 0
        %751 = vmatprep.subr.bf16.mxu0 0
        %752 = vmatpush1.bf16.msra.mxu0 0
        %753 = vmatprep.subr.bf16.mxu0 0
        %754 = vmatpush1.bf16.msra.mxu0 0
        %755 = vmatprep.subr.bf16.mxu0 0
        %756 = vmatpush1.bf16.msra.mxu0 0
        %757 = vmatprep.subr.bf16.mxu0 0
        %758 = vmatpush1.bf16.msra.mxu0 0
        %759 = vmatprep.subr.bf16.mxu0 0
        %760 = vmatpush1.bf16.msra.mxu0 0
        %761 = vmatprep.subr.bf16.mxu0 0
        %762 = vmatpush1.bf16.msra.mxu0 0
        %763 = vmatprep.subr.bf16.mxu0 0
        %764 = vmatpush1.bf16.msra.mxu0 0
        %765 = vmatprep.mubr.bf16.mxu0 0
        %766 = vmatmul.mubr.bf16.gmra.mrb[0].mxu0 %v572
        %v767 = vpop.f32.mrb[0].mxu0
        %v768 = vadd.f32 0.0, %v767
        %v769 = vpop.f32.mrb[0].mxu0
        %v770 = vadd.f32 0.0, %v769
        %v771 = vpop.f32.mrb[0].mxu0
        %v772 = vadd.f32 0.0, %v771
        %v773 = vpop.f32.mrb[0].mxu0
        %v774 = vadd.f32 0.0, %v773
        %775 = vdwg.mxu0
        %776 = vmatprep.subr.bf16.mxu0 %v672
        %777 = vmatpush1.bf16.msra.mxu0 %v671
        %778 = vmatprep.subr.bf16.mxu0 %v676
        %779 = vmatpush1.bf16.msra.mxu0 %v675
        %780 = vmatprep.subr.bf16.mxu0 %v680
        %781 = vmatpush1.bf16.msra.mxu0 %v679
        %782 = vmatprep.subr.bf16.mxu0 %v684
        %783 = vmatpush1.bf16.msra.mxu0 %v683
        %784 = vmatprep.subr.bf16.mxu0 %v688
        %785 = vmatpush1.bf16.msra.mxu0 %v687
        %786 = vmatprep.subr.bf16.mxu0 %v692
        %787 = vmatpush1.bf16.msra.mxu0 %v691
        %788 = vmatprep.subr.bf16.mxu0 %v696
        %789 = vmatpush1.bf16.msra.mxu0 %v695
        %790 = vmatprep.subr.bf16.mxu0 %v700
        %791 = vmatpush1.bf16.msra.mxu0 %v699
        %792 = vmatprep.subr.bf16.mxu0 0
        %793 = vmatpush1.bf16.msra.mxu0 0
        %794 = vmatprep.subr.bf16.mxu0 0
        %795 = vmatpush1.bf16.msra.mxu0 0
        %796 = vmatprep.subr.bf16.mxu0 0
        %797 = vmatpush1.bf16.msra.mxu0 0
        %798 = vmatprep.subr.bf16.mxu0 0
        %799 = vmatpush1.bf16.msra.mxu0 0
        %800 = vmatprep.subr.bf16.mxu0 0
        %801 = vmatpush1.bf16.msra.mxu0 0
        %802 = vmatprep.subr.bf16.mxu0 0
        %803 = vmatpush1.bf16.msra.mxu0 0
        %804 = vmatprep.subr.bf16.mxu0 0
        %805 = vmatpush1.bf16.msra.mxu0 0
        %806 = vmatprep.subr.bf16.mxu0 0
        %807 = vmatpush1.bf16.msra.mxu0 0
        %808 = vmatprep.mubr.bf16.mxu0 0
        %809 = vmatmul.mubr.bf16.gmra.mrb[0].mxu0 %v572
        %v810 = vpop.f32.mrb[0].mxu0
        %v811 = vadd.f32 0.0, %v810
        %v812 = vpop.f32.mrb[0].mxu0
        %v813 = vadd.f32 0.0, %v812
        %v814 = vpop.f32.mrb[0].mxu0
        %v815 = vadd.f32 0.0, %v814
        %v816 = vpop.f32.mrb[0].mxu0
        %v817 = vadd.f32 0.0, %v816
        %818 = vdwg.mxu0
        %v821 = vunpack.c.l.b16 %v570
        %v822 = vunpack.c.l.b16 %v571
        %v823 = vpack.c.b16 %v822, %v821
        %v857 = vunpack.c.l.b16 %v497
        %v858 = vunpack.c.h.b16 %v497
        %v859 = vunpack.c.l.b16 %v498
        %v860 = vunpack.c.h.b16 %v498
        %v861 = vunpack.c.l.b16 %v499
        %v862 = vunpack.c.h.b16 %v499
        %v863 = vunpack.c.l.b16 %v500
        %v864 = vunpack.c.h.b16 %v500
        %v865 = vunpack.c.l.b16 %v501
        %v866 = vunpack.c.h.b16 %v501
        %v867 = vunpack.c.l.b16 %v502
        %v868 = vunpack.c.h.b16 %v502
        %v869 = vunpack.c.l.b16 %v503
        %v870 = vunpack.c.h.b16 %v503
        %v871 = vunpack.c.l.b16 %v504
        %v872 = vunpack.c.h.b16 %v504
        %v873 = vunpack.c.l.b16 %v505
        %v874 = vunpack.c.h.b16 %v505
        %v875 = vunpack.c.l.b16 %v506
        %v876 = vunpack.c.h.b16 %v506
        %v877 = vunpack.c.l.b16 %v507
        %v878 = vunpack.c.h.b16 %v507
        %v879 = vunpack.c.l.b16 %v508
        %v880 = vunpack.c.h.b16 %v508
        %v881 = vunpack.c.l.b16 %v509
        %v882 = vunpack.c.h.b16 %v509
        %v883 = vunpack.c.l.b16 %v510
        %v884 = vunpack.c.h.b16 %v510
        %v885 = vunpack.c.l.b16 %v511
        %v886 = vunpack.c.h.b16 %v511
        %v887 = vunpack.c.l.b16 %v512
        %v888 = vunpack.c.h.b16 %v512
        %v889 = vunpack.c.l.b16 %v513
        %v890 = vunpack.c.h.b16 %v513
        %v891 = vunpack.c.l.b16 %v514
        %v892 = vunpack.c.h.b16 %v514
        %v893 = vunpack.c.l.b16 %v515
        %v894 = vunpack.c.h.b16 %v515
        %v895 = vunpack.c.l.b16 %v516
        %v896 = vunpack.c.h.b16 %v516
        %v897 = vunpack.c.l.b16 %v517
        %v898 = vunpack.c.h.b16 %v517
        %v899 = vunpack.c.l.b16 %v518
        %v900 = vunpack.c.h.b16 %v518
        %v901 = vunpack.c.l.b16 %v519
        %v902 = vunpack.c.h.b16 %v519
        %v903 = vunpack.c.l.b16 %v520
        %v904 = vunpack.c.h.b16 %v520
        %v905 = vunpack.c.l.b16 %v521
        %v906 = vunpack.c.h.b16 %v521
        %v907 = vunpack.c.l.b16 %v522
        %v908 = vunpack.c.h.b16 %v522
        %v909 = vunpack.c.l.b16 %v523
        %v910 = vunpack.c.h.b16 %v523
        %v911 = vunpack.c.l.b16 %v524
        %v912 = vunpack.c.h.b16 %v524
        %v913 = vunpack.c.l.b16 %v525
        %v914 = vunpack.c.h.b16 %v525
        %v915 = vunpack.c.l.b16 %v526
        %v916 = vunpack.c.h.b16 %v526
        %v917 = vunpack.c.l.b16 %v527
        %v918 = vunpack.c.h.b16 %v527
        %v919 = vunpack.c.l.b16 %v528
        %v920 = vunpack.c.h.b16 %v528
        %v921 = vpack.c.b16 %v861, %v857
        %v922 = vpack.c.b16 %v862, %v858
        %v923 = vpack.c.b16 %v863, %v859
        %v924 = vpack.c.b16 %v864, %v860
        %v925 = vpack.c.b16 %v869, %v865
        %v926 = vpack.c.b16 %v870, %v866
        %v927 = vpack.c.b16 %v871, %v867
        %v928 = vpack.c.b16 %v872, %v868
        %v929 = vpack.c.b16 %v877, %v873
        %v930 = vpack.c.b16 %v878, %v874
        %v931 = vpack.c.b16 %v879, %v875
        %v932 = vpack.c.b16 %v880, %v876
        %v933 = vpack.c.b16 %v885, %v881
        %v934 = vpack.c.b16 %v886, %v882
        %v935 = vpack.c.b16 %v887, %v883
        %v936 = vpack.c.b16 %v888, %v884
        %v937 = vpack.c.b16 %v893, %v889
        %v938 = vpack.c.b16 %v894, %v890
        %v939 = vpack.c.b16 %v895, %v891
        %v940 = vpack.c.b16 %v896, %v892
        %v941 = vpack.c.b16 %v901, %v897
        %v942 = vpack.c.b16 %v902, %v898
        %v943 = vpack.c.b16 %v903, %v899
        %v944 = vpack.c.b16 %v904, %v900
        %v945 = vpack.c.b16 %v909, %v905
        %v946 = vpack.c.b16 %v910, %v906
        %v947 = vpack.c.b16 %v911, %v907
        %v948 = vpack.c.b16 %v912, %v908
        %v949 = vpack.c.b16 %v917, %v913
        %v950 = vpack.c.b16 %v918, %v914
        %v951 = vpack.c.b16 %v919, %v915
        %v952 = vpack.c.b16 %v920, %v916
        %985 = vmatprep.subr.bf16.mxu0 %v922
        %986 = vmatpush1.bf16.msra.mxu0 %v921
        %987 = vmatprep.subr.bf16.mxu0 %v926
        %988 = vmatpush1.bf16.msra.mxu0 %v925
        %989 = vmatprep.subr.bf16.mxu0 %v930
        %990 = vmatpush1.bf16.msra.mxu0 %v929
        %991 = vmatprep.subr.bf16.mxu0 %v934
        %992 = vmatpush1.bf16.msra.mxu0 %v933
        %993 = vmatprep.subr.bf16.mxu0 %v938
        %994 = vmatpush1.bf16.msra.mxu0 %v937
        %995 = vmatprep.subr.bf16.mxu0 %v942
        %996 = vmatpush1.bf16.msra.mxu0 %v941
        %997 = vmatprep.subr.bf16.mxu0 %v946
        %998 = vmatpush1.bf16.msra.mxu0 %v945
        %999 = vmatprep.subr.bf16.mxu0 %v950
        %1000 = vmatpush1.bf16.msra.mxu0 %v949
        %1001 = vmatprep.subr.bf16.mxu0 0
        %1002 = vmatpush1.bf16.msra.mxu0 0
        %1003 = vmatprep.subr.bf16.mxu0 0
        %1004 = vmatpush1.bf16.msra.mxu0 0
        %1005 = vmatprep.subr.bf16.mxu0 0
        %1006 = vmatpush1.bf16.msra.mxu0 0
        %1007 = vmatprep.subr.bf16.mxu0 0
        %1008 = vmatpush1.bf16.msra.mxu0 0
        %1009 = vmatprep.subr.bf16.mxu0 0
        %1010 = vmatpush1.bf16.msra.mxu0 0
        %1011 = vmatprep.subr.bf16.mxu0 0
        %1012 = vmatpush1.bf16.msra.mxu0 0
        %1013 = vmatprep.subr.bf16.mxu0 0
        %1014 = vmatpush1.bf16.msra.mxu0 0
        %1015 = vmatprep.subr.bf16.mxu0 0
        %1016 = vmatpush1.bf16.msra.mxu0 0
        %1017 = vmatprep.mubr.bf16.mxu0 0
        %1018 = vmatmul.mubr.bf16.gmra.mrb[0].mxu0 %v823
        %v1019 = vpop.f32.mrb[0].mxu0
        %v1020 = vadd.f32 %v768, %v1019
        %v1021 = vpop.f32.mrb[0].mxu0
        %v1022 = vadd.f32 %v770, %v1021
        %v1023 = vpop.f32.mrb[0].mxu0
        %v1024 = vadd.f32 %v772, %v1023
        %v1025 = vpop.f32.mrb[0].mxu0
        %v1026 = vadd.f32 %v774, %v1025
        %1027 = vdwg.mxu0
        %1028 = vmatprep.subr.bf16.mxu0 %v924
        %1029 = vmatpush1.bf16.msra.mxu0 %v923
        %1030 = vmatprep.subr.bf16.mxu0 %v928
        %1031 = vmatpush1.bf16.msra.mxu0 %v927
        %1032 = vmatprep.subr.bf16.mxu0 %v932
        %1033 = vmatpush1.bf16.msra.mxu0 %v931
        %1034 = vmatprep.subr.bf16.mxu0 %v936
        %1035 = vmatpush1.bf16.msra.mxu0 %v935
        %1036 = vmatprep.subr.bf16.mxu0 %v940
        %1037 = vmatpush1.bf16.msra.mxu0 %v939
        %1038 = vmatprep.subr.bf16.mxu0 %v944
        %1039 = vmatpush1.bf16.msra.mxu0 %v943
        %1040 = vmatprep.subr.bf16.mxu0 %v948
        %1041 = vmatpush1.bf16.msra.mxu0 %v947
        %1042 = vmatprep.subr.bf16.mxu0 %v952
        %1043 = vmatpush1.bf16.msra.mxu0 %v951
        %1044 = vmatprep.subr.bf16.mxu0 0
        %1045 = vmatpush1.bf16.msra.mxu0 0
        %1046 = vmatprep.subr.bf16.mxu0 0
        %1047 = vmatpush1.bf16.msra.mxu0 0
        %1048 = vmatprep.subr.bf16.mxu0 0
        %1049 = vmatpush1.bf16.msra.mxu0 0
        %1050 = vmatprep.subr.bf16.mxu0 0
        %1051 = vmatpush1.bf16.msra.mxu0 0
        %1052 = vmatprep.subr.bf16.mxu0 0
        %1053 = vmatpush1.bf16.msra.mxu0 0
        %1054 = vmatprep.subr.bf16.mxu0 0
        %1055 = vmatpush1.bf16.msra.mxu0 0
        %1056 = vmatprep.subr.bf16.mxu0 0
        %1057 = vmatpush1.bf16.msra.mxu0 0
        %1058 = vmatprep.subr.bf16.mxu0 0
        %1059 = vmatpush1.bf16.msra.mxu0 0
        %1060 = vmatprep.mubr.bf16.mxu0 0
        %1061 = vmatmul.mubr.bf16.gmra.mrb[0].mxu0 %v823
        %v1062 = vpop.f32.mrb[0].mxu0
        %v1063 = vadd.f32 %v811, %v1062
        %v1064 = vpop.f32.mrb[0].mxu0
        %v1065 = vadd.f32 %v813, %v1064
        %v1066 = vpop.f32.mrb[0].mxu0
        %v1067 = vadd.f32 %v815, %v1066
        %v1068 = vpop.f32.mrb[0].mxu0
        %v1069 = vadd.f32 %v817, %v1068
        %1070 = vdwg.mxu0
        %v1072 = vlaneseq
        %v1073 = vshrl.u32 %v1072, 7
        %v1074 = vsub.s32 0, %v1073
        %v1075 = vrot.slane %v561, %v1074
        %v1076 = vlaneseq
        %v1077 = vshrl.u32 %v1076, 7
        %v1078 = vsub.s32 1, %v1077
        %v1079 = vrot.slane %v561, %v1078
        %v1080 = vlaneseq
        %v1081 = vshrl.u32 %v1080, 7
        %v1082 = vsub.s32 2, %v1081
        %v1083 = vrot.slane %v561, %v1082
        %v1084 = vlaneseq
        %v1085 = vshrl.u32 %v1084, 7
        %v1086 = vsub.s32 3, %v1085
        %v1087 = vrot.slane %v561, %v1086
        %v1092 = vadd.f32 %v1020, %v1075
        %v1093 = vadd.f32 %v1022, %v1079
        %v1094 = vadd.f32 %v1063, %v1083
        %v1095 = vadd.f32 %v1065, %v1087
        %v1096 = vadd.f32 %v1024, %v1075
        %v1097 = vadd.f32 %v1026, %v1079
        %v1098 = vadd.f32 %v1067, %v1083
        %v1099 = vadd.f32 %v1069, %v1087
        %v1100 = vxor.u32 %v1092, 2147483648
        %v1101 = vxor.u32 %v1096, 2147483648
        %v1102 = vmul.f32 %v1100, 1.442695
        %v1103 = vpow.pop %v1102
        %v1104 = vmul.f32 %v1101, 1.442695
        %v1105 = vpow.pop %v1104
        %v1106 = vadd.f32 %v1103, 1.0
        %v1107 = vadd.f32 %v1105, 1.0
        %v1108 = vrcp.pop %v1106
        %v1109 = vmul.f32 1.0, %v1108
        %v1110 = vrcp.pop %v1107
        %v1111 = vmul.f32 1.0, %v1110
        %v1112 = vxor.u32 %v1093, 2147483648
        %v1113 = vxor.u32 %v1097, 2147483648
        %v1114 = vmul.f32 %v1112, 1.442695
        %v1115 = vpow.pop %v1114
        %v1116 = vmul.f32 %v1113, 1.442695
        %v1117 = vpow.pop %v1116
        %v1118 = vadd.f32 %v1115, 1.0
        %v1119 = vadd.f32 %v1117, 1.0
        %v1120 = vrcp.pop %v1118
        %v1121 = vmul.f32 1.0, %v1120
        %v1122 = vrcp.pop %v1119
        %v1123 = vmul.f32 1.0, %v1122
        %v1124 = vtanh.pop %v1094
        %v1125 = vtanh.pop %v1098
        %v1126 = vxor.u32 %v1095, 2147483648
        %v1127 = vxor.u32 %v1099, 2147483648
        %v1128 = vmul.f32 %v1126, 1.442695
        %v1129 = vpow.pop %v1128
        %v1130 = vmul.f32 %v1127, 1.442695
        %v1131 = vpow.pop %v1130
        %v1132 = vadd.f32 %v1129, 1.0
        %v1133 = vadd.f32 %v1131, 1.0
        %v1134 = vrcp.pop %v1132
        %v1135 = vmul.f32 1.0, %v1134
        %v1136 = vrcp.pop %v1133
        %v1137 = vmul.f32 1.0, %v1136
        %v1138 = vmul.f32 %v1121, %v564
        %v1139 = vmul.f32 %v1123, %v565
        %v1140 = vmul.f32 %v1109, %v1124
        %v1141 = vmul.f32 %v1111, %v1125
        %v1142 = vadd.f32 %v1138, %v1140
        %v1143 = vadd.f32 %v1139, %v1141
        %v1144 = vtanh.pop %v1142
        %v1145 = vtanh.pop %v1143
        %v1146 = vmul.f32 %v1135, %v1144
        %v1147 = vmul.f32 %v1137, %v1145
        %s1148 = smul.u32 %s566, 16
        %s1149 = scalar_lea.vmem %s475, %s1148
        %v1150 = vld [vmem:[%s1149] sm:$0xff]
        %v1151 = vld [vmem:[%s1149 + $0x8] sm:$0xff]
        %vm1152 = vcmp.gt.f32.partialorder %v1150, 0.0
        %vm1153 = vcmp.gt.f32.partialorder %v1151, 0.0
        %v1154 = vsel %vm1152, 1, 0
        %v1155 = vsel %vm1153, 1, 0
        %1156 = vset.pattern.permute.xlu0 0
        %1157 = vperm.xlu0 %1156, %v1154
        %v1158 = vpop.permute.xlu0 %1157
        %1159 = vset.pattern.permute.xlu0 0
        %1160 = vperm.xlu0 %1159, %v1155
        %v1161 = vpop.permute.xlu0 %1160
        %vm1162 = vcmp.eq.s32.totalorder %v1158, 1
        %vm1163 = vcmp.eq.s32.totalorder %v1161, 1
        %v1164 = vsel %vm1162, %v1146, %v562
        %v1165 = vsel %vm1163, %v1147, %v563
        %v1166 = vsel %vm1162, %v1142, %v564
        %v1167 = vsel %vm1163, %v1143, %v565
        %v1168 = vsel %vm1162, %v1146, 0.0
        %v1169 = vsel %vm1163, %v1147, 0.0
        %v1170 = vpack.c.bf16 %v1169, %v1168
        %v1172 = vunpack.c.l.b16 %v1170
        %v1173 = vunpack.c.h.b16 %v1170
        %v1174 = vpack.c.b16 %v1172, %v1172
        %v1175 = vpack.c.b16 %v1173, %v1173
        %s1178 = smul.addr %s567, 4
        %s1179 = scalar_lea.vmem %s439, %s1178 [#allocation9]
        %1180 = vst [vmem:[%s1179] sm:$0xf] %v1174
        %1181 = vst [vmem:[%s1179 + $0x4] sm:$0xf] %v1175
        %s1182 = smul.u32 %s35, 2
        %s1183 = ssub.s32 1, %s1182
        %s1184 = sadd.s32 %s566, %s1183
        %s1185 = smul.u32 %s1184, 2
        %s1186 = smul.addr %s1185, 4
        %s1187 = scalar_lea.vmem %s462, %s1186
        %v1188 = vld [vmem:[%s1187] sm:$0xf]
        %v1189 = vld [vmem:[%s1187 + $0x4] sm:$0xf]
        %v1190 = vpack.c.bf16 %v1165, %v1164
        %1191 = vmatprep.subr.bf16.mxu0 %v670
        %1192 = vmatpush1.bf16.msra.mxu0 %v669
        %1193 = vmatprep.subr.bf16.mxu0 %v674
        %1194 = vmatpush1.bf16.msra.mxu0 %v673
        %1195 = vmatprep.subr.bf16.mxu0 %v678
        %1196 = vmatpush1.bf16.msra.mxu0 %v677
        %1197 = vmatprep.subr.bf16.mxu0 %v682
        %1198 = vmatpush1.bf16.msra.mxu0 %v681
        %1199 = vmatprep.subr.bf16.mxu0 %v686
        %1200 = vmatpush1.bf16.msra.mxu0 %v685
        %1201 = vmatprep.subr.bf16.mxu0 %v690
        %1202 = vmatpush1.bf16.msra.mxu0 %v689
        %1203 = vmatprep.subr.bf16.mxu0 %v694
        %1204 = vmatpush1.bf16.msra.mxu0 %v693
        %1205 = vmatprep.subr.bf16.mxu0 %v698
        %1206 = vmatpush1.bf16.msra.mxu0 %v697
        %1207 = vmatprep.subr.bf16.mxu0 0
        %1208 = vmatpush1.bf16.msra.mxu0 0
        %1209 = vmatprep.subr.bf16.mxu0 0
        %1210 = vmatpush1.bf16.msra.mxu0 0
        %1211 = vmatprep.subr.bf16.mxu0 0
        %1212 = vmatpush1.bf16.msra.mxu0 0
        %1213 = vmatprep.subr.bf16.mxu0 0
        %1214 = vmatpush1.bf16.msra.mxu0 0
        %1215 = vmatprep.subr.bf16.mxu0 0
        %1216 = vmatpush1.bf16.msra.mxu0 0
        %1217 = vmatprep.subr.bf16.mxu0 0
        %1218 = vmatpush1.bf16.msra.mxu0 0
        %1219 = vmatprep.subr.bf16.mxu0 0
        %1220 = vmatpush1.bf16.msra.mxu0 0
        %1221 = vmatprep.subr.bf16.mxu0 0
        %1222 = vmatpush1.bf16.msra.mxu0 0
        %1223 = vmatprep.mubr.bf16.mxu0 0
        %1224 = vmatmul.mubr.bf16.gmra.mrb[0].mxu0 %v1190
        %v1225 = vpop.f32.mrb[0].mxu0
        %v1226 = vadd.f32 0.0, %v1225
        %v1227 = vpop.f32.mrb[0].mxu0
        %v1228 = vadd.f32 0.0, %v1227
        %v1229 = vpop.f32.mrb[0].mxu0
        %v1230 = vadd.f32 0.0, %v1229
        %v1231 = vpop.f32.mrb[0].mxu0
        %v1232 = vadd.f32 0.0, %v1231
        %1233 = vdwg.mxu0
        %1234 = vmatprep.subr.bf16.mxu0 %v672
        %1235 = vmatpush1.bf16.msra.mxu0 %v671
        %1236 = vmatprep.subr.bf16.mxu0 %v676
        %1237 = vmatpush1.bf16.msra.mxu0 %v675
        %1238 = vmatprep.subr.bf16.mxu0 %v680
        %1239 = vmatpush1.bf16.msra.mxu0 %v679
        %1240 = vmatprep.subr.bf16.mxu0 %v684
        %1241 = vmatpush1.bf16.msra.mxu0 %v683
        %1242 = vmatprep.subr.bf16.mxu0 %v688
        %1243 = vmatpush1.bf16.msra.mxu0 %v687
        %1244 = vmatprep.subr.bf16.mxu0 %v692
        %1245 = vmatpush1.bf16.msra.mxu0 %v691
        %1246 = vmatprep.subr.bf16.mxu0 %v696
        %1247 = vmatpush1.bf16.msra.mxu0 %v695
        %1248 = vmatprep.subr.bf16.mxu0 %v700
        %1249 = vmatpush1.bf16.msra.mxu0 %v699
        %1250 = vmatprep.subr.bf16.mxu0 0
        %1251 = vmatpush1.bf16.msra.mxu0 0
        %1252 = vmatprep.subr.bf16.mxu0 0
        %1253 = vmatpush1.bf16.msra.mxu0 0
        %1254 = vmatprep.subr.bf16.mxu0 0
        %1255 = vmatpush1.bf16.msra.mxu0 0
        %1256 = vmatprep.subr.bf16.mxu0 0
        %1257 = vmatpush1.bf16.msra.mxu0 0
        %1258 = vmatprep.subr.bf16.mxu0 0
        %1259 = vmatpush1.bf16.msra.mxu0 0
        %1260 = vmatprep.subr.bf16.mxu0 0
        %1261 = vmatpush1.bf16.msra.mxu0 0
        %1262 = vmatprep.subr.bf16.mxu0 0
        %1263 = vmatpush1.bf16.msra.mxu0 0
        %1264 = vmatprep.subr.bf16.mxu0 0
        %1265 = vmatpush1.bf16.msra.mxu0 0
        %1266 = vmatprep.mubr.bf16.mxu0 0
        %1267 = vmatmul.mubr.bf16.gmra.mrb[0].mxu0 %v1190
        %v1268 = vpop.f32.mrb[0].mxu0
        %v1269 = vadd.f32 0.0, %v1268
        %v1270 = vpop.f32.mrb[0].mxu0
        %v1271 = vadd.f32 0.0, %v1270
        %v1272 = vpop.f32.mrb[0].mxu0
        %v1273 = vadd.f32 0.0, %v1272
        %v1274 = vpop.f32.mrb[0].mxu0
        %v1275 = vadd.f32 0.0, %v1274
        %1276 = vdwg.mxu0
        %v1279 = vunpack.c.l.b16 %v1188
        %v1280 = vunpack.c.l.b16 %v1189
        %v1281 = vpack.c.b16 %v1280, %v1279
        %1283 = vmatprep.subr.bf16.mxu0 %v922
        %1284 = vmatpush1.bf16.msra.mxu0 %v921
        %1285 = vmatprep.subr.bf16.mxu0 %v926
        %1286 = vmatpush1.bf16.msra.mxu0 %v925
        %1287 = vmatprep.subr.bf16.mxu0 %v930
        %1288 = vmatpush1.bf16.msra.mxu0 %v929
        %1289 = vmatprep.subr.bf16.mxu0 %v934
        %1290 = vmatpush1.bf16.msra.mxu0 %v933
        %1291 = vmatprep.subr.bf16.mxu0 %v938
        %1292 = vmatpush1.bf16.msra.mxu0 %v937
        %1293 = vmatprep.subr.bf16.mxu0 %v942
        %1294 = vmatpush1.bf16.msra.mxu0 %v941
        %1295 = vmatprep.subr.bf16.mxu0 %v946
        %1296 = vmatpush1.bf16.msra.mxu0 %v945
        %1297 = vmatprep.subr.bf16.mxu0 %v950
        %1298 = vmatpush1.bf16.msra.mxu0 %v949
        %1299 = vmatprep.subr.bf16.mxu0 0
        %1300 = vmatpush1.bf16.msra.mxu0 0
        %1301 = vmatprep.subr.bf16.mxu0 0
        %1302 = vmatpush1.bf16.msra.mxu0 0
        %1303 = vmatprep.subr.bf16.mxu0 0
        %1304 = vmatpush1.bf16.msra.mxu0 0
        %1305 = vmatprep.subr.bf16.mxu0 0
        %1306 = vmatpush1.bf16.msra.mxu0 0
        %1307 = vmatprep.subr.bf16.mxu0 0
        %1308 = vmatpush1.bf16.msra.mxu0 0
        %1309 = vmatprep.subr.bf16.mxu0 0
        %1310 = vmatpush1.bf16.msra.mxu0 0
        %1311 = vmatprep.subr.bf16.mxu0 0
        %1312 = vmatpush1.bf16.msra.mxu0 0
        %1313 = vmatprep.subr.bf16.mxu0 0
        %1314 = vmatpush1.bf16.msra.mxu0 0
        %1315 = vmatprep.mubr.bf16.mxu0 0
        %1316 = vmatmul.mubr.bf16.gmra.mrb[0].mxu0 %v1281
        %v1317 = vpop.f32.mrb[0].mxu0
        %v1318 = vadd.f32 %v1226, %v1317
        %v1319 = vpop.f32.mrb[0].mxu0
        %v1320 = vadd.f32 %v1228, %v1319
        %v1321 = vpop.f32.mrb[0].mxu0
        %v1322 = vadd.f32 %v1230, %v1321
        %v1323 = vpop.f32.mrb[0].mxu0
        %v1324 = vadd.f32 %v1232, %v1323
        %1325 = vdwg.mxu0
        %1326 = vmatprep.subr.bf16.mxu0 %v924
        %1327 = vmatpush1.bf16.msra.mxu0 %v923
        %1328 = vmatprep.subr.bf16.mxu0 %v928
        %1329 = vmatpush1.bf16.msra.mxu0 %v927
        %1330 = vmatprep.subr.bf16.mxu0 %v932
        %1331 = vmatpush1.bf16.msra.mxu0 %v931
        %1332 = vmatprep.subr.bf16.mxu0 %v936
        %1333 = vmatpush1.bf16.msra.mxu0 %v935
        %1334 = vmatprep.subr.bf16.mxu0 %v940
        %1335 = vmatpush1.bf16.msra.mxu0 %v939
        %1336 = vmatprep.subr.bf16.mxu0 %v944
        %1337 = vmatpush1.bf16.msra.mxu0 %v943
        %1338 = vmatprep.subr.bf16.mxu0 %v948
        %1339 = vmatpush1.bf16.msra.mxu0 %v947
        %1340 = vmatprep.subr.bf16.mxu0 %v952
        %1341 = vmatpush1.bf16.msra.mxu0 %v951
        %1342 = vmatprep.subr.bf16.mxu0 0
        %1343 = vmatpush1.bf16.msra.mxu0 0
        %1344 = vmatprep.subr.bf16.mxu0 0
        %1345 = vmatpush1.bf16.msra.mxu0 0
        %1346 = vmatprep.subr.bf16.mxu0 0
        %1347 = vmatpush1.bf16.msra.mxu0 0
        %1348 = vmatprep.subr.bf16.mxu0 0
        %1349 = vmatpush1.bf16.msra.mxu0 0
        %1350 = vmatprep.subr.bf16.mxu0 0
        %1351 = vmatpush1.bf16.msra.mxu0 0
        %1352 = vmatprep.subr.bf16.mxu0 0
        %1353 = vmatpush1.bf16.msra.mxu0 0
        %1354 = vmatprep.subr.bf16.mxu0 0
        %1355 = vmatpush1.bf16.msra.mxu0 0
        %1356 = vmatprep.subr.bf16.mxu0 0
        %1357 = vmatpush1.bf16.msra.mxu0 0
        %1358 = vmatprep.mubr.bf16.mxu0 0
        %1359 = vmatmul.mubr.bf16.gmra.mrb[0].mxu0 %v1281
        %v1360 = vpop.f32.mrb[0].mxu0
        %v1361 = vadd.f32 %v1269, %v1360
        %v1362 = vpop.f32.mrb[0].mxu0
        %v1363 = vadd.f32 %v1271, %v1362
        %v1364 = vpop.f32.mrb[0].mxu0
        %v1365 = vadd.f32 %v1273, %v1364
        %v1366 = vpop.f32.mrb[0].mxu0
        %v1367 = vadd.f32 %v1275, %v1366
        %1368 = vdwg.mxu0
        %v1369 = vadd.f32 %v1318, %v1075
        %v1370 = vadd.f32 %v1320, %v1079
        %v1371 = vadd.f32 %v1361, %v1083
        %v1372 = vadd.f32 %v1363, %v1087
        %v1373 = vadd.f32 %v1322, %v1075
        %v1374 = vadd.f32 %v1324, %v1079
        %v1375 = vadd.f32 %v1365, %v1083
        %v1376 = vadd.f32 %v1367, %v1087
        %v1377 = vxor.u32 %v1369, 2147483648
        %v1378 = vxor.u32 %v1373, 2147483648
        %v1379 = vmul.f32 %v1377, 1.442695
        %v1380 = vpow.pop %v1379
        %v1381 = vmul.f32 %v1378, 1.442695
        %v1382 = vpow.pop %v1381
        %v1383 = vadd.f32 %v1380, 1.0
        %v1384 = vadd.f32 %v1382, 1.0
        %v1385 = vrcp.pop %v1383
        %v1386 = vmul.f32 1.0, %v1385
        %v1387 = vrcp.pop %v1384
        %v1388 = vmul.f32 1.0, %v1387
        %v1389 = vxor.u32 %v1370, 2147483648
        %v1390 = vxor.u32 %v1374, 2147483648
        %v1391 = vmul.f32 %v1389, 1.442695
        %v1392 = vpow.pop %v1391
        %v1393 = vmul.f32 %v1390, 1.442695
        %v1394 = vpow.pop %v1393
        %v1395 = vadd.f32 %v1392, 1.0
        %v1396 = vadd.f32 %v1394, 1.0
        %v1397 = vrcp.pop %v1395
        %v1398 = vmul.f32 1.0, %v1397
        %v1399 = vrcp.pop %v1396
        %v1400 = vmul.f32 1.0, %v1399
        %v1401 = vtanh.pop %v1371
        %v1402 = vtanh.pop %v1375
        %v1403 = vxor.u32 %v1372, 2147483648
        %v1404 = vxor.u32 %v1376, 2147483648
        %v1405 = vmul.f32 %v1403, 1.442695
        %v1406 = vpow.pop %v1405
        %v1407 = vmul.f32 %v1404, 1.442695
        %v1408 = vpow.pop %v1407
        %v1409 = vadd.f32 %v1406, 1.0
        %v1410 = vadd.f32 %v1408, 1.0
        %v1411 = vrcp.pop %v1409
        %v1412 = vmul.f32 1.0, %v1411
        %v1413 = vrcp.pop %v1410
        %v1414 = vmul.f32 1.0, %v1413
        %v1415 = vmul.f32 %v1398, %v1166
        %v1416 = vmul.f32 %v1400, %v1167
        %v1417 = vmul.f32 %v1386, %v1401
        %v1418 = vmul.f32 %v1388, %v1402
        %v1419 = vadd.f32 %v1415, %v1417
        %v1420 = vadd.f32 %v1416, %v1418
        %v1421 = vtanh.pop %v1419
        %v1422 = vtanh.pop %v1420
        %v1423 = vmul.f32 %v1412, %v1421
        %v1424 = vmul.f32 %v1414, %v1422
        %s1425 = smul.u32 %s1184, 16
        %s1426 = scalar_lea.vmem %s475, %s1425
        %v1427 = vld [vmem:[%s1426] sm:$0xff]
        %v1428 = vld [vmem:[%s1426 + $0x8] sm:$0xff]
        %vm1429 = vcmp.gt.f32.partialorder %v1427, 0.0
        %vm1430 = vcmp.gt.f32.partialorder %v1428, 0.0
        %v1431 = vsel %vm1429, 1, 0
        %v1432 = vsel %vm1430, 1, 0
        %1433 = vset.pattern.permute.xlu0 0
        %1434 = vperm.xlu0 %1433, %v1431
        %v1435 = vpop.permute.xlu0 %1434
        %1436 = vset.pattern.permute.xlu0 0
        %1437 = vperm.xlu0 %1436, %v1432
        %v1438 = vpop.permute.xlu0 %1437
        %vm1439 = vcmp.eq.s32.totalorder %v1435, 1
        %vm1440 = vcmp.eq.s32.totalorder %v1438, 1
        %v1441 = vsel %vm1439, %v1423, %v1164
        %v1442 = vsel %vm1440, %v1424, %v1165
        %v1443 = vsel %vm1439, %v1419, %v1166
        %v1444 = vsel %vm1440, %v1420, %v1167
        %v1445 = vsel %vm1439, %v1423, 0.0
        %v1446 = vsel %vm1440, %v1424, 0.0
        %v1447 = vpack.c.bf16 %v1446, %v1445
        %v1449 = vunpack.c.l.b16 %v1447
        %v1450 = vunpack.c.h.b16 %v1447
        %v1451 = vpack.c.b16 %v1449, %v1449
        %v1452 = vpack.c.b16 %v1450, %v1450
        %s1455 = smul.addr %s1185, 4
        %s1456 = scalar_lea.vmem %s439, %s1455 [#allocation9]
        %1457 = vst [vmem:[%s1456] sm:$0xf] %v1451
        %1458 = vst [vmem:[%s1456 + $0x4] sm:$0xf] %v1452
        %s1459 = smul.u32 %s1183, 2
        %s1460 = sadd.s32 %s566, %s1459
        %s1461 = smul.u32 %s1460, 2
        %s1462 = smul.addr %s1461, 4
        %s1463 = scalar_lea.vmem %s462, %s1462
        %v1464 = vld [vmem:[%s1463] sm:$0xf]
        %v1465 = vld [vmem:[%s1463 + $0x4] sm:$0xf]
        %v1466 = vpack.c.bf16 %v1442, %v1441
        %1467 = vmatprep.subr.bf16.mxu0 %v670
        %1468 = vmatpush1.bf16.msra.mxu0 %v669
        %1469 = vmatprep.subr.bf16.mxu0 %v674
        %1470 = vmatpush1.bf16.msra.mxu0 %v673
        %1471 = vmatprep.subr.bf16.mxu0 %v678
        %1472 = vmatpush1.bf16.msra.mxu0 %v677
        %1473 = vmatprep.subr.bf16.mxu0 %v682
        %1474 = vmatpush1.bf16.msra.mxu0 %v681
        %1475 = vmatprep.subr.bf16.mxu0 %v686
        %1476 = vmatpush1.bf16.msra.mxu0 %v685
        %1477 = vmatprep.subr.bf16.mxu0 %v690
        %1478 = vmatpush1.bf16.msra.mxu0 %v689
        %1479 = vmatprep.subr.bf16.mxu0 %v694
        %1480 = vmatpush1.bf16.msra.mxu0 %v693
        %1481 = vmatprep.subr.bf16.mxu0 %v698
        %1482 = vmatpush1.bf16.msra.mxu0 %v697
        %1483 = vmatprep.subr.bf16.mxu0 0
        %1484 = vmatpush1.bf16.msra.mxu0 0
        %1485 = vmatprep.subr.bf16.mxu0 0
        %1486 = vmatpush1.bf16.msra.mxu0 0
        %1487 = vmatprep.subr.bf16.mxu0 0
        %1488 = vmatpush1.bf16.msra.mxu0 0
        %1489 = vmatprep.subr.bf16.mxu0 0
        %1490 = vmatpush1.bf16.msra.mxu0 0
        %1491 = vmatprep.subr.bf16.mxu0 0
        %1492 = vmatpush1.bf16.msra.mxu0 0
        %1493 = vmatprep.subr.bf16.mxu0 0
        %1494 = vmatpush1.bf16.msra.mxu0 0
        %1495 = vmatprep.subr.bf16.mxu0 0
        %1496 = vmatpush1.bf16.msra.mxu0 0
        %1497 = vmatprep.subr.bf16.mxu0 0
        %1498 = vmatpush1.bf16.msra.mxu0 0
        %1499 = vmatprep.mubr.bf16.mxu0 0
        %1500 = vmatmul.mubr.bf16.gmra.mrb[0].mxu0 %v1466
        %v1501 = vpop.f32.mrb[0].mxu0
        %v1502 = vadd.f32 0.0, %v1501
        %v1503 = vpop.f32.mrb[0].mxu0
        %v1504 = vadd.f32 0.0, %v1503
        %v1505 = vpop.f32.mrb[0].mxu0
        %v1506 = vadd.f32 0.0, %v1505
        %v1507 = vpop.f32.mrb[0].mxu0
        %v1508 = vadd.f32 0.0, %v1507
        %1509 = vdwg.mxu0
        %1510 = vmatprep.subr.bf16.mxu0 %v672
        %1511 = vmatpush1.bf16.msra.mxu0 %v671
        %1512 = vmatprep.subr.bf16.mxu0 %v676
        %1513 = vmatpush1.bf16.msra.mxu0 %v675
        %1514 = vmatprep.subr.bf16.mxu0 %v680
        %1515 = vmatpush1.bf16.msra.mxu0 %v679
        %1516 = vmatprep.subr.bf16.mxu0 %v684
        %1517 = vmatpush1.bf16.msra.mxu0 %v683
        %1518 = vmatprep.subr.bf16.mxu0 %v688
        %1519 = vmatpush1.bf16.msra.mxu0 %v687
        %1520 = vmatprep.subr.bf16.mxu0 %v692
        %1521 = vmatpush1.bf16.msra.mxu0 %v691
        %1522 = vmatprep.subr.bf16.mxu0 %v696
        %1523 = vmatpush1.bf16.msra.mxu0 %v695
        %1524 = vmatprep.subr.bf16.mxu0 %v700
        %1525 = vmatpush1.bf16.msra.mxu0 %v699
        %1526 = vmatprep.subr.bf16.mxu0 0
        %1527 = vmatpush1.bf16.msra.mxu0 0
        %1528 = vmatprep.subr.bf16.mxu0 0
        %1529 = vmatpush1.bf16.msra.mxu0 0
        %1530 = vmatprep.subr.bf16.mxu0 0
        %1531 = vmatpush1.bf16.msra.mxu0 0
        %1532 = vmatprep.subr.bf16.mxu0 0
        %1533 = vmatpush1.bf16.msra.mxu0 0
        %1534 = vmatprep.subr.bf16.mxu0 0
        %1535 = vmatpush1.bf16.msra.mxu0 0
        %1536 = vmatprep.subr.bf16.mxu0 0
        %1537 = vmatpush1.bf16.msra.mxu0 0
        %1538 = vmatprep.subr.bf16.mxu0 0
        %1539 = vmatpush1.bf16.msra.mxu0 0
        %1540 = vmatprep.subr.bf16.mxu0 0
        %1541 = vmatpush1.bf16.msra.mxu0 0
        %1542 = vmatprep.mubr.bf16.mxu0 0
        %1543 = vmatmul.mubr.bf16.gmra.mrb[0].mxu0 %v1466
        %v1544 = vpop.f32.mrb[0].mxu0
        %v1545 = vadd.f32 0.0, %v1544
        %v1546 = vpop.f32.mrb[0].mxu0
        %v1547 = vadd.f32 0.0, %v1546
        %v1548 = vpop.f32.mrb[0].mxu0
        %v1549 = vadd.f32 0.0, %v1548
        %v1550 = vpop.f32.mrb[0].mxu0
        %v1551 = vadd.f32 0.0, %v1550
        %1552 = vdwg.mxu0
        %v1555 = vunpack.c.l.b16 %v1464
        %v1556 = vunpack.c.l.b16 %v1465
        %v1557 = vpack.c.b16 %v1556, %v1555
        %1559 = vmatprep.subr.bf16.mxu0 %v922
        %1560 = vmatpush1.bf16.msra.mxu0 %v921
        %1561 = vmatprep.subr.bf16.mxu0 %v926
        %1562 = vmatpush1.bf16.msra.mxu0 %v925
        %1563 = vmatprep.subr.bf16.mxu0 %v930
        %1564 = vmatpush1.bf16.msra.mxu0 %v929
        %1565 = vmatprep.subr.bf16.mxu0 %v934
        %1566 = vmatpush1.bf16.msra.mxu0 %v933
        %1567 = vmatprep.subr.bf16.mxu0 %v938
        %1568 = vmatpush1.bf16.msra.mxu0 %v937
        %1569 = vmatprep.subr.bf16.mxu0 %v942
        %1570 = vmatpush1.bf16.msra.mxu0 %v941
        %1571 = vmatprep.subr.bf16.mxu0 %v946
        %1572 = vmatpush1.bf16.msra.mxu0 %v945
        %1573 = vmatprep.subr.bf16.mxu0 %v950
        %1574 = vmatpush1.bf16.msra.mxu0 %v949
        %1575 = vmatprep.subr.bf16.mxu0 0
        %1576 = vmatpush1.bf16.msra.mxu0 0
        %1577 = vmatprep.subr.bf16.mxu0 0
        %1578 = vmatpush1.bf16.msra.mxu0 0
        %1579 = vmatprep.subr.bf16.mxu0 0
        %1580 = vmatpush1.bf16.msra.mxu0 0
        %1581 = vmatprep.subr.bf16.mxu0 0
        %1582 = vmatpush1.bf16.msra.mxu0 0
        %1583 = vmatprep.subr.bf16.mxu0 0
        %1584 = vmatpush1.bf16.msra.mxu0 0
        %1585 = vmatprep.subr.bf16.mxu0 0
        %1586 = vmatpush1.bf16.msra.mxu0 0
        %1587 = vmatprep.subr.bf16.mxu0 0
        %1588 = vmatpush1.bf16.msra.mxu0 0
        %1589 = vmatprep.subr.bf16.mxu0 0
        %1590 = vmatpush1.bf16.msra.mxu0 0
        %1591 = vmatprep.mubr.bf16.mxu0 0
        %1592 = vmatmul.mubr.bf16.gmra.mrb[0].mxu0 %v1557
        %v1593 = vpop.f32.mrb[0].mxu0
        %v1594 = vadd.f32 %v1502, %v1593
        %v1595 = vpop.f32.mrb[0].mxu0
        %v1596 = vadd.f32 %v1504, %v1595
        %v1597 = vpop.f32.mrb[0].mxu0
        %v1598 = vadd.f32 %v1506, %v1597
        %v1599 = vpop.f32.mrb[0].mxu0
        %v1600 = vadd.f32 %v1508, %v1599
        %1601 = vdwg.mxu0
        %1602 = vmatprep.subr.bf16.mxu0 %v924
        %1603 = vmatpush1.bf16.msra.mxu0 %v923
        %1604 = vmatprep.subr.bf16.mxu0 %v928
        %1605 = vmatpush1.bf16.msra.mxu0 %v927
        %1606 = vmatprep.subr.bf16.mxu0 %v932
        %1607 = vmatpush1.bf16.msra.mxu0 %v931
        %1608 = vmatprep.subr.bf16.mxu0 %v936
        %1609 = vmatpush1.bf16.msra.mxu0 %v935
        %1610 = vmatprep.subr.bf16.mxu0 %v940
        %1611 = vmatpush1.bf16.msra.mxu0 %v939
        %1612 = vmatprep.subr.bf16.mxu0 %v944
        %1613 = vmatpush1.bf16.msra.mxu0 %v943
        %1614 = vmatprep.subr.bf16.mxu0 %v948
        %1615 = vmatpush1.bf16.msra.mxu0 %v947
        %1616 = vmatprep.subr.bf16.mxu0 %v952
        %1617 = vmatpush1.bf16.msra.mxu0 %v951
        %1618 = vmatprep.subr.bf16.mxu0 0
        %1619 = vmatpush1.bf16.msra.mxu0 0
        %1620 = vmatprep.subr.bf16.mxu0 0
        %1621 = vmatpush1.bf16.msra.mxu0 0
        %1622 = vmatprep.subr.bf16.mxu0 0
        %1623 = vmatpush1.bf16.msra.mxu0 0
        %1624 = vmatprep.subr.bf16.mxu0 0
        %1625 = vmatpush1.bf16.msra.mxu0 0
        %1626 = vmatprep.subr.bf16.mxu0 0
        %1627 = vmatpush1.bf16.msra.mxu0 0
        %1628 = vmatprep.subr.bf16.mxu0 0
        %1629 = vmatpush1.bf16.msra.mxu0 0
        %1630 = vmatprep.subr.bf16.mxu0 0
        %1631 = vmatpush1.bf16.msra.mxu0 0
        %1632 = vmatprep.subr.bf16.mxu0 0
        %1633 = vmatpush1.bf16.msra.mxu0 0
        %1634 = vmatprep.mubr.bf16.mxu0 0
        %1635 = vmatmul.mubr.bf16.gmra.mrb[0].mxu0 %v1557
        %v1636 = vpop.f32.mrb[0].mxu0
        %v1637 = vadd.f32 %v1545, %v1636
        %v1638 = vpop.f32.mrb[0].mxu0
        %v1639 = vadd.f32 %v1547, %v1638
        %v1640 = vpop.f32.mrb[0].mxu0
        %v1641 = vadd.f32 %v1549, %v1640
        %v1642 = vpop.f32.mrb[0].mxu0
        %v1643 = vadd.f32 %v1551, %v1642
        %1644 = vdwg.mxu0
        %v1645 = vadd.f32 %v1594, %v1075
        %v1646 = vadd.f32 %v1596, %v1079
        %v1647 = vadd.f32 %v1637, %v1083
        %v1648 = vadd.f32 %v1639, %v1087
        %v1649 = vadd.f32 %v1598, %v1075
        %v1650 = vadd.f32 %v1600, %v1079
        %v1651 = vadd.f32 %v1641, %v1083
        %v1652 = vadd.f32 %v1643, %v1087
        %v1653 = vxor.u32 %v1645, 2147483648
        %v1654 = vxor.u32 %v1649, 2147483648
        %v1655 = vmul.f32 %v1653, 1.442695
        %v1656 = vpow.pop %v1655
        %v1657 = vmul.f32 %v1654, 1.442695
        %v1658 = vpow.pop %v1657
        %v1659 = vadd.f32 %v1656, 1.0
        %v1660 = vadd.f32 %v1658, 1.0
        %v1661 = vrcp.pop %v1659
        %v1662 = vmul.f32 1.0, %v1661
        %v1663 = vrcp.pop %v1660
        %v1664 = vmul.f32 1.0, %v1663
        %v1665 = vxor.u32 %v1646, 2147483648
        %v1666 = vxor.u32 %v1650, 2147483648
        %v1667 = vmul.f32 %v1665, 1.442695
        %v1668 = vpow.pop %v1667
        %v1669 = vmul.f32 %v1666, 1.442695
        %v1670 = vpow.pop %v1669
        %v1671 = vadd.f32 %v1668, 1.0
        %v1672 = vadd.f32 %v1670, 1.0
        %v1673 = vrcp.pop %v1671
        %v1674 = vmul.f32 1.0, %v1673
        %v1675 = vrcp.pop %v1672
        %v1676 = vmul.f32 1.0, %v1675
        %v1677 = vtanh.pop %v1647
        %v1678 = vtanh.pop %v1651
        %v1679 = vxor.u32 %v1648, 2147483648
        %v1680 = vxor.u32 %v1652, 2147483648
        %v1681 = vmul.f32 %v1679, 1.442695
        %v1682 = vpow.pop %v1681
        %v1683 = vmul.f32 %v1680, 1.442695
        %v1684 = vpow.pop %v1683
        %v1685 = vadd.f32 %v1682, 1.0
        %v1686 = vadd.f32 %v1684, 1.0
        %v1687 = vrcp.pop %v1685
        %v1688 = vmul.f32 1.0, %v1687
        %v1689 = vrcp.pop %v1686
        %v1690 = vmul.f32 1.0, %v1689
        %v1691 = vmul.f32 %v1674, %v1443
        %v1692 = vmul.f32 %v1676, %v1444
        %v1693 = vmul.f32 %v1662, %v1677
        %v1694 = vmul.f32 %v1664, %v1678
        %v1695 = vadd.f32 %v1691, %v1693
        %v1696 = vadd.f32 %v1692, %v1694
        %v1697 = vtanh.pop %v1695
        %v1698 = vtanh.pop %v1696
        %v1699 = vmul.f32 %v1688, %v1697
        %v1700 = vmul.f32 %v1690, %v1698
        %s1701 = smul.u32 %s1460, 16
        %s1702 = scalar_lea.vmem %s475, %s1701
        %v1703 = vld [vmem:[%s1702] sm:$0xff]
        %v1704 = vld [vmem:[%s1702 + $0x8] sm:$0xff]
        %vm1705 = vcmp.gt.f32.partialorder %v1703, 0.0
        %vm1706 = vcmp.gt.f32.partialorder %v1704, 0.0
        %v1707 = vsel %vm1705, 1, 0
        %v1708 = vsel %vm1706, 1, 0
        %1709 = vset.pattern.permute.xlu0 0
        %1710 = vperm.xlu0 %1709, %v1707
        %v1711 = vpop.permute.xlu0 %1710
        %1712 = vset.pattern.permute.xlu0 0
        %1713 = vperm.xlu0 %1712, %v1708
        %v1714 = vpop.permute.xlu0 %1713
        %vm1715 = vcmp.eq.s32.totalorder %v1711, 1
        %vm1716 = vcmp.eq.s32.totalorder %v1714, 1
        %v1717 = vsel %vm1715, %v1699, %v1441
        %v1718 = vsel %vm1716, %v1700, %v1442
        %v1719 = vsel %vm1715, %v1695, %v1443
        %v1720 = vsel %vm1716, %v1696, %v1444
        %v1721 = vsel %vm1715, %v1699, 0.0
        %v1722 = vsel %vm1716, %v1700, 0.0
        %v1723 = vpack.c.bf16 %v1722, %v1721
        %v1725 = vunpack.c.l.b16 %v1723
        %v1726 = vunpack.c.h.b16 %v1723
        %v1727 = vpack.c.b16 %v1725, %v1725
        %v1728 = vpack.c.b16 %v1726, %v1726
        %s1731 = smul.addr %s1461, 4
        %s1732 = scalar_lea.vmem %s439, %s1731 [#allocation9]
        %1733 = vst [vmem:[%s1732] sm:$0xf] %v1727
        %1734 = vst [vmem:[%s1732 + $0x4] sm:$0xf] %v1728
        %s1735 = smul.u32 %s1183, 3
        %s1736 = sadd.s32 %s566, %s1735
        %s1737 = smul.u32 %s1736, 2
        %s1738 = smul.addr %s1737, 4
        %s1739 = scalar_lea.vmem %s462, %s1738
        %v1740 = vld [vmem:[%s1739] sm:$0xf]
        %v1741 = vld [vmem:[%s1739 + $0x4] sm:$0xf]
        %v1742 = vpack.c.bf16 %v1718, %v1717
        %1743 = vmatprep.subr.bf16.mxu0 %v670
        %1744 = vmatpush1.bf16.msra.mxu0 %v669
        %1745 = vmatprep.subr.bf16.mxu0 %v674
        %1746 = vmatpush1.bf16.msra.mxu0 %v673
        %1747 = vmatprep.subr.bf16.mxu0 %v678
        %1748 = vmatpush1.bf16.msra.mxu0 %v677
        %1749 = vmatprep.subr.bf16.mxu0 %v682
        %1750 = vmatpush1.bf16.msra.mxu0 %v681
        %1751 = vmatprep.subr.bf16.mxu0 %v686
        %1752 = vmatpush1.bf16.msra.mxu0 %v685
        %1753 = vmatprep.subr.bf16.mxu0 %v690
        %1754 = vmatpush1.bf16.msra.mxu0 %v689
        %1755 = vmatprep.subr.bf16.mxu0 %v694
        %1756 = vmatpush1.bf16.msra.mxu0 %v693
        %1757 = vmatprep.subr.bf16.mxu0 %v698
        %1758 = vmatpush1.bf16.msra.mxu0 %v697
        %1759 = vmatprep.subr.bf16.mxu0 0
        %1760 = vmatpush1.bf16.msra.mxu0 0
        %1761 = vmatprep.subr.bf16.mxu0 0
        %1762 = vmatpush1.bf16.msra.mxu0 0
        %1763 = vmatprep.subr.bf16.mxu0 0
        %1764 = vmatpush1.bf16.msra.mxu0 0
        %1765 = vmatprep.subr.bf16.mxu0 0
        %1766 = vmatpush1.bf16.msra.mxu0 0
        %1767 = vmatprep.subr.bf16.mxu0 0
        %1768 = vmatpush1.bf16.msra.mxu0 0
        %1769 = vmatprep.subr.bf16.mxu0 0
        %1770 = vmatpush1.bf16.msra.mxu0 0
        %1771 = vmatprep.subr.bf16.mxu0 0
        %1772 = vmatpush1.bf16.msra.mxu0 0
        %1773 = vmatprep.subr.bf16.mxu0 0
        %1774 = vmatpush1.bf16.msra.mxu0 0
        %1775 = vmatprep.mubr.bf16.mxu0 0
        %1776 = vmatmul.mubr.bf16.gmra.mrb[0].mxu0 %v1742
        %v1777 = vpop.f32.mrb[0].mxu0
        %v1778 = vadd.f32 0.0, %v1777
        %v1779 = vpop.f32.mrb[0].mxu0
        %v1780 = vadd.f32 0.0, %v1779
        %v1781 = vpop.f32.mrb[0].mxu0
        %v1782 = vadd.f32 0.0, %v1781
        %v1783 = vpop.f32.mrb[0].mxu0
        %v1784 = vadd.f32 0.0, %v1783
        %1785 = vdwg.mxu0
        %1786 = vmatprep.subr.bf16.mxu0 %v672
        %1787 = vmatpush1.bf16.msra.mxu0 %v671
        %1788 = vmatprep.subr.bf16.mxu0 %v676
        %1789 = vmatpush1.bf16.msra.mxu0 %v675
        %1790 = vmatprep.subr.bf16.mxu0 %v680
        %1791 = vmatpush1.bf16.msra.mxu0 %v679
        %1792 = vmatprep.subr.bf16.mxu0 %v684
        %1793 = vmatpush1.bf16.msra.mxu0 %v683
        %1794 = vmatprep.subr.bf16.mxu0 %v688
        %1795 = vmatpush1.bf16.msra.mxu0 %v687
        %1796 = vmatprep.subr.bf16.mxu0 %v692
        %1797 = vmatpush1.bf16.msra.mxu0 %v691
        %1798 = vmatprep.subr.bf16.mxu0 %v696
        %1799 = vmatpush1.bf16.msra.mxu0 %v695
        %1800 = vmatprep.subr.bf16.mxu0 %v700
        %1801 = vmatpush1.bf16.msra.mxu0 %v699
        %1802 = vmatprep.subr.bf16.mxu0 0
        %1803 = vmatpush1.bf16.msra.mxu0 0
        %1804 = vmatprep.subr.bf16.mxu0 0
        %1805 = vmatpush1.bf16.msra.mxu0 0
        %1806 = vmatprep.subr.bf16.mxu0 0
        %1807 = vmatpush1.bf16.msra.mxu0 0
        %1808 = vmatprep.subr.bf16.mxu0 0
        %1809 = vmatpush1.bf16.msra.mxu0 0
        %1810 = vmatprep.subr.bf16.mxu0 0
        %1811 = vmatpush1.bf16.msra.mxu0 0
        %1812 = vmatprep.subr.bf16.mxu0 0
        %1813 = vmatpush1.bf16.msra.mxu0 0
        %1814 = vmatprep.subr.bf16.mxu0 0
        %1815 = vmatpush1.bf16.msra.mxu0 0
        %1816 = vmatprep.subr.bf16.mxu0 0
        %1817 = vmatpush1.bf16.msra.mxu0 0
        %1818 = vmatprep.mubr.bf16.mxu0 0
        %1819 = vmatmul.mubr.bf16.gmra.mrb[0].mxu0 %v1742
        %v1820 = vpop.f32.mrb[0].mxu0
        %v1821 = vadd.f32 0.0, %v1820
        %v1822 = vpop.f32.mrb[0].mxu0
        %v1823 = vadd.f32 0.0, %v1822
        %v1824 = vpop.f32.mrb[0].mxu0
        %v1825 = vadd.f32 0.0, %v1824
        %v1826 = vpop.f32.mrb[0].mxu0
        %v1827 = vadd.f32 0.0, %v1826
        %1828 = vdwg.mxu0
        %v1831 = vunpack.c.l.b16 %v1740
        %v1832 = vunpack.c.l.b16 %v1741
        %v1833 = vpack.c.b16 %v1832, %v1831
        %1835 = vmatprep.subr.bf16.mxu0 %v922
        %1836 = vmatpush1.bf16.msra.mxu0 %v921
        %1837 = vmatprep.subr.bf16.mxu0 %v926
        %1838 = vmatpush1.bf16.msra.mxu0 %v925
        %1839 = vmatprep.subr.bf16.mxu0 %v930
        %1840 = vmatpush1.bf16.msra.mxu0 %v929
        %1841 = vmatprep.subr.bf16.mxu0 %v934
        %1842 = vmatpush1.bf16.msra.mxu0 %v933
        %1843 = vmatprep.subr.bf16.mxu0 %v938
        %1844 = vmatpush1.bf16.msra.mxu0 %v937
        %1845 = vmatprep.subr.bf16.mxu0 %v942
        %1846 = vmatpush1.bf16.msra.mxu0 %v941
        %1847 = vmatprep.subr.bf16.mxu0 %v946
        %1848 = vmatpush1.bf16.msra.mxu0 %v945
        %1849 = vmatprep.subr.bf16.mxu0 %v950
        %1850 = vmatpush1.bf16.msra.mxu0 %v949
        %1851 = vmatprep.subr.bf16.mxu0 0
        %1852 = vmatpush1.bf16.msra.mxu0 0
        %1853 = vmatprep.subr.bf16.mxu0 0
        %1854 = vmatpush1.bf16.msra.mxu0 0
        %1855 = vmatprep.subr.bf16.mxu0 0
        %1856 = vmatpush1.bf16.msra.mxu0 0
        %1857 = vmatprep.subr.bf16.mxu0 0
        %1858 = vmatpush1.bf16.msra.mxu0 0
        %1859 = vmatprep.subr.bf16.mxu0 0
        %1860 = vmatpush1.bf16.msra.mxu0 0
        %1861 = vmatprep.subr.bf16.mxu0 0
        %1862 = vmatpush1.bf16.msra.mxu0 0
        %1863 = vmatprep.subr.bf16.mxu0 0
        %1864 = vmatpush1.bf16.msra.mxu0 0
        %1865 = vmatprep.subr.bf16.mxu0 0
        %1866 = vmatpush1.bf16.msra.mxu0 0
        %1867 = vmatprep.mubr.bf16.mxu0 0
        %1868 = vmatmul.mubr.bf16.gmra.mrb[0].mxu0 %v1833
        %v1869 = vpop.f32.mrb[0].mxu0
        %v1870 = vadd.f32 %v1778, %v1869
        %v1871 = vpop.f32.mrb[0].mxu0
        %v1872 = vadd.f32 %v1780, %v1871
        %v1873 = vpop.f32.mrb[0].mxu0
        %v1874 = vadd.f32 %v1782, %v1873
        %v1875 = vpop.f32.mrb[0].mxu0
        %v1876 = vadd.f32 %v1784, %v1875
        %1877 = vdwg.mxu0
        %1878 = vmatprep.subr.bf16.mxu0 %v924
        %1879 = vmatpush1.bf16.msra.mxu0 %v923
        %1880 = vmatprep.subr.bf16.mxu0 %v928
        %1881 = vmatpush1.bf16.msra.mxu0 %v927
        %1882 = vmatprep.subr.bf16.mxu0 %v932
        %1883 = vmatpush1.bf16.msra.mxu0 %v931
        %1884 = vmatprep.subr.bf16.mxu0 %v936
        %1885 = vmatpush1.bf16.msra.mxu0 %v935
        %1886 = vmatprep.subr.bf16.mxu0 %v940
        %1887 = vmatpush1.bf16.msra.mxu0 %v939
        %1888 = vmatprep.subr.bf16.mxu0 %v944
        %1889 = vmatpush1.bf16.msra.mxu0 %v943
        %1890 = vmatprep.subr.bf16.mxu0 %v948
        %1891 = vmatpush1.bf16.msra.mxu0 %v947
        %1892 = vmatprep.subr.bf16.mxu0 %v952
        %1893 = vmatpush1.bf16.msra.mxu0 %v951
        %1894 = vmatprep.subr.bf16.mxu0 0
        %1895 = vmatpush1.bf16.msra.mxu0 0
        %1896 = vmatprep.subr.bf16.mxu0 0
        %1897 = vmatpush1.bf16.msra.mxu0 0
        %1898 = vmatprep.subr.bf16.mxu0 0
        %1899 = vmatpush1.bf16.msra.mxu0 0
        %1900 = vmatprep.subr.bf16.mxu0 0
        %1901 = vmatpush1.bf16.msra.mxu0 0
        %1902 = vmatprep.subr.bf16.mxu0 0
        %1903 = vmatpush1.bf16.msra.mxu0 0
        %1904 = vmatprep.subr.bf16.mxu0 0
        %1905 = vmatpush1.bf16.msra.mxu0 0
        %1906 = vmatprep.subr.bf16.mxu0 0
        %1907 = vmatpush1.bf16.msra.mxu0 0
        %1908 = vmatprep.subr.bf16.mxu0 0
        %1909 = vmatpush1.bf16.msra.mxu0 0
        %1910 = vmatprep.mubr.bf16.mxu0 0
        %1911 = vmatmul.mubr.bf16.gmra.mrb[0].mxu0 %v1833
        %v1912 = vpop.f32.mrb[0].mxu0
        %v1913 = vadd.f32 %v1821, %v1912
        %v1914 = vpop.f32.mrb[0].mxu0
        %v1915 = vadd.f32 %v1823, %v1914
        %v1916 = vpop.f32.mrb[0].mxu0
        %v1917 = vadd.f32 %v1825, %v1916
        %v1918 = vpop.f32.mrb[0].mxu0
        %v1919 = vadd.f32 %v1827, %v1918
        %1920 = vdwg.mxu0
        %v1921 = vadd.f32 %v1870, %v1075
        %v1922 = vadd.f32 %v1872, %v1079
        %v1923 = vadd.f32 %v1913, %v1083
        %v1924 = vadd.f32 %v1915, %v1087
        %v1925 = vadd.f32 %v1874, %v1075
        %v1926 = vadd.f32 %v1876, %v1079
        %v1927 = vadd.f32 %v1917, %v1083
        %v1928 = vadd.f32 %v1919, %v1087
        %v1929 = vxor.u32 %v1921, 2147483648
        %v1930 = vxor.u32 %v1925, 2147483648
        %v1931 = vmul.f32 %v1929, 1.442695
        %v1932 = vpow.pop %v1931
        %v1933 = vmul.f32 %v1930, 1.442695
        %v1934 = vpow.pop %v1933
        %v1935 = vadd.f32 %v1932, 1.0
        %v1936 = vadd.f32 %v1934, 1.0
        %v1937 = vrcp.pop %v1935
        %v1938 = vmul.f32 1.0, %v1937
        %v1939 = vrcp.pop %v1936
        %v1940 = vmul.f32 1.0, %v1939
        %v1941 = vxor.u32 %v1922, 2147483648
        %v1942 = vxor.u32 %v1926, 2147483648
        %v1943 = vmul.f32 %v1941, 1.442695
        %v1944 = vpow.pop %v1943
        %v1945 = vmul.f32 %v1942, 1.442695
        %v1946 = vpow.pop %v1945
        %v1947 = vadd.f32 %v1944, 1.0
        %v1948 = vadd.f32 %v1946, 1.0
        %v1949 = vrcp.pop %v1947
        %v1950 = vmul.f32 1.0, %v1949
        %v1951 = vrcp.pop %v1948
        %v1952 = vmul.f32 1.0, %v1951
        %v1953 = vtanh.pop %v1923
        %v1954 = vtanh.pop %v1927
        %v1955 = vxor.u32 %v1924, 2147483648
        %v1956 = vxor.u32 %v1928, 2147483648
        %v1957 = vmul.f32 %v1955, 1.442695
        %v1958 = vpow.pop %v1957
        %v1959 = vmul.f32 %v1956, 1.442695
        %v1960 = vpow.pop %v1959
        %v1961 = vadd.f32 %v1958, 1.0
        %v1962 = vadd.f32 %v1960, 1.0
        %v1963 = vrcp.pop %v1961
        %v1964 = vmul.f32 1.0, %v1963
        %v1965 = vrcp.pop %v1962
        %v1966 = vmul.f32 1.0, %v1965
        %v1967 = vmul.f32 %v1950, %v1719
        %v1968 = vmul.f32 %v1952, %v1720
        %v1969 = vmul.f32 %v1938, %v1953
        %v1970 = vmul.f32 %v1940, %v1954
        %v1971 = vadd.f32 %v1967, %v1969
        %v1972 = vadd.f32 %v1968, %v1970
        %v1973 = vtanh.pop %v1971
        %v1974 = vtanh.pop %v1972
        %v1975 = vmul.f32 %v1964, %v1973
        %v1976 = vmul.f32 %v1966, %v1974
        %s1977 = smul.u32 %s1736, 16
        %s1978 = scalar_lea.vmem %s475, %s1977
        %v1979 = vld [vmem:[%s1978] sm:$0xff]
        %v1980 = vld [vmem:[%s1978 + $0x8] sm:$0xff]
        %vm1981 = vcmp.gt.f32.partialorder %v1979, 0.0
        %vm1982 = vcmp.gt.f32.partialorder %v1980, 0.0
        %v1983 = vsel %vm1981, 1, 0
        %v1984 = vsel %vm1982, 1, 0
        %1985 = vset.pattern.permute.xlu0 0
        %1986 = vperm.xlu0 %1985, %v1983
        %v1987 = vpop.permute.xlu0 %1986
        %1988 = vset.pattern.permute.xlu0 0
        %1989 = vperm.xlu0 %1988, %v1984
        %v1990 = vpop.permute.xlu0 %1989
        %vm1991 = vcmp.eq.s32.totalorder %v1987, 1
        %vm1992 = vcmp.eq.s32.totalorder %v1990, 1
        %v1993 = vsel %vm1991, %v1975, %v1717
        %v1994 = vsel %vm1992, %v1976, %v1718
        %v1995 = vsel %vm1991, %v1971, %v1719
        %v1996 = vsel %vm1992, %v1972, %v1720
        %v1997 = vsel %vm1991, %v1975, 0.0
        %v1998 = vsel %vm1992, %v1976, 0.0
        %v1999 = vpack.c.bf16 %v1998, %v1997
        %v2001 = vunpack.c.l.b16 %v1999
        %v2002 = vunpack.c.h.b16 %v1999
        %v2003 = vpack.c.b16 %v2001, %v2001
        %v2004 = vpack.c.b16 %v2002, %v2002
        %s2007 = smul.addr %s1737, 4
        %s2008 = scalar_lea.vmem %s439, %s2007 [#allocation9]
        %2009 = vst [vmem:[%s2008] sm:$0xf] %v2003
        %2010 = vst [vmem:[%s2008 + $0x4] sm:$0xf] %v2004
        %s2011 = smul.u32 %s1183, 4
        %s2012 = sadd.s32 %s566, %s2011
        %s2013 = smul.u32 %s2012, 2
        %s2014 = smul.addr %s2013, 4
        %s2015 = scalar_lea.vmem %s462, %s2014
        %v2016 = vld [vmem:[%s2015] sm:$0xf]
        %v2017 = vld [vmem:[%s2015 + $0x4] sm:$0xf]
        %v2018 = vpack.c.bf16 %v1994, %v1993
        %2019 = vmatprep.subr.bf16.mxu0 %v670
        %2020 = vmatpush1.bf16.msra.mxu0 %v669
        %2021 = vmatprep.subr.bf16.mxu0 %v674
        %2022 = vmatpush1.bf16.msra.mxu0 %v673
        %2023 = vmatprep.subr.bf16.mxu0 %v678
        %2024 = vmatpush1.bf16.msra.mxu0 %v677
        %2025 = vmatprep.subr.bf16.mxu0 %v682
        %2026 = vmatpush1.bf16.msra.mxu0 %v681
        %2027 = vmatprep.subr.bf16.mxu0 %v686
        %2028 = vmatpush1.bf16.msra.mxu0 %v685
        %2029 = vmatprep.subr.bf16.mxu0 %v690
        %2030 = vmatpush1.bf16.msra.mxu0 %v689
        %2031 = vmatprep.subr.bf16.mxu0 %v694
        %2032 = vmatpush1.bf16.msra.mxu0 %v693
        %2033 = vmatprep.subr.bf16.mxu0 %v698
        %2034 = vmatpush1.bf16.msra.mxu0 %v697
        %2035 = vmatprep.subr.bf16.mxu0 0
        %2036 = vmatpush1.bf16.msra.mxu0 0
        %2037 = vmatprep.subr.bf16.mxu0 0
        %2038 = vmatpush1.bf16.msra.mxu0 0
        %2039 = vmatprep.subr.bf16.mxu0 0
        %2040 = vmatpush1.bf16.msra.mxu0 0
        %2041 = vmatprep.subr.bf16.mxu0 0
        %2042 = vmatpush1.bf16.msra.mxu0 0
        %2043 = vmatprep.subr.bf16.mxu0 0
        %2044 = vmatpush1.bf16.msra.mxu0 0
        %2045 = vmatprep.subr.bf16.mxu0 0
        %2046 = vmatpush1.bf16.msra.mxu0 0
        %2047 = vmatprep.subr.bf16.mxu0 0
        %2048 = vmatpush1.bf16.msra.mxu0 0
        %2049 = vmatprep.subr.bf16.mxu0 0
        %2050 = vmatpush1.bf16.msra.mxu0 0
        %2051 = vmatprep.mubr.bf16.mxu0 0
        %2052 = vmatmul.mubr.bf16.gmra.mrb[0].mxu0 %v2018
        %v2053 = vpop.f32.mrb[0].mxu0
        %v2054 = vadd.f32 0.0, %v2053
        %v2055 = vpop.f32.mrb[0].mxu0
        %v2056 = vadd.f32 0.0, %v2055
        %v2057 = vpop.f32.mrb[0].mxu0
        %v2058 = vadd.f32 0.0, %v2057
        %v2059 = vpop.f32.mrb[0].mxu0
        %v2060 = vadd.f32 0.0, %v2059
        %2061 = vdwg.mxu0
        %2062 = vmatprep.subr.bf16.mxu0 %v672
        %2063 = vmatpush1.bf16.msra.mxu0 %v671
        %2064 = vmatprep.subr.bf16.mxu0 %v676
        %2065 = vmatpush1.bf16.msra.mxu0 %v675
        %2066 = vmatprep.subr.bf16.mxu0 %v680
        %2067 = vmatpush1.bf16.msra.mxu0 %v679
        %2068 = vmatprep.subr.bf16.mxu0 %v684
        %2069 = vmatpush1.bf16.msra.mxu0 %v683
        %2070 = vmatprep.subr.bf16.mxu0 %v688
        %2071 = vmatpush1.bf16.msra.mxu0 %v687
        %2072 = vmatprep.subr.bf16.mxu0 %v692
        %2073 = vmatpush1.bf16.msra.mxu0 %v691
        %2074 = vmatprep.subr.bf16.mxu0 %v696
        %2075 = vmatpush1.bf16.msra.mxu0 %v695
        %2076 = vmatprep.subr.bf16.mxu0 %v700
        %2077 = vmatpush1.bf16.msra.mxu0 %v699
        %2078 = vmatprep.subr.bf16.mxu0 0
        %2079 = vmatpush1.bf16.msra.mxu0 0
        %2080 = vmatprep.subr.bf16.mxu0 0
        %2081 = vmatpush1.bf16.msra.mxu0 0
        %2082 = vmatprep.subr.bf16.mxu0 0
        %2083 = vmatpush1.bf16.msra.mxu0 0
        %2084 = vmatprep.subr.bf16.mxu0 0
        %2085 = vmatpush1.bf16.msra.mxu0 0
        %2086 = vmatprep.subr.bf16.mxu0 0
        %2087 = vmatpush1.bf16.msra.mxu0 0
        %2088 = vmatprep.subr.bf16.mxu0 0
        %2089 = vmatpush1.bf16.msra.mxu0 0
        %2090 = vmatprep.subr.bf16.mxu0 0
        %2091 = vmatpush1.bf16.msra.mxu0 0
        %2092 = vmatprep.subr.bf16.mxu0 0
        %2093 = vmatpush1.bf16.msra.mxu0 0
        %2094 = vmatprep.mubr.bf16.mxu0 0
        %2095 = vmatmul.mubr.bf16.gmra.mrb[0].mxu0 %v2018
        %v2096 = vpop.f32.mrb[0].mxu0
        %v2097 = vadd.f32 0.0, %v2096
        %v2098 = vpop.f32.mrb[0].mxu0
        %v2099 = vadd.f32 0.0, %v2098
        %v2100 = vpop.f32.mrb[0].mxu0
        %v2101 = vadd.f32 0.0, %v2100
        %v2102 = vpop.f32.mrb[0].mxu0
        %v2103 = vadd.f32 0.0, %v2102
        %2104 = vdwg.mxu0
        %v2107 = vunpack.c.l.b16 %v2016
        %v2108 = vunpack.c.l.b16 %v2017
        %v2109 = vpack.c.b16 %v2108, %v2107
        %2111 = vmatprep.subr.bf16.mxu0 %v922
        %2112 = vmatpush1.bf16.msra.mxu0 %v921
        %2113 = vmatprep.subr.bf16.mxu0 %v926
        %2114 = vmatpush1.bf16.msra.mxu0 %v925
        %2115 = vmatprep.subr.bf16.mxu0 %v930
        %2116 = vmatpush1.bf16.msra.mxu0 %v929
        %2117 = vmatprep.subr.bf16.mxu0 %v934
        %2118 = vmatpush1.bf16.msra.mxu0 %v933
        %2119 = vmatprep.subr.bf16.mxu0 %v938
        %2120 = vmatpush1.bf16.msra.mxu0 %v937
        %2121 = vmatprep.subr.bf16.mxu0 %v942
        %2122 = vmatpush1.bf16.msra.mxu0 %v941
        %2123 = vmatprep.subr.bf16.mxu0 %v946
        %2124 = vmatpush1.bf16.msra.mxu0 %v945
        %2125 = vmatprep.subr.bf16.mxu0 %v950
        %2126 = vmatpush1.bf16.msra.mxu0 %v949
        %2127 = vmatprep.subr.bf16.mxu0 0
        %2128 = vmatpush1.bf16.msra.mxu0 0
        %2129 = vmatprep.subr.bf16.mxu0 0
        %2130 = vmatpush1.bf16.msra.mxu0 0
        %2131 = vmatprep.subr.bf16.mxu0 0
        %2132 = vmatpush1.bf16.msra.mxu0 0
        %2133 = vmatprep.subr.bf16.mxu0 0
        %2134 = vmatpush1.bf16.msra.mxu0 0
        %2135 = vmatprep.subr.bf16.mxu0 0
        %2136 = vmatpush1.bf16.msra.mxu0 0
        %2137 = vmatprep.subr.bf16.mxu0 0
        %2138 = vmatpush1.bf16.msra.mxu0 0
        %2139 = vmatprep.subr.bf16.mxu0 0
        %2140 = vmatpush1.bf16.msra.mxu0 0
        %2141 = vmatprep.subr.bf16.mxu0 0
        %2142 = vmatpush1.bf16.msra.mxu0 0
        %2143 = vmatprep.mubr.bf16.mxu0 0
        %2144 = vmatmul.mubr.bf16.gmra.mrb[0].mxu0 %v2109
        %v2145 = vpop.f32.mrb[0].mxu0
        %v2146 = vadd.f32 %v2054, %v2145
        %v2147 = vpop.f32.mrb[0].mxu0
        %v2148 = vadd.f32 %v2056, %v2147
        %v2149 = vpop.f32.mrb[0].mxu0
        %v2150 = vadd.f32 %v2058, %v2149
        %v2151 = vpop.f32.mrb[0].mxu0
        %v2152 = vadd.f32 %v2060, %v2151
        %2153 = vdwg.mxu0
        %2154 = vmatprep.subr.bf16.mxu0 %v924
        %2155 = vmatpush1.bf16.msra.mxu0 %v923
        %2156 = vmatprep.subr.bf16.mxu0 %v928
        %2157 = vmatpush1.bf16.msra.mxu0 %v927
        %2158 = vmatprep.subr.bf16.mxu0 %v932
        %2159 = vmatpush1.bf16.msra.mxu0 %v931
        %2160 = vmatprep.subr.bf16.mxu0 %v936
        %2161 = vmatpush1.bf16.msra.mxu0 %v935
        %2162 = vmatprep.subr.bf16.mxu0 %v940
        %2163 = vmatpush1.bf16.msra.mxu0 %v939
        %2164 = vmatprep.subr.bf16.mxu0 %v944
        %2165 = vmatpush1.bf16.msra.mxu0 %v943
        %2166 = vmatprep.subr.bf16.mxu0 %v948
        %2167 = vmatpush1.bf16.msra.mxu0 %v947
        %2168 = vmatprep.subr.bf16.mxu0 %v952
        %2169 = vmatpush1.bf16.msra.mxu0 %v951
        %2170 = vmatprep.subr.bf16.mxu0 0
        %2171 = vmatpush1.bf16.msra.mxu0 0
        %2172 = vmatprep.subr.bf16.mxu0 0
        %2173 = vmatpush1.bf16.msra.mxu0 0
        %2174 = vmatprep.subr.bf16.mxu0 0
        %2175 = vmatpush1.bf16.msra.mxu0 0
        %2176 = vmatprep.subr.bf16.mxu0 0
        %2177 = vmatpush1.bf16.msra.mxu0 0
        %2178 = vmatprep.subr.bf16.mxu0 0
        %2179 = vmatpush1.bf16.msra.mxu0 0
        %2180 = vmatprep.subr.bf16.mxu0 0
        %2181 = vmatpush1.bf16.msra.mxu0 0
        %2182 = vmatprep.subr.bf16.mxu0 0
        %2183 = vmatpush1.bf16.msra.mxu0 0
        %2184 = vmatprep.subr.bf16.mxu0 0
        %2185 = vmatpush1.bf16.msra.mxu0 0
        %2186 = vmatprep.mubr.bf16.mxu0 0
        %2187 = vmatmul.mubr.bf16.gmra.mrb[0].mxu0 %v2109
        %v2188 = vpop.f32.mrb[0].mxu0
        %v2189 = vadd.f32 %v2097, %v2188
        %v2190 = vpop.f32.mrb[0].mxu0
        %v2191 = vadd.f32 %v2099, %v2190
        %v2192 = vpop.f32.mrb[0].mxu0
        %v2193 = vadd.f32 %v2101, %v2192
        %v2194 = vpop.f32.mrb[0].mxu0
        %v2195 = vadd.f32 %v2103, %v2194
        %2196 = vdwg.mxu0
        %v2197 = vadd.f32 %v2146, %v1075
        %v2198 = vadd.f32 %v2148, %v1079
        %v2199 = vadd.f32 %v2189, %v1083
        %v2200 = vadd.f32 %v2191, %v1087
        %v2201 = vadd.f32 %v2150, %v1075
        %v2202 = vadd.f32 %v2152, %v1079
        %v2203 = vadd.f32 %v2193, %v1083
        %v2204 = vadd.f32 %v2195, %v1087
        %v2205 = vxor.u32 %v2197, 2147483648
        %v2206 = vxor.u32 %v2201, 2147483648
        %v2207 = vmul.f32 %v2205, 1.442695
        %v2208 = vpow.pop %v2207
        %v2209 = vmul.f32 %v2206, 1.442695
        %v2210 = vpow.pop %v2209
        %v2211 = vadd.f32 %v2208, 1.0
        %v2212 = vadd.f32 %v2210, 1.0
        %v2213 = vrcp.pop %v2211
        %v2214 = vmul.f32 1.0, %v2213
        %v2215 = vrcp.pop %v2212
        %v2216 = vmul.f32 1.0, %v2215
        %v2217 = vxor.u32 %v2198, 2147483648
        %v2218 = vxor.u32 %v2202, 2147483648
        %v2219 = vmul.f32 %v2217, 1.442695
        %v2220 = vpow.pop %v2219
        %v2221 = vmul.f32 %v2218, 1.442695
        %v2222 = vpow.pop %v2221
        %v2223 = vadd.f32 %v2220, 1.0
        %v2224 = vadd.f32 %v2222, 1.0
        %v2225 = vrcp.pop %v2223
        %v2226 = vmul.f32 1.0, %v2225
        %v2227 = vrcp.pop %v2224
        %v2228 = vmul.f32 1.0, %v2227
        %v2229 = vtanh.pop %v2199
        %v2230 = vtanh.pop %v2203
        %v2231 = vxor.u32 %v2200, 2147483648
        %v2232 = vxor.u32 %v2204, 2147483648
        %v2233 = vmul.f32 %v2231, 1.442695
        %v2234 = vpow.pop %v2233
        %v2235 = vmul.f32 %v2232, 1.442695
        %v2236 = vpow.pop %v2235
        %v2237 = vadd.f32 %v2234, 1.0
        %v2238 = vadd.f32 %v2236, 1.0
        %v2239 = vrcp.pop %v2237
        %v2240 = vmul.f32 1.0, %v2239
        %v2241 = vrcp.pop %v2238
        %v2242 = vmul.f32 1.0, %v2241
        %v2243 = vmul.f32 %v2226, %v1995
        %v2244 = vmul.f32 %v2228, %v1996
        %v2245 = vmul.f32 %v2214, %v2229
        %v2246 = vmul.f32 %v2216, %v2230
        %v2247 = vadd.f32 %v2243, %v2245
        %v2248 = vadd.f32 %v2244, %v2246
        %v2249 = vtanh.pop %v2247
        %v2250 = vtanh.pop %v2248
        %v2251 = vmul.f32 %v2240, %v2249
        %v2252 = vmul.f32 %v2242, %v2250
        %s2253 = smul.u32 %s2012, 16
        %s2254 = scalar_lea.vmem %s475, %s2253
        %v2255 = vld [vmem:[%s2254] sm:$0xff]
        %v2256 = vld [vmem:[%s2254 + $0x8] sm:$0xff]
        %vm2257 = vcmp.gt.f32.partialorder %v2255, 0.0
        %vm2258 = vcmp.gt.f32.partialorder %v2256, 0.0
        %v2259 = vsel %vm2257, 1, 0
        %v2260 = vsel %vm2258, 1, 0
        %2261 = vset.pattern.permute.xlu0 0
        %2262 = vperm.xlu0 %2261, %v2259
        %v2263 = vpop.permute.xlu0 %2262
        %2264 = vset.pattern.permute.xlu0 0
        %2265 = vperm.xlu0 %2264, %v2260
        %v2266 = vpop.permute.xlu0 %2265
        %vm2267 = vcmp.eq.s32.totalorder %v2263, 1
        %vm2268 = vcmp.eq.s32.totalorder %v2266, 1
        %v2269 = vsel %vm2267, %v2251, %v1993
        %v2270 = vsel %vm2268, %v2252, %v1994
        %v2271 = vsel %vm2267, %v2247, %v1995
        %v2272 = vsel %vm2268, %v2248, %v1996
        %v2273 = vsel %vm2267, %v2251, 0.0
        %v2274 = vsel %vm2268, %v2252, 0.0
        %v2275 = vpack.c.bf16 %v2274, %v2273
        %v2277 = vunpack.c.l.b16 %v2275
        %v2278 = vunpack.c.h.b16 %v2275
        %v2279 = vpack.c.b16 %v2277, %v2277
        %v2280 = vpack.c.b16 %v2278, %v2278
        %s2283 = smul.addr %s2013, 4
        %s2284 = scalar_lea.vmem %s439, %s2283 [#allocation9]
        %2285 = vst [vmem:[%s2284] sm:$0xf] %v2279
        %2286 = vst [vmem:[%s2284 + $0x4] sm:$0xf] %v2280
        %s2287 = smul.u32 %s1183, 5
        %s2288 = sadd.s32 %s566, %s2287
        %s2289 = smul.u32 %s2288, 2
        %s2290 = smul.addr %s2289, 4
        %s2291 = scalar_lea.vmem %s462, %s2290
        %v2292 = vld [vmem:[%s2291] sm:$0xf]
        %v2293 = vld [vmem:[%s2291 + $0x4] sm:$0xf]
        %v2294 = vpack.c.bf16 %v2270, %v2269
        %2295 = vmatprep.subr.bf16.mxu0 %v670
        %2296 = vmatpush1.bf16.msra.mxu0 %v669
        %2297 = vmatprep.subr.bf16.mxu0 %v674
        %2298 = vmatpush1.bf16.msra.mxu0 %v673
        %2299 = vmatprep.subr.bf16.mxu0 %v678
        %2300 = vmatpush1.bf16.msra.mxu0 %v677
        %2301 = vmatprep.subr.bf16.mxu0 %v682
        %2302 = vmatpush1.bf16.msra.mxu0 %v681
        %2303 = vmatprep.subr.bf16.mxu0 %v686
        %2304 = vmatpush1.bf16.msra.mxu0 %v685
        %2305 = vmatprep.subr.bf16.mxu0 %v690
        %2306 = vmatpush1.bf16.msra.mxu0 %v689
        %2307 = vmatprep.subr.bf16.mxu0 %v694
        %2308 = vmatpush1.bf16.msra.mxu0 %v693
        %2309 = vmatprep.subr.bf16.mxu0 %v698
        %2310 = vmatpush1.bf16.msra.mxu0 %v697
        %2311 = vmatprep.subr.bf16.mxu0 0
        %2312 = vmatpush1.bf16.msra.mxu0 0
        %2313 = vmatprep.subr.bf16.mxu0 0
        %2314 = vmatpush1.bf16.msra.mxu0 0
        %2315 = vmatprep.subr.bf16.mxu0 0
        %2316 = vmatpush1.bf16.msra.mxu0 0
        %2317 = vmatprep.subr.bf16.mxu0 0
        %2318 = vmatpush1.bf16.msra.mxu0 0
        %2319 = vmatprep.subr.bf16.mxu0 0
        %2320 = vmatpush1.bf16.msra.mxu0 0
        %2321 = vmatprep.subr.bf16.mxu0 0
        %2322 = vmatpush1.bf16.msra.mxu0 0
        %2323 = vmatprep.subr.bf16.mxu0 0
        %2324 = vmatpush1.bf16.msra.mxu0 0
        %2325 = vmatprep.subr.bf16.mxu0 0
        %2326 = vmatpush1.bf16.msra.mxu0 0
        %2327 = vmatprep.mubr.bf16.mxu0 0
        %2328 = vmatmul.mubr.bf16.gmra.mrb[0].mxu0 %v2294
        %v2329 = vpop.f32.mrb[0].mxu0
        %v2330 = vadd.f32 0.0, %v2329
        %v2331 = vpop.f32.mrb[0].mxu0
        %v2332 = vadd.f32 0.0, %v2331
        %v2333 = vpop.f32.mrb[0].mxu0
        %v2334 = vadd.f32 0.0, %v2333
        %v2335 = vpop.f32.mrb[0].mxu0
        %v2336 = vadd.f32 0.0, %v2335
        %2337 = vdwg.mxu0
        %2338 = vmatprep.subr.bf16.mxu0 %v672
        %2339 = vmatpush1.bf16.msra.mxu0 %v671
        %2340 = vmatprep.subr.bf16.mxu0 %v676
        %2341 = vmatpush1.bf16.msra.mxu0 %v675
        %2342 = vmatprep.subr.bf16.mxu0 %v680
        %2343 = vmatpush1.bf16.msra.mxu0 %v679
        %2344 = vmatprep.subr.bf16.mxu0 %v684
        %2345 = vmatpush1.bf16.msra.mxu0 %v683
        %2346 = vmatprep.subr.bf16.mxu0 %v688
        %2347 = vmatpush1.bf16.msra.mxu0 %v687
        %2348 = vmatprep.subr.bf16.mxu0 %v692
        %2349 = vmatpush1.bf16.msra.mxu0 %v691
        %2350 = vmatprep.subr.bf16.mxu0 %v696
        %2351 = vmatpush1.bf16.msra.mxu0 %v695
        %2352 = vmatprep.subr.bf16.mxu0 %v700
        %2353 = vmatpush1.bf16.msra.mxu0 %v699
        %2354 = vmatprep.subr.bf16.mxu0 0
        %2355 = vmatpush1.bf16.msra.mxu0 0
        %2356 = vmatprep.subr.bf16.mxu0 0
        %2357 = vmatpush1.bf16.msra.mxu0 0
        %2358 = vmatprep.subr.bf16.mxu0 0
        %2359 = vmatpush1.bf16.msra.mxu0 0
        %2360 = vmatprep.subr.bf16.mxu0 0
        %2361 = vmatpush1.bf16.msra.mxu0 0
        %2362 = vmatprep.subr.bf16.mxu0 0
        %2363 = vmatpush1.bf16.msra.mxu0 0
        %2364 = vmatprep.subr.bf16.mxu0 0
        %2365 = vmatpush1.bf16.msra.mxu0 0
        %2366 = vmatprep.subr.bf16.mxu0 0
        %2367 = vmatpush1.bf16.msra.mxu0 0
        %2368 = vmatprep.subr.bf16.mxu0 0
        %2369 = vmatpush1.bf16.msra.mxu0 0
        %2370 = vmatprep.mubr.bf16.mxu0 0
        %2371 = vmatmul.mubr.bf16.gmra.mrb[0].mxu0 %v2294
        %v2372 = vpop.f32.mrb[0].mxu0
        %v2373 = vadd.f32 0.0, %v2372
        %v2374 = vpop.f32.mrb[0].mxu0
        %v2375 = vadd.f32 0.0, %v2374
        %v2376 = vpop.f32.mrb[0].mxu0
        %v2377 = vadd.f32 0.0, %v2376
        %v2378 = vpop.f32.mrb[0].mxu0
        %v2379 = vadd.f32 0.0, %v2378
        %2380 = vdwg.mxu0
        %v2383 = vunpack.c.l.b16 %v2292
        %v2384 = vunpack.c.l.b16 %v2293
        %v2385 = vpack.c.b16 %v2384, %v2383
        %2387 = vmatprep.subr.bf16.mxu0 %v922
        %2388 = vmatpush1.bf16.msra.mxu0 %v921
        %2389 = vmatprep.subr.bf16.mxu0 %v926
        %2390 = vmatpush1.bf16.msra.mxu0 %v925
        %2391 = vmatprep.subr.bf16.mxu0 %v930
        %2392 = vmatpush1.bf16.msra.mxu0 %v929
        %2393 = vmatprep.subr.bf16.mxu0 %v934
        %2394 = vmatpush1.bf16.msra.mxu0 %v933
        %2395 = vmatprep.subr.bf16.mxu0 %v938
        %2396 = vmatpush1.bf16.msra.mxu0 %v937
        %2397 = vmatprep.subr.bf16.mxu0 %v942
        %2398 = vmatpush1.bf16.msra.mxu0 %v941
        %2399 = vmatprep.subr.bf16.mxu0 %v946
        %2400 = vmatpush1.bf16.msra.mxu0 %v945
        %2401 = vmatprep.subr.bf16.mxu0 %v950
        %2402 = vmatpush1.bf16.msra.mxu0 %v949
        %2403 = vmatprep.subr.bf16.mxu0 0
        %2404 = vmatpush1.bf16.msra.mxu0 0
        %2405 = vmatprep.subr.bf16.mxu0 0
        %2406 = vmatpush1.bf16.msra.mxu0 0
        %2407 = vmatprep.subr.bf16.mxu0 0
        %2408 = vmatpush1.bf16.msra.mxu0 0
        %2409 = vmatprep.subr.bf16.mxu0 0
        %2410 = vmatpush1.bf16.msra.mxu0 0
        %2411 = vmatprep.subr.bf16.mxu0 0
        %2412 = vmatpush1.bf16.msra.mxu0 0
        %2413 = vmatprep.subr.bf16.mxu0 0
        %2414 = vmatpush1.bf16.msra.mxu0 0
        %2415 = vmatprep.subr.bf16.mxu0 0
        %2416 = vmatpush1.bf16.msra.mxu0 0
        %2417 = vmatprep.subr.bf16.mxu0 0
        %2418 = vmatpush1.bf16.msra.mxu0 0
        %2419 = vmatprep.mubr.bf16.mxu0 0
        %2420 = vmatmul.mubr.bf16.gmra.mrb[0].mxu0 %v2385
        %v2421 = vpop.f32.mrb[0].mxu0
        %v2422 = vadd.f32 %v2330, %v2421
        %v2423 = vpop.f32.mrb[0].mxu0
        %v2424 = vadd.f32 %v2332, %v2423
        %v2425 = vpop.f32.mrb[0].mxu0
        %v2426 = vadd.f32 %v2334, %v2425
        %v2427 = vpop.f32.mrb[0].mxu0
        %v2428 = vadd.f32 %v2336, %v2427
        %2429 = vdwg.mxu0
        %2430 = vmatprep.subr.bf16.mxu0 %v924
        %2431 = vmatpush1.bf16.msra.mxu0 %v923
        %2432 = vmatprep.subr.bf16.mxu0 %v928
        %2433 = vmatpush1.bf16.msra.mxu0 %v927
        %2434 = vmatprep.subr.bf16.mxu0 %v932
        %2435 = vmatpush1.bf16.msra.mxu0 %v931
        %2436 = vmatprep.subr.bf16.mxu0 %v936
        %2437 = vmatpush1.bf16.msra.mxu0 %v935
        %2438 = vmatprep.subr.bf16.mxu0 %v940
        %2439 = vmatpush1.bf16.msra.mxu0 %v939
        %2440 = vmatprep.subr.bf16.mxu0 %v944
        %2441 = vmatpush1.bf16.msra.mxu0 %v943
        %2442 = vmatprep.subr.bf16.mxu0 %v948
        %2443 = vmatpush1.bf16.msra.mxu0 %v947
        %2444 = vmatprep.subr.bf16.mxu0 %v952
        %2445 = vmatpush1.bf16.msra.mxu0 %v951
        %2446 = vmatprep.subr.bf16.mxu0 0
        %2447 = vmatpush1.bf16.msra.mxu0 0
        %2448 = vmatprep.subr.bf16.mxu0 0
        %2449 = vmatpush1.bf16.msra.mxu0 0
        %2450 = vmatprep.subr.bf16.mxu0 0
        %2451 = vmatpush1.bf16.msra.mxu0 0
        %2452 = vmatprep.subr.bf16.mxu0 0
        %2453 = vmatpush1.bf16.msra.mxu0 0
        %2454 = vmatprep.subr.bf16.mxu0 0
        %2455 = vmatpush1.bf16.msra.mxu0 0
        %2456 = vmatprep.subr.bf16.mxu0 0
        %2457 = vmatpush1.bf16.msra.mxu0 0
        %2458 = vmatprep.subr.bf16.mxu0 0
        %2459 = vmatpush1.bf16.msra.mxu0 0
        %2460 = vmatprep.subr.bf16.mxu0 0
        %2461 = vmatpush1.bf16.msra.mxu0 0
        %2462 = vmatprep.mubr.bf16.mxu0 0
        %2463 = vmatmul.mubr.bf16.gmra.mrb[0].mxu0 %v2385
        %v2464 = vpop.f32.mrb[0].mxu0
        %v2465 = vadd.f32 %v2373, %v2464
        %v2466 = vpop.f32.mrb[0].mxu0
        %v2467 = vadd.f32 %v2375, %v2466
        %v2468 = vpop.f32.mrb[0].mxu0
        %v2469 = vadd.f32 %v2377, %v2468
        %v2470 = vpop.f32.mrb[0].mxu0
        %v2471 = vadd.f32 %v2379, %v2470
        %2472 = vdwg.mxu0
        %v2473 = vadd.f32 %v2422, %v1075
        %v2474 = vadd.f32 %v2424, %v1079
        %v2475 = vadd.f32 %v2465, %v1083
        %v2476 = vadd.f32 %v2467, %v1087
        %v2477 = vadd.f32 %v2426, %v1075
        %v2478 = vadd.f32 %v2428, %v1079
        %v2479 = vadd.f32 %v2469, %v1083
        %v2480 = vadd.f32 %v2471, %v1087
        %v2481 = vxor.u32 %v2473, 2147483648
        %v2482 = vxor.u32 %v2477, 2147483648
        %v2483 = vmul.f32 %v2481, 1.442695
        %v2484 = vpow.pop %v2483
        %v2485 = vmul.f32 %v2482, 1.442695
        %v2486 = vpow.pop %v2485
        %v2487 = vadd.f32 %v2484, 1.0
        %v2488 = vadd.f32 %v2486, 1.0
        %v2489 = vrcp.pop %v2487
        %v2490 = vmul.f32 1.0, %v2489
        %v2491 = vrcp.pop %v2488
        %v2492 = vmul.f32 1.0, %v2491
        %v2493 = vxor.u32 %v2474, 2147483648
        %v2494 = vxor.u32 %v2478, 2147483648
        %v2495 = vmul.f32 %v2493, 1.442695
        %v2496 = vpow.pop %v2495
        %v2497 = vmul.f32 %v2494, 1.442695
        %v2498 = vpow.pop %v2497
        %v2499 = vadd.f32 %v2496, 1.0
        %v2500 = vadd.f32 %v2498, 1.0
        %v2501 = vrcp.pop %v2499
        %v2502 = vmul.f32 1.0, %v2501
        %v2503 = vrcp.pop %v2500
        %v2504 = vmul.f32 1.0, %v2503
        %v2505 = vtanh.pop %v2475
        %v2506 = vtanh.pop %v2479
        %v2507 = vxor.u32 %v2476, 2147483648
        %v2508 = vxor.u32 %v2480, 2147483648
        %v2509 = vmul.f32 %v2507, 1.442695
        %v2510 = vpow.pop %v2509
        %v2511 = vmul.f32 %v2508, 1.442695
        %v2512 = vpow.pop %v2511
        %v2513 = vadd.f32 %v2510, 1.0
        %v2514 = vadd.f32 %v2512, 1.0
        %v2515 = vrcp.pop %v2513
        %v2516 = vmul.f32 1.0, %v2515
        %v2517 = vrcp.pop %v2514
        %v2518 = vmul.f32 1.0, %v2517
        %v2519 = vmul.f32 %v2502, %v2271
        %v2520 = vmul.f32 %v2504, %v2272
        %v2521 = vmul.f32 %v2490, %v2505
        %v2522 = vmul.f32 %v2492, %v2506
        %v2523 = vadd.f32 %v2519, %v2521
        %v2524 = vadd.f32 %v2520, %v2522
        %v2525 = vtanh.pop %v2523
        %v2526 = vtanh.pop %v2524
        %v2527 = vmul.f32 %v2516, %v2525
        %v2528 = vmul.f32 %v2518, %v2526
        %s2529 = smul.u32 %s2288, 16
        %s2530 = scalar_lea.vmem %s475, %s2529
        %v2531 = vld [vmem:[%s2530] sm:$0xff]
        %v2532 = vld [vmem:[%s2530 + $0x8] sm:$0xff]
        %vm2533 = vcmp.gt.f32.partialorder %v2531, 0.0
        %vm2534 = vcmp.gt.f32.partialorder %v2532, 0.0
        %v2535 = vsel %vm2533, 1, 0
        %v2536 = vsel %vm2534, 1, 0
        %2537 = vset.pattern.permute.xlu0 0
        %2538 = vperm.xlu0 %2537, %v2535
        %v2539 = vpop.permute.xlu0 %2538
        %2540 = vset.pattern.permute.xlu0 0
        %2541 = vperm.xlu0 %2540, %v2536
        %v2542 = vpop.permute.xlu0 %2541
        %vm2543 = vcmp.eq.s32.totalorder %v2539, 1
        %vm2544 = vcmp.eq.s32.totalorder %v2542, 1
        %v2545 = vsel %vm2543, %v2527, %v2269
        %v2546 = vsel %vm2544, %v2528, %v2270
        %v2547 = vsel %vm2543, %v2523, %v2271
        %v2548 = vsel %vm2544, %v2524, %v2272
        %v2549 = vsel %vm2543, %v2527, 0.0
        %v2550 = vsel %vm2544, %v2528, 0.0
        %v2551 = vpack.c.bf16 %v2550, %v2549
        %v2553 = vunpack.c.l.b16 %v2551
        %v2554 = vunpack.c.h.b16 %v2551
        %v2555 = vpack.c.b16 %v2553, %v2553
        %v2556 = vpack.c.b16 %v2554, %v2554
        %s2559 = smul.addr %s2289, 4
        %s2560 = scalar_lea.vmem %s439, %s2559 [#allocation9]
        %2561 = vst [vmem:[%s2560] sm:$0xf] %v2555
        %2562 = vst [vmem:[%s2560 + $0x4] sm:$0xf] %v2556
        %s2563 = smul.u32 %s1183, 6
        %s2564 = sadd.s32 %s566, %s2563
        %s2565 = smul.u32 %s2564, 2
        %s2566 = smul.addr %s2565, 4
        %s2567 = scalar_lea.vmem %s462, %s2566
        %v2568 = vld [vmem:[%s2567] sm:$0xf]
        %v2569 = vld [vmem:[%s2567 + $0x4] sm:$0xf]
        %v2570 = vpack.c.bf16 %v2546, %v2545
        %2571 = vmatprep.subr.bf16.mxu0 %v670
        %2572 = vmatpush1.bf16.msra.mxu0 %v669
        %2573 = vmatprep.subr.bf16.mxu0 %v674
        %2574 = vmatpush1.bf16.msra.mxu0 %v673
        %2575 = vmatprep.subr.bf16.mxu0 %v678
        %2576 = vmatpush1.bf16.msra.mxu0 %v677
        %2577 = vmatprep.subr.bf16.mxu0 %v682
        %2578 = vmatpush1.bf16.msra.mxu0 %v681
        %2579 = vmatprep.subr.bf16.mxu0 %v686
        %2580 = vmatpush1.bf16.msra.mxu0 %v685
        %2581 = vmatprep.subr.bf16.mxu0 %v690
        %2582 = vmatpush1.bf16.msra.mxu0 %v689
        %2583 = vmatprep.subr.bf16.mxu0 %v694
        %2584 = vmatpush1.bf16.msra.mxu0 %v693
        %2585 = vmatprep.subr.bf16.mxu0 %v698
        %2586 = vmatpush1.bf16.msra.mxu0 %v697
        %2587 = vmatprep.subr.bf16.mxu0 0
        %2588 = vmatpush1.bf16.msra.mxu0 0
        %2589 = vmatprep.subr.bf16.mxu0 0
        %2590 = vmatpush1.bf16.msra.mxu0 0
        %2591 = vmatprep.subr.bf16.mxu0 0
        %2592 = vmatpush1.bf16.msra.mxu0 0
        %2593 = vmatprep.subr.bf16.mxu0 0
        %2594 = vmatpush1.bf16.msra.mxu0 0
        %2595 = vmatprep.subr.bf16.mxu0 0
        %2596 = vmatpush1.bf16.msra.mxu0 0
        %2597 = vmatprep.subr.bf16.mxu0 0
        %2598 = vmatpush1.bf16.msra.mxu0 0
        %2599 = vmatprep.subr.bf16.mxu0 0
        %2600 = vmatpush1.bf16.msra.mxu0 0
        %2601 = vmatprep.subr.bf16.mxu0 0
        %2602 = vmatpush1.bf16.msra.mxu0 0
        %2603 = vmatprep.mubr.bf16.mxu0 0
        %2604 = vmatmul.mubr.bf16.gmra.mrb[0].mxu0 %v2570
        %v2605 = vpop.f32.mrb[0].mxu0
        %v2606 = vadd.f32 0.0, %v2605
        %v2607 = vpop.f32.mrb[0].mxu0
        %v2608 = vadd.f32 0.0, %v2607
        %v2609 = vpop.f32.mrb[0].mxu0
        %v2610 = vadd.f32 0.0, %v2609
        %v2611 = vpop.f32.mrb[0].mxu0
        %v2612 = vadd.f32 0.0, %v2611
        %2613 = vdwg.mxu0
        %2614 = vmatprep.subr.bf16.mxu0 %v672
        %2615 = vmatpush1.bf16.msra.mxu0 %v671
        %2616 = vmatprep.subr.bf16.mxu0 %v676
        %2617 = vmatpush1.bf16.msra.mxu0 %v675
        %2618 = vmatprep.subr.bf16.mxu0 %v680
        %2619 = vmatpush1.bf16.msra.mxu0 %v679
        %2620 = vmatprep.subr.bf16.mxu0 %v684
        %2621 = vmatpush1.bf16.msra.mxu0 %v683
        %2622 = vmatprep.subr.bf16.mxu0 %v688
        %2623 = vmatpush1.bf16.msra.mxu0 %v687
        %2624 = vmatprep.subr.bf16.mxu0 %v692
        %2625 = vmatpush1.bf16.msra.mxu0 %v691
        %2626 = vmatprep.subr.bf16.mxu0 %v696
        %2627 = vmatpush1.bf16.msra.mxu0 %v695
        %2628 = vmatprep.subr.bf16.mxu0 %v700
        %2629 = vmatpush1.bf16.msra.mxu0 %v699
        %2630 = vmatprep.subr.bf16.mxu0 0
        %2631 = vmatpush1.bf16.msra.mxu0 0
        %2632 = vmatprep.subr.bf16.mxu0 0
        %2633 = vmatpush1.bf16.msra.mxu0 0
        %2634 = vmatprep.subr.bf16.mxu0 0
        %2635 = vmatpush1.bf16.msra.mxu0 0
        %2636 = vmatprep.subr.bf16.mxu0 0
        %2637 = vmatpush1.bf16.msra.mxu0 0
        %2638 = vmatprep.subr.bf16.mxu0 0
        %2639 = vmatpush1.bf16.msra.mxu0 0
        %2640 = vmatprep.subr.bf16.mxu0 0
        %2641 = vmatpush1.bf16.msra.mxu0 0
        %2642 = vmatprep.subr.bf16.mxu0 0
        %2643 = vmatpush1.bf16.msra.mxu0 0
        %2644 = vmatprep.subr.bf16.mxu0 0
        %2645 = vmatpush1.bf16.msra.mxu0 0
        %2646 = vmatprep.mubr.bf16.mxu0 0
        %2647 = vmatmul.mubr.bf16.gmra.mrb[0].mxu0 %v2570
        %v2648 = vpop.f32.mrb[0].mxu0
        %v2649 = vadd.f32 0.0, %v2648
        %v2650 = vpop.f32.mrb[0].mxu0
        %v2651 = vadd.f32 0.0, %v2650
        %v2652 = vpop.f32.mrb[0].mxu0
        %v2653 = vadd.f32 0.0, %v2652
        %v2654 = vpop.f32.mrb[0].mxu0
        %v2655 = vadd.f32 0.0, %v2654
        %2656 = vdwg.mxu0
        %v2659 = vunpack.c.l.b16 %v2568
        %v2660 = vunpack.c.l.b16 %v2569
        %v2661 = vpack.c.b16 %v2660, %v2659
        %2663 = vmatprep.subr.bf16.mxu0 %v922
        %2664 = vmatpush1.bf16.msra.mxu0 %v921
        %2665 = vmatprep.subr.bf16.mxu0 %v926
        %2666 = vmatpush1.bf16.msra.mxu0 %v925
        %2667 = vmatprep.subr.bf16.mxu0 %v930
        %2668 = vmatpush1.bf16.msra.mxu0 %v929
        %2669 = vmatprep.subr.bf16.mxu0 %v934
        %2670 = vmatpush1.bf16.msra.mxu0 %v933
        %2671 = vmatprep.subr.bf16.mxu0 %v938
        %2672 = vmatpush1.bf16.msra.mxu0 %v937
        %2673 = vmatprep.subr.bf16.mxu0 %v942
        %2674 = vmatpush1.bf16.msra.mxu0 %v941
        %2675 = vmatprep.subr.bf16.mxu0 %v946
        %2676 = vmatpush1.bf16.msra.mxu0 %v945
        %2677 = vmatprep.subr.bf16.mxu0 %v950
        %2678 = vmatpush1.bf16.msra.mxu0 %v949
        %2679 = vmatprep.subr.bf16.mxu0 0
        %2680 = vmatpush1.bf16.msra.mxu0 0
        %2681 = vmatprep.subr.bf16.mxu0 0
        %2682 = vmatpush1.bf16.msra.mxu0 0
        %2683 = vmatprep.subr.bf16.mxu0 0
        %2684 = vmatpush1.bf16.msra.mxu0 0
        %2685 = vmatprep.subr.bf16.mxu0 0
        %2686 = vmatpush1.bf16.msra.mxu0 0
        %2687 = vmatprep.subr.bf16.mxu0 0
        %2688 = vmatpush1.bf16.msra.mxu0 0
        %2689 = vmatprep.subr.bf16.mxu0 0
        %2690 = vmatpush1.bf16.msra.mxu0 0
        %2691 = vmatprep.subr.bf16.mxu0 0
        %2692 = vmatpush1.bf16.msra.mxu0 0
        %2693 = vmatprep.subr.bf16.mxu0 0
        %2694 = vmatpush1.bf16.msra.mxu0 0
        %2695 = vmatprep.mubr.bf16.mxu0 0
        %2696 = vmatmul.mubr.bf16.gmra.mrb[0].mxu0 %v2661
        %v2697 = vpop.f32.mrb[0].mxu0
        %v2698 = vadd.f32 %v2606, %v2697
        %v2699 = vpop.f32.mrb[0].mxu0
        %v2700 = vadd.f32 %v2608, %v2699
        %v2701 = vpop.f32.mrb[0].mxu0
        %v2702 = vadd.f32 %v2610, %v2701
        %v2703 = vpop.f32.mrb[0].mxu0
        %v2704 = vadd.f32 %v2612, %v2703
        %2705 = vdwg.mxu0
        %2706 = vmatprep.subr.bf16.mxu0 %v924
        %2707 = vmatpush1.bf16.msra.mxu0 %v923
        %2708 = vmatprep.subr.bf16.mxu0 %v928
        %2709 = vmatpush1.bf16.msra.mxu0 %v927
        %2710 = vmatprep.subr.bf16.mxu0 %v932
        %2711 = vmatpush1.bf16.msra.mxu0 %v931
        %2712 = vmatprep.subr.bf16.mxu0 %v936
        %2713 = vmatpush1.bf16.msra.mxu0 %v935
        %2714 = vmatprep.subr.bf16.mxu0 %v940
        %2715 = vmatpush1.bf16.msra.mxu0 %v939
        %2716 = vmatprep.subr.bf16.mxu0 %v944
        %2717 = vmatpush1.bf16.msra.mxu0 %v943
        %2718 = vmatprep.subr.bf16.mxu0 %v948
        %2719 = vmatpush1.bf16.msra.mxu0 %v947
        %2720 = vmatprep.subr.bf16.mxu0 %v952
        %2721 = vmatpush1.bf16.msra.mxu0 %v951
        %2722 = vmatprep.subr.bf16.mxu0 0
        %2723 = vmatpush1.bf16.msra.mxu0 0
        %2724 = vmatprep.subr.bf16.mxu0 0
        %2725 = vmatpush1.bf16.msra.mxu0 0
        %2726 = vmatprep.subr.bf16.mxu0 0
        %2727 = vmatpush1.bf16.msra.mxu0 0
        %2728 = vmatprep.subr.bf16.mxu0 0
        %2729 = vmatpush1.bf16.msra.mxu0 0
        %2730 = vmatprep.subr.bf16.mxu0 0
        %2731 = vmatpush1.bf16.msra.mxu0 0
        %2732 = vmatprep.subr.bf16.mxu0 0
        %2733 = vmatpush1.bf16.msra.mxu0 0
        %2734 = vmatprep.subr.bf16.mxu0 0
        %2735 = vmatpush1.bf16.msra.mxu0 0
        %2736 = vmatprep.subr.bf16.mxu0 0
        %2737 = vmatpush1.bf16.msra.mxu0 0
        %2738 = vmatprep.mubr.bf16.mxu0 0
        %2739 = vmatmul.mubr.bf16.gmra.mrb[0].mxu0 %v2661
        %v2740 = vpop.f32.mrb[0].mxu0
        %v2741 = vadd.f32 %v2649, %v2740
        %v2742 = vpop.f32.mrb[0].mxu0
        %v2743 = vadd.f32 %v2651, %v2742
        %v2744 = vpop.f32.mrb[0].mxu0
        %v2745 = vadd.f32 %v2653, %v2744
        %v2746 = vpop.f32.mrb[0].mxu0
        %v2747 = vadd.f32 %v2655, %v2746
        %2748 = vdwg.mxu0
        %v2749 = vadd.f32 %v2698, %v1075
        %v2750 = vadd.f32 %v2700, %v1079
        %v2751 = vadd.f32 %v2741, %v1083
        %v2752 = vadd.f32 %v2743, %v1087
        %v2753 = vadd.f32 %v2702, %v1075
        %v2754 = vadd.f32 %v2704, %v1079
        %v2755 = vadd.f32 %v2745, %v1083
        %v2756 = vadd.f32 %v2747, %v1087
        %v2757 = vxor.u32 %v2749, 2147483648
        %v2758 = vxor.u32 %v2753, 2147483648
        %v2759 = vmul.f32 %v2757, 1.442695
        %v2760 = vpow.pop %v2759
        %v2761 = vmul.f32 %v2758, 1.442695
        %v2762 = vpow.pop %v2761
        %v2763 = vadd.f32 %v2760, 1.0
        %v2764 = vadd.f32 %v2762, 1.0
        %v2765 = vrcp.pop %v2763
        %v2766 = vmul.f32 1.0, %v2765
        %v2767 = vrcp.pop %v2764
        %v2768 = vmul.f32 1.0, %v2767
        %v2769 = vxor.u32 %v2750, 2147483648
        %v2770 = vxor.u32 %v2754, 2147483648
        %v2771 = vmul.f32 %v2769, 1.442695
        %v2772 = vpow.pop %v2771
        %v2773 = vmul.f32 %v2770, 1.442695
        %v2774 = vpow.pop %v2773
        %v2775 = vadd.f32 %v2772, 1.0
        %v2776 = vadd.f32 %v2774, 1.0
        %v2777 = vrcp.pop %v2775
        %v2778 = vmul.f32 1.0, %v2777
        %v2779 = vrcp.pop %v2776
        %v2780 = vmul.f32 1.0, %v2779
        %v2781 = vtanh.pop %v2751
        %v2782 = vtanh.pop %v2755
        %v2783 = vxor.u32 %v2752, 2147483648
        %v2784 = vxor.u32 %v2756, 2147483648
        %v2785 = vmul.f32 %v2783, 1.442695
        %v2786 = vpow.pop %v2785
        %v2787 = vmul.f32 %v2784, 1.442695
        %v2788 = vpow.pop %v2787
        %v2789 = vadd.f32 %v2786, 1.0
        %v2790 = vadd.f32 %v2788, 1.0
        %v2791 = vrcp.pop %v2789
        %v2792 = vmul.f32 1.0, %v2791
        %v2793 = vrcp.pop %v2790
        %v2794 = vmul.f32 1.0, %v2793
        %v2795 = vmul.f32 %v2778, %v2547
        %v2796 = vmul.f32 %v2780, %v2548
        %v2797 = vmul.f32 %v2766, %v2781
        %v2798 = vmul.f32 %v2768, %v2782
        %v2799 = vadd.f32 %v2795, %v2797
        %v2800 = vadd.f32 %v2796, %v2798
        %v2801 = vtanh.pop %v2799
        %v2802 = vtanh.pop %v2800
        %v2803 = vmul.f32 %v2792, %v2801
        %v2804 = vmul.f32 %v2794, %v2802
        %s2805 = smul.u32 %s2564, 16
        %s2806 = scalar_lea.vmem %s475, %s2805
        %v2807 = vld [vmem:[%s2806] sm:$0xff]
        %v2808 = vld [vmem:[%s2806 + $0x8] sm:$0xff]
        %vm2809 = vcmp.gt.f32.partialorder %v2807, 0.0
        %vm2810 = vcmp.gt.f32.partialorder %v2808, 0.0
        %v2811 = vsel %vm2809, 1, 0
        %v2812 = vsel %vm2810, 1, 0
        %2813 = vset.pattern.permute.xlu0 0
        %2814 = vperm.xlu0 %2813, %v2811
        %v2815 = vpop.permute.xlu0 %2814
        %2816 = vset.pattern.permute.xlu0 0
        %2817 = vperm.xlu0 %2816, %v2812
        %v2818 = vpop.permute.xlu0 %2817
        %vm2819 = vcmp.eq.s32.totalorder %v2815, 1
        %vm2820 = vcmp.eq.s32.totalorder %v2818, 1
        %v2821 = vsel %vm2819, %v2803, %v2545
        %v2822 = vsel %vm2820, %v2804, %v2546
        %v2823 = vsel %vm2819, %v2799, %v2547
        %v2824 = vsel %vm2820, %v2800, %v2548
        %v2825 = vsel %vm2819, %v2803, 0.0
        %v2826 = vsel %vm2820, %v2804, 0.0
        %v2827 = vpack.c.bf16 %v2826, %v2825
        %v2829 = vunpack.c.l.b16 %v2827
        %v2830 = vunpack.c.h.b16 %v2827
        %v2831 = vpack.c.b16 %v2829, %v2829
        %v2832 = vpack.c.b16 %v2830, %v2830
        %s2835 = smul.addr %s2565, 4
        %s2836 = scalar_lea.vmem %s439, %s2835 [#allocation9]
        %2837 = vst [vmem:[%s2836] sm:$0xf] %v2831
        %2838 = vst [vmem:[%s2836 + $0x4] sm:$0xf] %v2832
        %s2839 = smul.u32 %s1183, 7
        %s2840 = sadd.s32 %s566, %s2839
        %s2841 = smul.u32 %s2840, 2
        %s2842 = smul.addr %s2841, 4
        %s2843 = scalar_lea.vmem %s462, %s2842
        %v2844 = vld [vmem:[%s2843] sm:$0xf]
        %v2845 = vld [vmem:[%s2843 + $0x4] sm:$0xf]
        %v2846 = vpack.c.bf16 %v2822, %v2821
        %2847 = vmatprep.subr.bf16.mxu0 %v670
        %2848 = vmatpush1.bf16.msra.mxu0 %v669
        %2849 = vmatprep.subr.bf16.mxu0 %v674
        %2850 = vmatpush1.bf16.msra.mxu0 %v673
        %2851 = vmatprep.subr.bf16.mxu0 %v678
        %2852 = vmatpush1.bf16.msra.mxu0 %v677
        %2853 = vmatprep.subr.bf16.mxu0 %v682
        %2854 = vmatpush1.bf16.msra.mxu0 %v681
        %2855 = vmatprep.subr.bf16.mxu0 %v686
        %2856 = vmatpush1.bf16.msra.mxu0 %v685
        %2857 = vmatprep.subr.bf16.mxu0 %v690
        %2858 = vmatpush1.bf16.msra.mxu0 %v689
        %2859 = vmatprep.subr.bf16.mxu0 %v694
        %2860 = vmatpush1.bf16.msra.mxu0 %v693
        %2861 = vmatprep.subr.bf16.mxu0 %v698
        %2862 = vmatpush1.bf16.msra.mxu0 %v697
        %2863 = vmatprep.subr.bf16.mxu0 0
        %2864 = vmatpush1.bf16.msra.mxu0 0
        %2865 = vmatprep.subr.bf16.mxu0 0
        %2866 = vmatpush1.bf16.msra.mxu0 0
        %2867 = vmatprep.subr.bf16.mxu0 0
        %2868 = vmatpush1.bf16.msra.mxu0 0
        %2869 = vmatprep.subr.bf16.mxu0 0
        %2870 = vmatpush1.bf16.msra.mxu0 0
        %2871 = vmatprep.subr.bf16.mxu0 0
        %2872 = vmatpush1.bf16.msra.mxu0 0
        %2873 = vmatprep.subr.bf16.mxu0 0
        %2874 = vmatpush1.bf16.msra.mxu0 0
        %2875 = vmatprep.subr.bf16.mxu0 0
        %2876 = vmatpush1.bf16.msra.mxu0 0
        %2877 = vmatprep.subr.bf16.mxu0 0
        %2878 = vmatpush1.bf16.msra.mxu0 0
        %2879 = vmatprep.mubr.bf16.mxu0 0
        %2880 = vmatmul.mubr.bf16.gmra.mrb[0].mxu0 %v2846
        %v2881 = vpop.f32.mrb[0].mxu0
        %v2882 = vadd.f32 0.0, %v2881
        %v2883 = vpop.f32.mrb[0].mxu0
        %v2884 = vadd.f32 0.0, %v2883
        %v2885 = vpop.f32.mrb[0].mxu0
        %v2886 = vadd.f32 0.0, %v2885
        %v2887 = vpop.f32.mrb[0].mxu0
        %v2888 = vadd.f32 0.0, %v2887
        %2889 = vdwg.mxu0
        %2890 = vmatprep.subr.bf16.mxu0 %v672
        %2891 = vmatpush1.bf16.msra.mxu0 %v671
        %2892 = vmatprep.subr.bf16.mxu0 %v676
        %2893 = vmatpush1.bf16.msra.mxu0 %v675
        %2894 = vmatprep.subr.bf16.mxu0 %v680
        %2895 = vmatpush1.bf16.msra.mxu0 %v679
        %2896 = vmatprep.subr.bf16.mxu0 %v684
        %2897 = vmatpush1.bf16.msra.mxu0 %v683
        %2898 = vmatprep.subr.bf16.mxu0 %v688
        %2899 = vmatpush1.bf16.msra.mxu0 %v687
        %2900 = vmatprep.subr.bf16.mxu0 %v692
        %2901 = vmatpush1.bf16.msra.mxu0 %v691
        %2902 = vmatprep.subr.bf16.mxu0 %v696
        %2903 = vmatpush1.bf16.msra.mxu0 %v695
        %2904 = vmatprep.subr.bf16.mxu0 %v700
        %2905 = vmatpush1.bf16.msra.mxu0 %v699
        %2906 = vmatprep.subr.bf16.mxu0 0
        %2907 = vmatpush1.bf16.msra.mxu0 0
        %2908 = vmatprep.subr.bf16.mxu0 0
        %2909 = vmatpush1.bf16.msra.mxu0 0
        %2910 = vmatprep.subr.bf16.mxu0 0
        %2911 = vmatpush1.bf16.msra.mxu0 0
        %2912 = vmatprep.subr.bf16.mxu0 0
        %2913 = vmatpush1.bf16.msra.mxu0 0
        %2914 = vmatprep.subr.bf16.mxu0 0
        %2915 = vmatpush1.bf16.msra.mxu0 0
        %2916 = vmatprep.subr.bf16.mxu0 0
        %2917 = vmatpush1.bf16.msra.mxu0 0
        %2918 = vmatprep.subr.bf16.mxu0 0
        %2919 = vmatpush1.bf16.msra.mxu0 0
        %2920 = vmatprep.subr.bf16.mxu0 0
        %2921 = vmatpush1.bf16.msra.mxu0 0
        %2922 = vmatprep.mubr.bf16.mxu0 0
        %2923 = vmatmul.mubr.bf16.gmra.mrb[0].mxu0 %v2846
        %v2924 = vpop.f32.mrb[0].mxu0
        %v2925 = vadd.f32 0.0, %v2924
        %v2926 = vpop.f32.mrb[0].mxu0
        %v2927 = vadd.f32 0.0, %v2926
        %v2928 = vpop.f32.mrb[0].mxu0
        %v2929 = vadd.f32 0.0, %v2928
        %v2930 = vpop.f32.mrb[0].mxu0
        %v2931 = vadd.f32 0.0, %v2930
        %2932 = vdwg.mxu0
        %v2935 = vunpack.c.l.b16 %v2844
        %v2936 = vunpack.c.l.b16 %v2845
        %v2937 = vpack.c.b16 %v2936, %v2935
        %2939 = vmatprep.subr.bf16.mxu0 %v922
        %2940 = vmatpush1.bf16.msra.mxu0 %v921
        %2941 = vmatprep.subr.bf16.mxu0 %v926
        %2942 = vmatpush1.bf16.msra.mxu0 %v925
        %2943 = vmatprep.subr.bf16.mxu0 %v930
        %2944 = vmatpush1.bf16.msra.mxu0 %v929
        %2945 = vmatprep.subr.bf16.mxu0 %v934
        %2946 = vmatpush1.bf16.msra.mxu0 %v933
        %2947 = vmatprep.subr.bf16.mxu0 %v938
        %2948 = vmatpush1.bf16.msra.mxu0 %v937
        %2949 = vmatprep.subr.bf16.mxu0 %v942
        %2950 = vmatpush1.bf16.msra.mxu0 %v941
        %2951 = vmatprep.subr.bf16.mxu0 %v946
        %2952 = vmatpush1.bf16.msra.mxu0 %v945
        %2953 = vmatprep.subr.bf16.mxu0 %v950
        %2954 = vmatpush1.bf16.msra.mxu0 %v949
        %2955 = vmatprep.subr.bf16.mxu0 0
        %2956 = vmatpush1.bf16.msra.mxu0 0
        %2957 = vmatprep.subr.bf16.mxu0 0
        %2958 = vmatpush1.bf16.msra.mxu0 0
        %2959 = vmatprep.subr.bf16.mxu0 0
        %2960 = vmatpush1.bf16.msra.mxu0 0
        %2961 = vmatprep.subr.bf16.mxu0 0
        %2962 = vmatpush1.bf16.msra.mxu0 0
        %2963 = vmatprep.subr.bf16.mxu0 0
        %2964 = vmatpush1.bf16.msra.mxu0 0
        %2965 = vmatprep.subr.bf16.mxu0 0
        %2966 = vmatpush1.bf16.msra.mxu0 0
        %2967 = vmatprep.subr.bf16.mxu0 0
        %2968 = vmatpush1.bf16.msra.mxu0 0
        %2969 = vmatprep.subr.bf16.mxu0 0
        %2970 = vmatpush1.bf16.msra.mxu0 0
        %2971 = vmatprep.mubr.bf16.mxu0 0
        %2972 = vmatmul.mubr.bf16.gmra.mrb[0].mxu0 %v2937
        %v2973 = vpop.f32.mrb[0].mxu0
        %v2974 = vadd.f32 %v2882, %v2973
        %v2975 = vpop.f32.mrb[0].mxu0
        %v2976 = vadd.f32 %v2884, %v2975
        %v2977 = vpop.f32.mrb[0].mxu0
        %v2978 = vadd.f32 %v2886, %v2977
        %v2979 = vpop.f32.mrb[0].mxu0
        %v2980 = vadd.f32 %v2888, %v2979
        %2981 = vdwg.mxu0
        %2982 = vmatprep.subr.bf16.mxu0 %v924
        %2983 = vmatpush1.bf16.msra.mxu0 %v923
        %2984 = vmatprep.subr.bf16.mxu0 %v928
        %2985 = vmatpush1.bf16.msra.mxu0 %v927
        %2986 = vmatprep.subr.bf16.mxu0 %v932
        %2987 = vmatpush1.bf16.msra.mxu0 %v931
        %2988 = vmatprep.subr.bf16.mxu0 %v936
        %2989 = vmatpush1.bf16.msra.mxu0 %v935
        %2990 = vmatprep.subr.bf16.mxu0 %v940
        %2991 = vmatpush1.bf16.msra.mxu0 %v939
        %2992 = vmatprep.subr.bf16.mxu0 %v944
        %2993 = vmatpush1.bf16.msra.mxu0 %v943
        %2994 = vmatprep.subr.bf16.mxu0 %v948
        %2995 = vmatpush1.bf16.msra.mxu0 %v947
        %2996 = vmatprep.subr.bf16.mxu0 %v952
        %2997 = vmatpush1.bf16.msra.mxu0 %v951
        %2998 = vmatprep.subr.bf16.mxu0 0
        %2999 = vmatpush1.bf16.msra.mxu0 0
        %3000 = vmatprep.subr.bf16.mxu0 0
        %3001 = vmatpush1.bf16.msra.mxu0 0
        %3002 = vmatprep.subr.bf16.mxu0 0
        %3003 = vmatpush1.bf16.msra.mxu0 0
        %3004 = vmatprep.subr.bf16.mxu0 0
        %3005 = vmatpush1.bf16.msra.mxu0 0
        %3006 = vmatprep.subr.bf16.mxu0 0
        %3007 = vmatpush1.bf16.msra.mxu0 0
        %3008 = vmatprep.subr.bf16.mxu0 0
        %3009 = vmatpush1.bf16.msra.mxu0 0
        %3010 = vmatprep.subr.bf16.mxu0 0
        %3011 = vmatpush1.bf16.msra.mxu0 0
        %3012 = vmatprep.subr.bf16.mxu0 0
        %3013 = vmatpush1.bf16.msra.mxu0 0
        %3014 = vmatprep.mubr.bf16.mxu0 0
        %3015 = vmatmul.mubr.bf16.gmra.mrb[0].mxu0 %v2937
        %v3016 = vpop.f32.mrb[0].mxu0
        %v3017 = vadd.f32 %v2925, %v3016
        %v3018 = vpop.f32.mrb[0].mxu0
        %v3019 = vadd.f32 %v2927, %v3018
        %v3020 = vpop.f32.mrb[0].mxu0
        %v3021 = vadd.f32 %v2929, %v3020
        %v3022 = vpop.f32.mrb[0].mxu0
        %v3023 = vadd.f32 %v2931, %v3022
        %3024 = vdwg.mxu0
        %v3025 = vadd.f32 %v2974, %v1075
        %v3026 = vadd.f32 %v2976, %v1079
        %v3027 = vadd.f32 %v3017, %v1083
        %v3028 = vadd.f32 %v3019, %v1087
        %v3029 = vadd.f32 %v2978, %v1075
        %v3030 = vadd.f32 %v2980, %v1079
        %v3031 = vadd.f32 %v3021, %v1083
        %v3032 = vadd.f32 %v3023, %v1087
        %v3033 = vxor.u32 %v3025, 2147483648
        %v3034 = vxor.u32 %v3029, 2147483648
        %v3035 = vmul.f32 %v3033, 1.442695
        %v3036 = vpow.pop %v3035
        %v3037 = vmul.f32 %v3034, 1.442695
        %v3038 = vpow.pop %v3037
        %v3039 = vadd.f32 %v3036, 1.0
        %v3040 = vadd.f32 %v3038, 1.0
        %v3041 = vrcp.pop %v3039
        %v3042 = vmul.f32 1.0, %v3041
        %v3043 = vrcp.pop %v3040
        %v3044 = vmul.f32 1.0, %v3043
        %v3045 = vxor.u32 %v3026, 2147483648
        %v3046 = vxor.u32 %v3030, 2147483648
        %v3047 = vmul.f32 %v3045, 1.442695
        %v3048 = vpow.pop %v3047
        %v3049 = vmul.f32 %v3046, 1.442695
        %v3050 = vpow.pop %v3049
        %v3051 = vadd.f32 %v3048, 1.0
        %v3052 = vadd.f32 %v3050, 1.0
        %v3053 = vrcp.pop %v3051
        %v3054 = vmul.f32 1.0, %v3053
        %v3055 = vrcp.pop %v3052
        %v3056 = vmul.f32 1.0, %v3055
        %v3057 = vtanh.pop %v3027
        %v3058 = vtanh.pop %v3031
        %v3059 = vxor.u32 %v3028, 2147483648
        %v3060 = vxor.u32 %v3032, 2147483648
        %v3061 = vmul.f32 %v3059, 1.442695
        %v3062 = vpow.pop %v3061
        %v3063 = vmul.f32 %v3060, 1.442695
        %v3064 = vpow.pop %v3063
        %v3065 = vadd.f32 %v3062, 1.0
        %v3066 = vadd.f32 %v3064, 1.0
        %v3067 = vrcp.pop %v3065
        %v3068 = vmul.f32 1.0, %v3067
        %v3069 = vrcp.pop %v3066
        %v3070 = vmul.f32 1.0, %v3069
        %v3071 = vmul.f32 %v3054, %v2823
        %v3072 = vmul.f32 %v3056, %v2824
        %v3073 = vmul.f32 %v3042, %v3057
        %v3074 = vmul.f32 %v3044, %v3058
        %v3075 = vadd.f32 %v3071, %v3073
        %v3076 = vadd.f32 %v3072, %v3074
        %v3077 = vtanh.pop %v3075
        %v3078 = vtanh.pop %v3076
        %v3079 = vmul.f32 %v3068, %v3077
        %v3080 = vmul.f32 %v3070, %v3078
        %s3081 = smul.u32 %s2840, 16
        %s3082 = scalar_lea.vmem %s475, %s3081
        %v3083 = vld [vmem:[%s3082] sm:$0xff]
        %v3084 = vld [vmem:[%s3082 + $0x8] sm:$0xff]
        %vm3085 = vcmp.gt.f32.partialorder %v3083, 0.0
        %vm3086 = vcmp.gt.f32.partialorder %v3084, 0.0
        %v3087 = vsel %vm3085, 1, 0
        %v3088 = vsel %vm3086, 1, 0
        %3089 = vset.pattern.permute.xlu0 0
        %3090 = vperm.xlu0 %3089, %v3087
        %v3091 = vpop.permute.xlu0 %3090
        %3092 = vset.pattern.permute.xlu0 0
        %3093 = vperm.xlu0 %3092, %v3088
        %v3094 = vpop.permute.xlu0 %3093
        %vm3095 = vcmp.eq.s32.totalorder %v3091, 1
        %vm3096 = vcmp.eq.s32.totalorder %v3094, 1
        %v3097 = vsel %vm3095, %v3079, %v2821
        %v3098 = vsel %vm3096, %v3080, %v2822
        %v3099 = vsel %vm3095, %v3075, %v2823
        %v3100 = vsel %vm3096, %v3076, %v2824
        %v3101 = vsel %vm3095, %v3079, 0.0
        %v3102 = vsel %vm3096, %v3080, 0.0
        %v3103 = vpack.c.bf16 %v3102, %v3101
        %v3105 = vunpack.c.l.b16 %v3103
        %v3106 = vunpack.c.h.b16 %v3103
        %v3107 = vpack.c.b16 %v3105, %v3105
        %v3108 = vpack.c.b16 %v3106, %v3106
        %s3111 = smul.addr %s2841, 4
        %s3112 = scalar_lea.vmem %s439, %s3111 [#allocation9]
        %3113 = vst [vmem:[%s3112] sm:$0xf] %v3107
        %3114 = vst [vmem:[%s3112 + $0x4] sm:$0xf] %v3108
        %3115 = vst [vmem:[#allocation2] sm:$0xff] %v3097
        %3116 = vst [vmem:[#allocation2 + $0x8] sm:$0xff] %v3098
        %3117 = vst [vmem:[#allocation3] sm:$0xff] %v3099
        %3118 = vst [vmem:[#allocation3 + $0x8] sm:$0xff] %v3100
        // Predicated region
        $region53: #{tpu_custom_call.1} parent=39 // pred_check
          %p3119 = pneg %p489
        $region54: #{tpu_custom_call.1} parent=39 // pred_check_branch
          %3121 = sbr.rel (%p3119) target = $region56
        $region55: #{tpu_custom_call.1} parent=39 // pred_region
          %3122 = vst [vmem:[%s446] sm:$0xff] %v3097
          %3123 = vst [vmem:[%s446 + $0x8] sm:$0xff] %v3098
          %3124 = vst [vmem:[%s453] sm:$0xff] %v3099
          %3125 = vst [vmem:[%s453 + $0x8] sm:$0xff] %v3100
        $region56: #{tpu_custom_call.1} parent=39 // pred_fallthru
          _
        %s3126 = sand.u32 %s201, 1
        %s3127 = scalar_lea.sflag [#allocation6], %s3126
        %s3128 = sand.u32 %s201, 1
        %s3129 = smul.addr %s3128, 64
        %s3130 = scalar_lea.vmem [#allocation9], %s3129
        %s3131 = sand.u32 %s31, 1
        %s3132 = scalar_lea.sflag [#allocation11], %s3131
        %s3133 = sand.u32 %s227, 1
        %s3134 = smul.addr %s3133, 16
        %s3135 = scalar_lea.vmem [#allocation10], %s3134
        %s3136 = sand.u32 %s31, 1
        %s3137 = scalar_lea.sflag [#allocation11], %s3136
        %s3138 = sand.u32 %s253, 1
        %s3139 = smul.addr %s3138, 16
        %s3140 = scalar_lea.vmem [#allocation12], %s3139
        // Predicated region
        $region57: #{tpu_custom_call.1} parent=39 // pred_check
          %p3141 = pneg %p211
        $region58: #{tpu_custom_call.1} parent=39 // pred_check_branch
          %3143 = sbr.rel (%p3141) target = $region60
        $region59: #{tpu_custom_call.1} parent=39 // pred_region
          %s3144 = smul.u32 %s35, 2
          %s3145 = ssub.s32 1, %s3144
          %s3146 = smul.u32 %s3145, %s36
          %s3147 = smul.u32 8, %s3146
          %s3149 = ssub.s32 1024, 1024
          %3150 = vsyncadd %s3127, %s3149
          %s3151 = smul.addr %s3147, 4
          %s3152 = sadd.s32 %s35, %s3151
          %s3153 = smul.addr %s3152, 64
          %s3154 = scalar_lea.hbm %s5, %s3153
          %s3155 = sshll.u32 %s3130, 4
          %s3156 = int_to_ptr.vmem [resolvable:$true] %s3155
          %3161 = dma.vmem_to_hbm [thread:$0]  %s3156, 1024, %s3154, %s3127, 64, 128, 4
        $region60: #{tpu_custom_call.1} parent=39 // pred_fallthru
          _
        // Predicated region
        $region61: #{tpu_custom_call.1} parent=39 // pred_check
          %p3162 = pneg %p237
        $region62: #{tpu_custom_call.1} parent=39 // pred_check_branch
          %3164 = sbr.rel (%p3162) target = $region64
        $region63: #{tpu_custom_call.1} parent=39 // pred_region
          %s3166 = ssub.s32 256, 256
          %3167 = vsyncadd %s3132, %s3166
          %s3168 = smul.addr %s35, 2
          %s3169 = smul.addr %s3168, 128
          %s3170 = scalar_lea.hbm %s6, %s3169
          %s3171 = sshll.u32 %s3135, 4
          %s3172 = int_to_ptr.vmem [resolvable:$true] %s3171
          %3177 = dma.vmem_to_hbm [thread:$0]  %s3172, 256, %s3170, %s3132, 128, 128, 8
        $region64: #{tpu_custom_call.1} parent=39 // pred_fallthru
          _
        // Predicated region
        $region65: #{tpu_custom_call.1} parent=39 // pred_check
          %p3178 = pneg %p263
        $region66: #{tpu_custom_call.1} parent=39 // pred_check_branch
          %3180 = sbr.rel (%p3178) target = $region68
        $region67: #{tpu_custom_call.1} parent=39 // pred_region
          %s3182 = ssub.s32 256, 256
          %3183 = vsyncadd %s3137, %s3182
          %s3184 = smul.addr %s35, 2
          %s3185 = smul.addr %s3184, 128
          %s3186 = scalar_lea.hbm %s7, %s3185
          %s3187 = sshll.u32 %s3140, 4
          %s3188 = int_to_ptr.vmem [resolvable:$true] %s3187
          %3193 = dma.vmem_to_hbm [thread:$0]  %s3188, 256, %s3186, %s3137, 128, 128, 8
        $region68: #{tpu_custom_call.1} parent=39 // pred_fallthru
          _
      $region40: #{tpu_custom_call.1} parent=5 // pred_fallthru
        _
      %p3194 = scmp.le.s32.totalorder 2, %s26
      // Predicated region
      $region69: #{tpu_custom_call.1} parent=5 // pred_check
        %p3195 = pneg %p3194
      $region70: #{tpu_custom_call.1} parent=5 // pred_check_branch
        %3197 = sbr.rel (%p3195) target = $region72
      $region71: #{tpu_custom_call.1} parent=5 // pred_region
        %s3198 = ssub.s32 %s26, 2
        // Predicated region
        $region73: #{tpu_custom_call.1} parent=71 // pred_check
          %p3199 = pneg %p217
        $region74: #{tpu_custom_call.1} parent=71 // pred_check_branch
          %3201 = sbr.rel (%p3199) target = $region76
        $region75: #{tpu_custom_call.1} parent=71 // pred_region
          %s3202 = sand.u32 %s202, 1
          %s3203 = scalar_lea.sflag [#allocation6], %s3202
          %s3204 = sand.u32 %s202, 1
          %s3205 = smul.addr %s3204, 64
          %s3206 = scalar_lea.vmem [#allocation9], %s3205
          %3207 = dma.done %s3203, 1024
        $region76: #{tpu_custom_call.1} parent=71 // pred_fallthru
          _
        // Predicated region
        $region77: #{tpu_custom_call.1} parent=71 // pred_check
          %p3208 = pneg %p243
        $region78: #{tpu_custom_call.1} parent=71 // pred_check_branch
          %3210 = sbr.rel (%p3208) target = $region80
        $region79: #{tpu_custom_call.1} parent=71 // pred_region
          %s3211 = sand.u32 %s32, 1
          %s3212 = scalar_lea.sflag [#allocation11], %s3211
          %s3213 = sand.u32 %s228, 1
          %s3214 = smul.addr %s3213, 16
          %s3215 = scalar_lea.vmem [#allocation10], %s3214
          %3216 = dma.done %s3212, 256
        $region80: #{tpu_custom_call.1} parent=71 // pred_fallthru
          _
        // Predicated region
        $region81: #{tpu_custom_call.1} parent=71 // pred_check
          %p3217 = pneg %p269
        $region82: #{tpu_custom_call.1} parent=71 // pred_check_branch
          %3219 = sbr.rel (%p3217) target = $region84
        $region83: #{tpu_custom_call.1} parent=71 // pred_region
          %s3220 = sand.u32 %s32, 1
          %s3221 = scalar_lea.sflag [#allocation11], %s3220
          %s3222 = sand.u32 %s254, 1
          %s3223 = smul.addr %s3222, 16
          %s3224 = scalar_lea.vmem [#allocation12], %s3223
          %3225 = dma.done %s3221, 256
        $region84: #{tpu_custom_call.1} parent=71 // pred_fallthru
          _
      $region72: #{tpu_custom_call.1} parent=5 // pred_fallthru
        _
    $region6: #{tpu_custom_call.1} parent=1 // loop_footer
      %s30 = sadd.s32 1, %s26
    $region7: #{tpu_custom_call.1} parent=1 // loop_footer_branch
      %25 = sbr.rel target = $region3
    $region8: #{tpu_custom_call.1} parent=1 // loop_exit
      _
    %3226 = vsyncpa [#allocation5], 1
    %s3227 = scalar_lea.sflag [#allocation5], 1
    %3228 = vsyncpa %s3227, 1
    %3229 = vsyncpa [#allocation8], 1
    %s3230 = scalar_lea.sflag [#allocation8], 1
    %3231 = vsyncpa %s3230, 1
    %3232 = vsyncpa [#allocation6], 1
    %s3233 = scalar_lea.sflag [#allocation6], 1
    %3234 = vsyncpa %s3233, 1
    %3235 = vsyncpa [#allocation11], 1
    %s3236 = scalar_lea.sflag [#allocation11], 1
    %3237 = vsyncpa %s3236, 1

</llo_original>
